<compile_context>
chip_gen: v7x
topology: tpu7x:2x2x1
jax: 0.10.0
libtpu: 0.0.40
codegen_flags: <defaults>
</compile_context>

<pallas_src>
import functools

import jax
import jax.numpy as jnp
from jax import lax
from jax.experimental import pallas as pl
from jax.experimental.pallas import tpu as pltpu


# ----------------------------------------------------------------------------
# In-kernel helpers
# ----------------------------------------------------------------------------
def _gelu(x):
    # tanh-form GELU (== torch.nn.GELU(approximate='tanh')).
    c = 0.7978845608028654
    return 0.5 * x * (1.0 + jnp.tanh(c * (x + 0.044715 * x * x * x)))


def _shift_right_w(t):
    # t: (rows, W, c) -> t'[w] = t[w-1], zero at w = 0.
    z = jnp.zeros_like(t[:, :1])
    return jnp.concatenate([z, t[:, :-1]], axis=1)


def _shift_left_w(t):
    # t: (rows, W, c) -> t'[w] = t[w+1], zero at w = W-1.
    z = jnp.zeros_like(t[:, :1])
    return jnp.concatenate([t[:, 1:], z], axis=1)


def _dw3x3_packed(p, w, b, n_out):
    """3x3 depthwise conv (+bias) on a column-pair packed tensor.

    p : (n_out + 2, W, 2c), lanes = [even output columns (c) | odd columns (c)].
    w : (3, 3, 2c) per-channel taps, duplicated across both lane groups.
    b : (2c,) bias.
    Returns (n_out, W, 2c).  W2 zero-padding is folded into the two shifts;
    H zero-padding is provided by the caller via zeroed halo rows.
    """
    rows, width, c2 = p.shape
    c = c2 // 2
    p0 = p[..., :c]          # even output columns
    p1 = p[..., c:]          # odd output columns
    # column neighbours (dx = 0 / 2) in packed form; dx = 1 is p itself.
    a = jnp.concatenate([_shift_right_w(p1), p0], axis=-1)
    cc = jnp.concatenate([p1, _shift_left_w(p0)], axis=-1)
    acc = jnp.zeros((n_out, width, c2), jnp.float32)
    for dy in range(3):                      # leading-axis slices: cheap
        acc = (acc
               + a[dy:dy + n_out] * w[dy, 0]
               + p[dy:dy + n_out] * w[dy, 1]
               + cc[dy:dy + n_out] * w[dy, 2])
    return acc + b


# ----------------------------------------------------------------------------
# Fused kernel
# ----------------------------------------------------------------------------
def _fused_block_kernel(
    x_m_ref, x_t_ref, x_b_ref,        # x NHWC (N, H, W, c_in): tile + 1-row halos
    sk_m_ref, sk_t_ref, sk_b_ref,     # packed skip (N, H2, W, 2*c_skip): tile + 2-row halos
    mats_ref,                         # (3, Kmax, 8*ci)   packed matmul weights
    dws_ref,                          # (2, 3, 3, 2*c_rem) packed depthwise taps
    vecs_ref,                         # (6, 4*ci)         packed bias / scale vectors
    out_ref,                          # (1, tile_h, W, 2*c_out)
    *, tile_h, width, c_in, c_skip, ci, c_rem, c_out,
):
    f32 = jnp.float32
    r = pl.program_id(1)
    nr = pl.num_programs(1)
    th = tile_h
    the = th + 4                       # primary rows: output rows r0-2 .. r0+th+1
    thx = th // 2
    nx = thx + 2
    C2 = 2 * ci                        # (conv1 | identity) primary lanes per column
    C4 = 4 * ci

    # ---- unpack packed parameters (static slices, already f32) -------------
    wx = mats_ref[0, :c_in, :]                      # (c_in, 8ci)  up-fold, all 4 taps
    ws = mats_ref[1, :2 * c_skip, :C4]              # (2cs, 4ci)   skip pointwise (kx-permuted)
    w2 = mats_ref[2, :2 * c_out, :C2]               # (2co, 2ci)   conv2 pointwise (kx-permuted)
    w1dw = dws_ref[0]
    w2dw = dws_ref[1]
    b_all = vecs_ref[0, :C4]
    b2pw = vecs_ref[1, :C2]
    b1dw = vecs_ref[2, :2 * c_rem]
    b2dw = vecs_ref[3, :2 * c_rem]
    iddw = vecs_ref[4, :2 * c_rem]
    iddb = vecs_ref[5, :2 * c_rem]

    # ---- ConvTranspose fold + conv1/identity primaries: ONE MXU matmul -----
    x_ext = jnp.concatenate([x_t_ref[0], x_m_ref[0], x_b_ref[0]],
                            axis=0).astype(f32)                       # (nx, W, c_in)
    up = jnp.dot(x_ext.reshape(nx * width, c_in), wx,
                 preferred_element_type=f32).reshape(nx, width, 2 * C4)
    u0 = up[..., :C4]                                                 # ky = 0 rows
    u1 = up[..., C4:]                                                 # ky = 1 rows
    p_up = jnp.concatenate([u0[:, None], u1[:, None]],
                           axis=1).reshape(the, width, C4)

    sk_ext = jnp.concatenate([sk_t_ref[0], sk_m_ref[0], sk_b_ref[0]],
                             axis=0).astype(f32)                      # (the, W, 2cs)
    p_sk = jnp.dot(sk_ext.reshape(the * width, 2 * c_skip), ws,
                   preferred_element_type=f32).reshape(the, width, C4)

    # lanes: [c1 kx0 ci | c1 kx1 ci | id kx0 ci | id kx1 ci]
    p_all = p_up + p_sk + b_all

    # zero halo rows outside the image (== zero padding of the 3x3 depthwise)
    t = lax.broadcasted_iota(jnp.int32, (the, 1, 1), 0)
    mask = jnp.logical_and(jnp.logical_or(r > 0, t >= 2),
                           jnp.logical_or(r < nr - 1, t < the - 2))
    p_all = p_all * mask.astype(f32)

    p1 = p_all[..., :C2]                            # conv1 primary   (the, W, 2ci)
    idp = p_all[2:the - 2, :, C2:]                  # identity primary (th, W, 2ci)

    # ---- conv1: cheap 3x3 depthwise + GELU ----------------------------------
    if c_rem == ci:
        dwin1 = p1
    else:
        dwin1 = jnp.concatenate([p1[..., :c_rem], p1[..., ci:ci + c_rem]], -1)
    cheap1 = _dw3x3_packed(dwin1, w1dw, b1dw, th + 2)
    # g1 lanes: [prim kx0 ci | prim kx1 ci | cheap kx0 c_rem | cheap kx1 c_rem]
    g1 = _gelu(jnp.concatenate([p1[1:th + 3], cheap1], axis=-1))      # (th+2, W, 2co)

    # ---- conv2: primary 1x1 (packed) + cheap 3x3 + GELU ---------------------
    p2 = (jnp.dot(g1.reshape((th + 2) * width, 2 * c_out), w2,
                  preferred_element_type=f32).reshape(th + 2, width, C2) + b2pw)
    t2 = lax.broadcasted_iota(jnp.int32, (th + 2, 1, 1), 0)
    mask2 = jnp.logical_and(jnp.logical_or(r > 0, t2 >= 1),
                            jnp.logical_or(r < nr - 1, t2 < th + 1))
    p2 = p2 * mask2.astype(f32)
    if c_rem == ci:
        dwin2 = p2
    else:
        dwin2 = jnp.concatenate([p2[..., :c_rem], p2[..., ci:ci + c_rem]], -1)
    cheap2 = _dw3x3_packed(dwin2, w2dw, b2dw, th)                     # (th, W, 2c_rem)
    p2c = p2[1:th + 1]                                                # (th, W, 2ci)

    # ---- identity cheap (per-channel scale + bias) + residual add ----------
    if c_rem == ci:
        idin = idp
    else:
        idin = jnp.concatenate([idp[..., :c_rem], idp[..., ci:ci + c_rem]], -1)
    idc = idin * iddw + iddb                                          # (th, W, 2c_rem)

    # final lanes: [kx0: (prim ci, cheap c_rem) | kx1: (prim ci, cheap c_rem)]
    out = jnp.concatenate([
        _gelu(p2c[..., :ci]) + idp[..., :ci],
        _gelu(cheap2[..., :c_rem]) + idc[..., :c_rem],
        _gelu(p2c[..., ci:]) + idp[..., ci:],
        _gelu(cheap2[..., c_rem:]) + idc[..., c_rem:],
    ], axis=-1)                                                       # (th, W, 2co)

    out_ref[0] = out.astype(out_ref.dtype)


# ----------------------------------------------------------------------------
# Parameters (deterministic synthetic init; PyTorch-equivalent layout)
# ----------------------------------------------------------------------------
def init_params(key, c_in, c_out, dtype=jnp.float32):
    ci = -(-c_out // 2)  # ceil(c_out / 2) -> ghost "init" channels
    ks = jax.random.split(key, 14)
    rnd = lambda k, shape: (0.1 * jax.random.normal(k, shape)).astype(dtype)
    return {
        # ConvTranspose2d(c_in -> c_out, k=2, s=2), PyTorch layout (Cin, Cout, 2, 2)
        "up_w": rnd(ks[0], (c_in, c_out, 2, 2)),
        "up_b": rnd(ks[1], (c_out,)),
        # conv1: GhostConv2d(c_in -> c_out, dw=3)
        "c1_pw": rnd(ks[2], (c_in, ci)), "c1_pb": rnd(ks[3], (ci,)),
        "c1_dw": rnd(ks[4], (3, 3, ci)), "c1_db": rnd(ks[5], (ci,)),
        # conv2: GhostConv2d(c_out -> c_out, dw=3)
        "c2_pw": rnd(ks[6], (c_out, ci)), "c2_pb": rnd(ks[7], (ci,)),
        "c2_dw": rnd(ks[8], (3, 3, ci)), "c2_db": rnd(ks[9], (ci,)),
        # identity: GhostConv2d(c_in -> c_out, dw=1, pad=0)
        "id_pw": rnd(ks[10], (c_in, ci)), "id_pb": rnd(ks[11], (ci,)),
        "id_dw": rnd(ks[12], (ci,)), "id_db": rnd(ks[13], (ci,)),
    }


# ----------------------------------------------------------------------------
# Tiling (hardware-aware)
# ----------------------------------------------------------------------------
def _auto_tiling(N, H2, W, c_in, c_skip, c_out, ci, c_rem):
    try:
        cap = int(getattr(pltpu.get_tpu_info(), "vmem_capacity_bytes",
                          128 * 1024 * 1024))
    except Exception:  # pragma: no cover - conservative fallback
        cap = 128 * 1024 * 1024
    vmem_limit = min(cap * 3 // 4, 100 * 1024 * 1024)   # 96 MiB v5e/v6e, 48 MiB v7x
    budget = max(4 * 1024 * 1024, vmem_limit // 3)

    def footprint(th):
        rows = th + 4
        # double-buffered I/O blocks (f32 worst case)
        io = 2 * 4 * W * ((th // 2 + 2) * c_in + rows * 2 * c_skip
                          + th * 2 * c_out)
        # conservative sum of the f32 intermediates kept live in VMEM
        inter = 4 * W * rows * (16 * ci + 14 * c_rem + 8 * c_out
                                + c_in + 2 * c_skip)
        return io + inter

    cands = [th for th in range(2, H2 + 1, 2) if H2 % th == 0]
    fitting = [th for th in cands if footprint(th) <= budget] or cands[:1]
    tile_h = max(fitting)
    if N == 1:  # keep >= 2 grid steps so both TensorCores (megacore) get work
        multi = [th for th in fitting if H2 // th >= 2]
        if multi:
            tile_h = max(multi)
    return tile_h, vmem_limit


# ----------------------------------------------------------------------------
# Wrapper
# ----------------------------------------------------------------------------
def finet_ghost_up_block(x_nchw, skip_nchw, params, c_out):
    N, c_in, H, W = x_nchw.shape
    c_skip = skip_nchw.shape[1]
    assert c_in == c_out + c_skip and c_skip >= 1
    H2, W2 = 2 * H, 2 * W
    ci = -(-c_out // 2)
    c_rem = c_out - ci
    assert c_rem > 0, "ratio-2 GhostConv needs out_channels >= 2"
    dtype = x_nchw.dtype
    f32 = jnp.float32

    # NCHW -> NHWC (kernel keeps channels on lanes).  The skip/output column
    # pairing (W2 = W x 2) is a free row-major reshape of the NHWC arrays.
    # TODO(synk): an NHWC module boundary would delete these XLA transposes.
    x = jnp.transpose(x_nchw, (0, 2, 3, 1))                     # (N, H, W, c_in)
    skip_p = jnp.transpose(skip_nchw, (0, 2, 3, 1)).reshape(N, H2, W, 2 * c_skip)

    # --- fold ConvTranspose into the merged conv1/identity pointwise --------
    pw_all = jnp.concatenate([params["c1_pw"], params["id_pw"]], axis=1)  # (c_in, 2ci)
    WX = jnp.einsum("iokl,oj->klij", params["up_w"], pw_all[:c_out])      # (2,2,c_in,2ci)

    def _ky(ky):  # lane order per ky: [c1 kx0 | c1 kx1 | id kx0 | id kx1]
        k0, k1 = WX[ky, 0], WX[ky, 1]
        return jnp.concatenate([k0[:, :ci], k1[:, :ci], k0[:, ci:], k1[:, ci:]], 1)

    wx = jnp.concatenate([_ky(0), _ky(1)], axis=1)                        # (c_in, 8ci)

    c1s, ids = params["c1_pw"][c_out:], params["id_pw"][c_out:]           # skip rows
    Zs = jnp.zeros_like(c1s)
    ws_packed = jnp.concatenate([
        jnp.concatenate([c1s, Zs, ids, Zs], axis=1),   # skip kx0 channels
        jnp.concatenate([Zs, c1s, Zs, ids], axis=1),   # skip kx1 channels
    ], axis=0)                                                            # (2cs, 4ci)

    w2p = params["c2_pw"]
    Zi = jnp.zeros((ci, ci), w2p.dtype)
    Zr = jnp.zeros((c_rem, ci), w2p.dtype)
    w2_packed = jnp.concatenate([
        jnp.concatenate([w2p[:ci], Zi], axis=1),       # g1 prim kx0 -> out kx0
        jnp.concatenate([Zi, w2p[:ci]], axis=1),       # g1 prim kx1 -> out kx1
        jnp.concatenate([w2p[ci:], Zr], axis=1),       # g1 cheap kx0 -> out kx0
        jnp.concatenate([Zr, w2p[ci:]], axis=1),       # g1 cheap kx1 -> out kx1
    ], axis=0)                                                            # (2co, 2ci)

    b_c1 = params["c1_pb"] + params["up_b"] @ params["c1_pw"][:c_out]
    b_id = params["id_pb"] + params["up_b"] @ params["id_pw"][:c_out]
    b_all = jnp.concatenate([b_c1, b_c1, b_id, b_id])                     # (4ci,)
    b2pw = jnp.concatenate([params["c2_pb"]] * 2)                         # (2ci,)
    b1dw = jnp.concatenate([params["c1_db"][:c_rem]] * 2)
    b2dw = jnp.concatenate([params["c2_db"][:c_rem]] * 2)
    iddw = jnp.concatenate([params["id_dw"][:c_rem]] * 2)
    iddb = jnp.concatenate([params["id_db"][:c_rem]] * 2)

    w1dw = jnp.concatenate([params["c1_dw"][..., :c_rem]] * 2, axis=-1)
    w2dw = jnp.concatenate([params["c2_dw"][..., :c_rem]] * 2, axis=-1)

    # --- pack the small operands (fewer DMA descriptors / VMEM buffers) -----
    Kmax = max(c_in, 2 * c_skip, 2 * c_out)
    Nmax = 8 * ci

    def _padm(m):
        return jnp.pad(m, ((0, Kmax - m.shape[0]), (0, Nmax - m.shape[1])))

    mats = jnp.stack([_padm(wx), _padm(ws_packed), _padm(w2_packed)], 0).astype(f32)
    dws = jnp.stack([w1dw, w2dw], axis=0).astype(f32)                     # (2,3,3,2c_rem)

    def _padv(v):
        return jnp.pad(v, (0, 4 * ci - v.shape[0]))

    vecs = jnp.stack([_padv(b_all), _padv(b2pw), _padv(b1dw), _padv(b2dw),
                      _padv(iddw), _padv(iddb)], axis=0).astype(f32)      # (6, 4ci)

    # --- tiling / grid -------------------------------------------------------
    tile_h, vmem_limit = _auto_tiling(N, H2, W, c_in, c_skip, c_out, ci, c_rem)
    assert H2 % tile_h == 0 and tile_h % 2 == 0
    nR = H2 // tile_h
    thx = tile_h // 2

    kernel = functools.partial(
        _fused_block_kernel,
        tile_h=tile_h, width=W, c_in=c_in, c_skip=c_skip,
        ci=ci, c_rem=c_rem, c_out=c_out)

    in_specs = [
        # x: mid tile + clamped 1-row halos (zero-masked in-kernel)
        pl.BlockSpec((1, thx, W, c_in), lambda n, r: (n, r, 0, 0)),
        pl.BlockSpec((1, 1, W, c_in),
                     lambda n, r: (n, jnp.maximum(r * thx - 1, 0), 0, 0)),
        pl.BlockSpec((1, 1, W, c_in),
                     lambda n, r: (n, jnp.minimum(r * thx + thx, H - 1), 0, 0)),
        # packed skip: mid tile + clamped 2-row halos (zero-masked in-kernel)
        pl.BlockSpec((1, tile_h, W, 2 * c_skip), lambda n, r: (n, r, 0, 0)),
        pl.BlockSpec((1, 2, W, 2 * c_skip),
                     lambda n, r: (n, jnp.maximum(r * thx - 1, 0), 0, 0)),
        pl.BlockSpec((1, 2, W, 2 * c_skip),
                     lambda n, r: (n, jnp.minimum(r * thx + thx, H - 1), 0, 0)),
        # packed parameters (whole arrays, block index constant across steps)
        pl.BlockSpec((3, Kmax, Nmax), lambda n, r: (0, 0, 0)),
        pl.BlockSpec((2, 3, 3, 2 * c_rem), lambda n, r: (0, 0, 0, 0)),
        pl.BlockSpec((6, 4 * ci), lambda n, r: (0, 0)),
    ]

    itemsize = jnp.dtype(dtype).itemsize
    flops = 2 * N * (H * W * c_in * 8 * ci
                     + H2 * W * 2 * c_skip * 4 * ci
                     + H2 * W * 2 * c_out * 2 * ci
                     + 2 * 9 * H2 * W2 * c_rem)
    cost = pl.CostEstimate(
        flops=int(flops),
        transcendentals=int(2 * N * H2 * W2 * c_out),
        bytes_accessed=int((x.size + skip_p.size + N * H2 * W2 * c_out) * itemsize
                           + (mats.size + dws.size + vecs.size) * 4),
    )

    y = pl.pallas_call(
        kernel,
        out_shape=jax.ShapeDtypeStruct((N, H2, W, 2 * c_out), dtype),
        grid=(N, nR),
        in_specs=in_specs,
        out_specs=pl.BlockSpec((1, tile_h, W, 2 * c_out), lambda n, r: (n, r, 0, 0)),
        compiler_params=pltpu.CompilerParams(
            dimension_semantics=("parallel", "parallel"),
            vmem_limit_bytes=int(vmem_limit)),
        cost_estimate=cost,
    )(x, x, x, skip_p, skip_p, skip_p, mats, dws, vecs)

    y = y.reshape(N, H2, W2, c_out)                    # free (row-major) unpack
    return jnp.transpose(y, (0, 3, 1, 2))              # back to NCHW


# ----------------------------------------------------------------------------
if __name__ == "__main__":
    key = jax.random.PRNGKey(0)
    kx, ks, kp = jax.random.split(key, 3)

    N, c_in, c_out, H, W = 2, 8, 4, 8, 8               # skip carries c_in - c_out channels
    x = jax.random.normal(kx, (N, c_in, H, W), jnp.float32)
    skip = jax.random.normal(ks, (N, c_in - c_out, 2 * H, 2 * W), jnp.float32)
    params = init_params(kp, c_in, c_out)

    fwd = jax.jit(functools.partial(finet_ghost_up_block, c_out=c_out))
    y = fwd(x, skip, params)
    jax.block_until_ready(y)
    assert y.shape == (N, c_out, 2 * H, 2 * W) and y.dtype == jnp.float32
    print("KERNEL_OK")
</pallas_src>

<mosaic_0001>
module attributes {stable_mosaic.version = 11 : i64} {
  func.func @_fused_block_kernel(%arg0: i32, %arg1: i32, %arg2: memref<1x8x8x8xf32, #tpu.memory_space<vmem>>, %arg3: memref<1x1x8x8xf32, #tpu.memory_space<vmem>>, %arg4: memref<1x1x8x8xf32, #tpu.memory_space<vmem>>, %arg5: memref<1x16x8x8xf32, #tpu.memory_space<vmem>>, %arg6: memref<1x2x8x8xf32, #tpu.memory_space<vmem>>, %arg7: memref<1x2x8x8xf32, #tpu.memory_space<vmem>>, %arg8: memref<3x8x16xf32, #tpu.memory_space<vmem>>, %arg9: memref<2x3x3x4xf32, #tpu.memory_space<vmem>>, %arg10: memref<6x8xf32, #tpu.memory_space<vmem>>, %arg11: memref<1x16x8x8xf32, #tpu.memory_space<vmem>>) attributes {dimension_semantics = [#tpu.dimension_semantics<parallel>, #tpu.dimension_semantics<parallel>], iteration_bounds = array<i64: 2, 1>, scalar_prefetch = 0 : i64, scratch_operands = 0 : i64, tpu.core_type = #tpu.core_type<tc>, window_params = [{transform_indices = @transform_0, window_bounds = array<i64: 1, 8, 8, 8>}, {transform_indices = @transform_1, window_bounds = array<i64: 1, 1, 8, 8>}, {transform_indices = @transform_2, window_bounds = array<i64: 1, 1, 8, 8>}, {transform_indices = @transform_3, window_bounds = array<i64: 1, 16, 8, 8>}, {transform_indices = @transform_4, window_bounds = array<i64: 1, 2, 8, 8>}, {transform_indices = @transform_5, window_bounds = array<i64: 1, 2, 8, 8>}, {pipeline_mode = #tpu.pipeline_mode<synchronous>, transform_indices = @transform_6, window_bounds = array<i64: 3, 8, 16>}, {pipeline_mode = #tpu.pipeline_mode<synchronous>, transform_indices = @transform_7, window_bounds = array<i64: 2, 3, 3, 4>}, {pipeline_mode = #tpu.pipeline_mode<synchronous>, transform_indices = @transform_8, window_bounds = array<i64: 6, 8>}, {transform_indices = @transform_9, window_bounds = array<i64: 1, 16, 8, 8>}]} {
    %c0 = arith.constant 0 : index
    %c0_0 = arith.constant 0 : index
    %c0_1 = arith.constant 0 : index
    %0 = vector.load %arg8[%c0, %c0_0, %c0_1] : memref<3x8x16xf32, #tpu.memory_space<vmem>>, vector<1x8x16xf32>
    %1 = vector.shape_cast %0 : vector<1x8x16xf32> to vector<8x16xf32>
    %c1 = arith.constant 1 : index
    %c0_2 = arith.constant 0 : index
    %c0_3 = arith.constant 0 : index
    %2 = vector.load %arg8[%c1, %c0_2, %c0_3] : memref<3x8x16xf32, #tpu.memory_space<vmem>>, vector<1x8x8xf32>
    %3 = vector.shape_cast %2 : vector<1x8x8xf32> to vector<8x8xf32>
    %c2 = arith.constant 2 : index
    %c0_4 = arith.constant 0 : index
    %c0_5 = arith.constant 0 : index
    %4 = vector.load %arg8[%c2, %c0_4, %c0_5] : memref<3x8x16xf32, #tpu.memory_space<vmem>>, vector<1x8x4xf32>
    %5 = vector.shape_cast %4 : vector<1x8x4xf32> to vector<8x4xf32>
    %c0_6 = arith.constant 0 : index
    %c0_7 = arith.constant 0 : index
    %c0_8 = arith.constant 0 : index
    %c0_9 = arith.constant 0 : index
    %6 = vector.load %arg9[%c0_6, %c0_7, %c0_8, %c0_9] : memref<2x3x3x4xf32, #tpu.memory_space<vmem>>, vector<1x3x3x4xf32>
    %7 = vector.shape_cast %6 : vector<1x3x3x4xf32> to vector<3x3x4xf32>
    %c1_10 = arith.constant 1 : index
    %c0_11 = arith.constant 0 : index
    %c0_12 = arith.constant 0 : index
    %c0_13 = arith.constant 0 : index
    %8 = vector.load %arg9[%c1_10, %c0_11, %c0_12, %c0_13] : memref<2x3x3x4xf32, #tpu.memory_space<vmem>>, vector<1x3x3x4xf32>
    %9 = vector.shape_cast %8 : vector<1x3x3x4xf32> to vector<3x3x4xf32>
    %c0_14 = arith.constant 0 : index
    %c0_15 = arith.constant 0 : index
    %10 = vector.load %arg10[%c0_14, %c0_15] : memref<6x8xf32, #tpu.memory_space<vmem>>, vector<1x8xf32>
    %11 = vector.shape_cast %10 : vector<1x8xf32> to vector<8xf32>
    %c1_16 = arith.constant 1 : index
    %c0_17 = arith.constant 0 : index
    %12 = vector.load %arg10[%c1_16, %c0_17] : memref<6x8xf32, #tpu.memory_space<vmem>>, vector<1x4xf32>
    %13 = vector.shape_cast %12 : vector<1x4xf32> to vector<4xf32>
    %c2_18 = arith.constant 2 : index
    %c0_19 = arith.constant 0 : index
    %14 = vector.load %arg10[%c2_18, %c0_19] : memref<6x8xf32, #tpu.memory_space<vmem>>, vector<1x4xf32>
    %15 = vector.shape_cast %14 : vector<1x4xf32> to vector<4xf32>
    %c3 = arith.constant 3 : index
    %c0_20 = arith.constant 0 : index
    %16 = vector.load %arg10[%c3, %c0_20] : memref<6x8xf32, #tpu.memory_space<vmem>>, vector<1x4xf32>
    %17 = vector.shape_cast %16 : vector<1x4xf32> to vector<4xf32>
    %c4 = arith.constant 4 : index
    %c0_21 = arith.constant 0 : index
    %18 = vector.load %arg10[%c4, %c0_21] : memref<6x8xf32, #tpu.memory_space<vmem>>, vector<1x4xf32>
    %19 = vector.shape_cast %18 : vector<1x4xf32> to vector<4xf32>
    %c5 = arith.constant 5 : index
    %c0_22 = arith.constant 0 : index
    %20 = vector.load %arg10[%c5, %c0_22] : memref<6x8xf32, #tpu.memory_space<vmem>>, vector<1x4xf32>
    %21 = vector.shape_cast %20 : vector<1x4xf32> to vector<4xf32>
    %c0_23 = arith.constant 0 : index
    %c0_24 = arith.constant 0 : index
    %c0_25 = arith.constant 0 : index
    %c0_26 = arith.constant 0 : index
    %22 = vector.load %arg3[%c0_23, %c0_24, %c0_25, %c0_26] : memref<1x1x8x8xf32, #tpu.memory_space<vmem>>, vector<1x1x8x8xf32>
    %23 = vector.shape_cast %22 : vector<1x1x8x8xf32> to vector<1x8x8xf32>
    %c0_27 = arith.constant 0 : index
    %c0_28 = arith.constant 0 : index
    %c0_29 = arith.constant 0 : index
    %c0_30 = arith.constant 0 : index
    %24 = vector.load %arg2[%c0_27, %c0_28, %c0_29, %c0_30] : memref<1x8x8x8xf32, #tpu.memory_space<vmem>>, vector<1x8x8x8xf32>
    %25 = vector.shape_cast %24 : vector<1x8x8x8xf32> to vector<8x8x8xf32>
    %c0_31 = arith.constant 0 : index
    %c0_32 = arith.constant 0 : index
    %c0_33 = arith.constant 0 : index
    %c0_34 = arith.constant 0 : index
    %26 = vector.load %arg4[%c0_31, %c0_32, %c0_33, %c0_34] : memref<1x1x8x8xf32, #tpu.memory_space<vmem>>, vector<1x1x8x8xf32>
    %27 = vector.shape_cast %26 : vector<1x1x8x8xf32> to vector<1x8x8xf32>
    %28 = tpu.concatenate %23, %25, %27 in 0 : vector<1x8x8xf32>, vector<8x8x8xf32>, vector<1x8x8xf32> -> vector<10x8x8xf32>
    %29 = vector.shape_cast %28 : vector<10x8x8xf32> to vector<80x8xf32>
    %cst = arith.constant dense<0.000000e+00> : vector<80x16xf32>
    %30 = tpu.matmul %29, %1, %cst {dimension_numbers = #tpu.dot_dimension_numbers<[1], [0], [0], [1], [0, 0, 1, 1], [], []>} : vector<80x8xf32>, vector<8x16xf32>, vector<80x16xf32> -> vector<80x16xf32>
    %31 = vector.shape_cast %30 : vector<80x16xf32> to vector<10x8x16xf32>
    %32 = vector.extract_strided_slice %31 {offsets = [0, 0, 0], sizes = [10, 8, 8], strides = [1, 1, 1]} : vector<10x8x16xf32> to vector<10x8x8xf32>
    %33 = vector.extract_strided_slice %31 {offsets = [0, 0, 8], sizes = [10, 8, 8], strides = [1, 1, 1]} : vector<10x8x16xf32> to vector<10x8x8xf32>
    %34 = vector.shape_cast %32 : vector<10x8x8xf32> to vector<10x1x8x8xf32>
    %35 = vector.shape_cast %33 : vector<10x8x8xf32> to vector<10x1x8x8xf32>
    %36 = tpu.concatenate %34, %35 in 1 : vector<10x1x8x8xf32>, vector<10x1x8x8xf32> -> vector<10x2x8x8xf32>
    %37 = vector.shape_cast %36 : vector<10x2x8x8xf32> to vector<20x8x8xf32>
    %c0_35 = arith.constant 0 : index
    %c0_36 = arith.constant 0 : index
    %c0_37 = arith.constant 0 : index
    %c0_38 = arith.constant 0 : index
    %38 = vector.load %arg6[%c0_35, %c0_36, %c0_37, %c0_38] : memref<1x2x8x8xf32, #tpu.memory_space<vmem>>, vector<1x2x8x8xf32>
    %39 = vector.shape_cast %38 : vector<1x2x8x8xf32> to vector<2x8x8xf32>
    %c0_39 = arith.constant 0 : index
    %c0_40 = arith.constant 0 : index
    %c0_41 = arith.constant 0 : index
    %c0_42 = arith.constant 0 : index
    %40 = vector.load %arg5[%c0_39, %c0_40, %c0_41, %c0_42] : memref<1x16x8x8xf32, #tpu.memory_space<vmem>>, vector<1x16x8x8xf32>
    %41 = vector.shape_cast %40 : vector<1x16x8x8xf32> to vector<16x8x8xf32>
    %c0_43 = arith.constant 0 : index
    %c0_44 = arith.constant 0 : index
    %c0_45 = arith.constant 0 : index
    %c0_46 = arith.constant 0 : index
    %42 = vector.load %arg7[%c0_43, %c0_44, %c0_45, %c0_46] : memref<1x2x8x8xf32, #tpu.memory_space<vmem>>, vector<1x2x8x8xf32>
    %43 = vector.shape_cast %42 : vector<1x2x8x8xf32> to vector<2x8x8xf32>
    %44 = tpu.concatenate %39, %41, %43 in 0 : vector<2x8x8xf32>, vector<16x8x8xf32>, vector<2x8x8xf32> -> vector<20x8x8xf32>
    %45 = vector.shape_cast %44 : vector<20x8x8xf32> to vector<160x8xf32>
    %cst_47 = arith.constant dense<0.000000e+00> : vector<160x8xf32>
    %46 = tpu.matmul %45, %3, %cst_47 {dimension_numbers = #tpu.dot_dimension_numbers<[1], [0], [0], [1], [0, 0, 1, 1], [], []>} : vector<160x8xf32>, vector<8x8xf32>, vector<160x8xf32> -> vector<160x8xf32>
    %47 = vector.shape_cast %46 : vector<160x8xf32> to vector<20x8x8xf32>
    %48 = arith.addf %37, %47 : vector<20x8x8xf32>
    %49 = vector.shape_cast %11 : vector<8xf32> to vector<1x1x8xf32>
    %50 = vector.broadcast %49 : vector<1x1x8xf32> to vector<20x8x8xf32>
    %51 = arith.addf %48, %50 : vector<20x8x8xf32>
    %52 = tpu.iota {dimensions = array<i32: 0>} : vector<20x1x1xi32>
    %c0_i32 = arith.constant 0 : i32
    %53 = arith.cmpi sgt, %arg1, %c0_i32 : i32
    %c2_i32 = arith.constant 2 : i32
    %54 = vector.broadcast %c2_i32 : i32 to vector<20x1x1xi32>
    %55 = arith.cmpi sge, %52, %54 : vector<20x1x1xi32>
    %56 = vector.broadcast %53 : i1 to vector<20x1x1xi1>
    %57 = arith.ori %56, %55 : vector<20x1x1xi1>
    %c0_i32_48 = arith.constant 0 : i32
    %58 = arith.cmpi slt, %arg1, %c0_i32_48 : i32
    %c18_i32 = arith.constant 18 : i32
    %59 = vector.broadcast %c18_i32 : i32 to vector<20x1x1xi32>
    %60 = arith.cmpi slt, %52, %59 : vector<20x1x1xi32>
    %61 = vector.broadcast %58 : i1 to vector<20x1x1xi1>
    %62 = arith.ori %61, %60 : vector<20x1x1xi1>
    %63 = arith.andi %57, %62 : vector<20x1x1xi1>
    %64 = arith.extui %63 : vector<20x1x1xi1> to vector<20x1x1xi32>
    %65 = arith.sitofp %64 : vector<20x1x1xi32> to vector<20x1x1xf32>
    %66 = vector.broadcast %65 : vector<20x1x1xf32> to vector<20x8x8xf32>
    %67 = arith.mulf %51, %66 : vector<20x8x8xf32>
    %68 = vector.extract_strided_slice %67 {offsets = [0, 0, 0], sizes = [20, 8, 4], strides = [1, 1, 1]} : vector<20x8x8xf32> to vector<20x8x4xf32>
    %69 = vector.extract_strided_slice %67 {offsets = [2, 0, 4], sizes = [16, 8, 4], strides = [1, 1, 1]} : vector<20x8x8xf32> to vector<16x8x4xf32>
    %70 = vector.extract_strided_slice %68 {offsets = [0, 0, 0], sizes = [20, 8, 2], strides = [1, 1, 1]} : vector<20x8x4xf32> to vector<20x8x2xf32>
    %71 = vector.extract_strided_slice %68 {offsets = [0, 0, 2], sizes = [20, 8, 2], strides = [1, 1, 1]} : vector<20x8x4xf32> to vector<20x8x2xf32>
    %cst_49 = arith.constant 0.000000e+00 : f32
    %72 = vector.broadcast %cst_49 : f32 to vector<20x1x2xf32>
    %73 = vector.extract_strided_slice %71 {offsets = [0, 0, 0], sizes = [20, 7, 2], strides = [1, 1, 1]} : vector<20x8x2xf32> to vector<20x7x2xf32>
    %74 = tpu.concatenate %72, %73 in 1 : vector<20x1x2xf32>, vector<20x7x2xf32> -> vector<20x8x2xf32>
    %75 = tpu.concatenate %74, %70 in 2 : vector<20x8x2xf32>, vector<20x8x2xf32> -> vector<20x8x4xf32>
    %cst_50 = arith.constant 0.000000e+00 : f32
    %76 = vector.broadcast %cst_50 : f32 to vector<20x1x2xf32>
    %77 = vector.extract_strided_slice %70 {offsets = [0, 1, 0], sizes = [20, 7, 2], strides = [1, 1, 1]} : vector<20x8x2xf32> to vector<20x7x2xf32>
    %78 = tpu.concatenate %77, %76 in 1 : vector<20x7x2xf32>, vector<20x1x2xf32> -> vector<20x8x2xf32>
    %79 = tpu.concatenate %71, %78 in 2 : vector<20x8x2xf32>, vector<20x8x2xf32> -> vector<20x8x4xf32>
    %cst_51 = arith.constant 0.000000e+00 : f32
    %80 = vector.broadcast %cst_51 : f32 to vector<18x8x4xf32>
    %81 = vector.extract_strided_slice %75 {offsets = [0, 0, 0], sizes = [18, 8, 4], strides = [1, 1, 1]} : vector<20x8x4xf32> to vector<18x8x4xf32>
    %82 = vector.extract_strided_slice %7 {offsets = [0, 0, 0], sizes = [1, 1, 4], strides = [1, 1, 1]} : vector<3x3x4xf32> to vector<1x1x4xf32>
    %83 = vector.shape_cast %82 : vector<1x1x4xf32> to vector<4xf32>
    %84 = vector.shape_cast %83 : vector<4xf32> to vector<1x1x4xf32>
    %85 = vector.broadcast %84 : vector<1x1x4xf32> to vector<18x8x4xf32>
    %86 = arith.mulf %81, %85 : vector<18x8x4xf32>
    %87 = arith.addf %80, %86 : vector<18x8x4xf32>
    %88 = vector.extract_strided_slice %68 {offsets = [0, 0, 0], sizes = [18, 8, 4], strides = [1, 1, 1]} : vector<20x8x4xf32> to vector<18x8x4xf32>
    %89 = vector.extract_strided_slice %7 {offsets = [0, 1, 0], sizes = [1, 1, 4], strides = [1, 1, 1]} : vector<3x3x4xf32> to vector<1x1x4xf32>
    %90 = vector.shape_cast %89 : vector<1x1x4xf32> to vector<4xf32>
    %91 = vector.shape_cast %90 : vector<4xf32> to vector<1x1x4xf32>
    %92 = vector.broadcast %91 : vector<1x1x4xf32> to vector<18x8x4xf32>
    %93 = arith.mulf %88, %92 : vector<18x8x4xf32>
    %94 = arith.addf %87, %93 : vector<18x8x4xf32>
    %95 = vector.extract_strided_slice %79 {offsets = [0, 0, 0], sizes = [18, 8, 4], strides = [1, 1, 1]} : vector<20x8x4xf32> to vector<18x8x4xf32>
    %96 = vector.extract_strided_slice %7 {offsets = [0, 2, 0], sizes = [1, 1, 4], strides = [1, 1, 1]} : vector<3x3x4xf32> to vector<1x1x4xf32>
    %97 = vector.shape_cast %96 : vector<1x1x4xf32> to vector<4xf32>
    %98 = vector.shape_cast %97 : vector<4xf32> to vector<1x1x4xf32>
    %99 = vector.broadcast %98 : vector<1x1x4xf32> to vector<18x8x4xf32>
    %100 = arith.mulf %95, %99 : vector<18x8x4xf32>
    %101 = arith.addf %94, %100 : vector<18x8x4xf32>
    %102 = vector.extract_strided_slice %75 {offsets = [1, 0, 0], sizes = [18, 8, 4], strides = [1, 1, 1]} : vector<20x8x4xf32> to vector<18x8x4xf32>
    %103 = vector.extract_strided_slice %7 {offsets = [1, 0, 0], sizes = [1, 1, 4], strides = [1, 1, 1]} : vector<3x3x4xf32> to vector<1x1x4xf32>
    %104 = vector.shape_cast %103 : vector<1x1x4xf32> to vector<4xf32>
    %105 = vector.shape_cast %104 : vector<4xf32> to vector<1x1x4xf32>
    %106 = vector.broadcast %105 : vector<1x1x4xf32> to vector<18x8x4xf32>
    %107 = arith.mulf %102, %106 : vector<18x8x4xf32>
    %108 = arith.addf %101, %107 : vector<18x8x4xf32>
    %109 = vector.extract_strided_slice %68 {offsets = [1, 0, 0], sizes = [18, 8, 4], strides = [1, 1, 1]} : vector<20x8x4xf32> to vector<18x8x4xf32>
    %110 = vector.extract_strided_slice %7 {offsets = [1, 1, 0], sizes = [1, 1, 4], strides = [1, 1, 1]} : vector<3x3x4xf32> to vector<1x1x4xf32>
    %111 = vector.shape_cast %110 : vector<1x1x4xf32> to vector<4xf32>
    %112 = vector.shape_cast %111 : vector<4xf32> to vector<1x1x4xf32>
    %113 = vector.broadcast %112 : vector<1x1x4xf32> to vector<18x8x4xf32>
    %114 = arith.mulf %109, %113 : vector<18x8x4xf32>
    %115 = arith.addf %108, %114 : vector<18x8x4xf32>
    %116 = vector.extract_strided_slice %79 {offsets = [1, 0, 0], sizes = [18, 8, 4], strides = [1, 1, 1]} : vector<20x8x4xf32> to vector<18x8x4xf32>
    %117 = vector.extract_strided_slice %7 {offsets = [1, 2, 0], sizes = [1, 1, 4], strides = [1, 1, 1]} : vector<3x3x4xf32> to vector<1x1x4xf32>
    %118 = vector.shape_cast %117 : vector<1x1x4xf32> to vector<4xf32>
    %119 = vector.shape_cast %118 : vector<4xf32> to vector<1x1x4xf32>
    %120 = vector.broadcast %119 : vector<1x1x4xf32> to vector<18x8x4xf32>
    %121 = arith.mulf %116, %120 : vector<18x8x4xf32>
    %122 = arith.addf %115, %121 : vector<18x8x4xf32>
    %123 = vector.extract_strided_slice %75 {offsets = [2, 0, 0], sizes = [18, 8, 4], strides = [1, 1, 1]} : vector<20x8x4xf32> to vector<18x8x4xf32>
    %124 = vector.extract_strided_slice %7 {offsets = [2, 0, 0], sizes = [1, 1, 4], strides = [1, 1, 1]} : vector<3x3x4xf32> to vector<1x1x4xf32>
    %125 = vector.shape_cast %124 : vector<1x1x4xf32> to vector<4xf32>
    %126 = vector.shape_cast %125 : vector<4xf32> to vector<1x1x4xf32>
    %127 = vector.broadcast %126 : vector<1x1x4xf32> to vector<18x8x4xf32>
    %128 = arith.mulf %123, %127 : vector<18x8x4xf32>
    %129 = arith.addf %122, %128 : vector<18x8x4xf32>
    %130 = vector.extract_strided_slice %68 {offsets = [2, 0, 0], sizes = [18, 8, 4], strides = [1, 1, 1]} : vector<20x8x4xf32> to vector<18x8x4xf32>
    %131 = vector.extract_strided_slice %7 {offsets = [2, 1, 0], sizes = [1, 1, 4], strides = [1, 1, 1]} : vector<3x3x4xf32> to vector<1x1x4xf32>
    %132 = vector.shape_cast %131 : vector<1x1x4xf32> to vector<4xf32>
    %133 = vector.shape_cast %132 : vector<4xf32> to vector<1x1x4xf32>
    %134 = vector.broadcast %133 : vector<1x1x4xf32> to vector<18x8x4xf32>
    %135 = arith.mulf %130, %134 : vector<18x8x4xf32>
    %136 = arith.addf %129, %135 : vector<18x8x4xf32>
    %137 = vector.extract_strided_slice %79 {offsets = [2, 0, 0], sizes = [18, 8, 4], strides = [1, 1, 1]} : vector<20x8x4xf32> to vector<18x8x4xf32>
    %138 = vector.extract_strided_slice %7 {offsets = [2, 2, 0], sizes = [1, 1, 4], strides = [1, 1, 1]} : vector<3x3x4xf32> to vector<1x1x4xf32>
    %139 = vector.shape_cast %138 : vector<1x1x4xf32> to vector<4xf32>
    %140 = vector.shape_cast %139 : vector<4xf32> to vector<1x1x4xf32>
    %141 = vector.broadcast %140 : vector<1x1x4xf32> to vector<18x8x4xf32>
    %142 = arith.mulf %137, %141 : vector<18x8x4xf32>
    %143 = arith.addf %136, %142 : vector<18x8x4xf32>
    %144 = vector.shape_cast %15 : vector<4xf32> to vector<1x1x4xf32>
    %145 = vector.broadcast %144 : vector<1x1x4xf32> to vector<18x8x4xf32>
    %146 = arith.addf %143, %145 : vector<18x8x4xf32>
    %147 = vector.extract_strided_slice %68 {offsets = [1, 0, 0], sizes = [18, 8, 4], strides = [1, 1, 1]} : vector<20x8x4xf32> to vector<18x8x4xf32>
    %148 = tpu.concatenate %147, %146 in 2 : vector<18x8x4xf32>, vector<18x8x4xf32> -> vector<18x8x8xf32>
    %cst_52 = arith.constant 5.000000e-01 : f32
    %149 = vector.broadcast %cst_52 : f32 to vector<18x8x8xf32>
    %150 = arith.mulf %149, %148 : vector<18x8x8xf32>
    %cst_53 = arith.constant 4.471500e-02 : f32
    %151 = vector.broadcast %cst_53 : f32 to vector<18x8x8xf32>
    %152 = arith.mulf %151, %148 : vector<18x8x8xf32>
    %153 = arith.mulf %152, %148 : vector<18x8x8xf32>
    %154 = arith.mulf %153, %148 : vector<18x8x8xf32>
    %155 = arith.addf %148, %154 : vector<18x8x8xf32>
    %cst_54 = arith.constant 0.797884583 : f32
    %156 = vector.broadcast %cst_54 : f32 to vector<18x8x8xf32>
    %157 = arith.mulf %156, %155 : vector<18x8x8xf32>
    %158 = math.tanh %157 : vector<18x8x8xf32>
    %cst_55 = arith.constant 1.000000e+00 : f32
    %159 = vector.broadcast %cst_55 : f32 to vector<18x8x8xf32>
    %160 = arith.addf %159, %158 : vector<18x8x8xf32>
    %161 = arith.mulf %150, %160 : vector<18x8x8xf32>
    %162 = vector.shape_cast %161 : vector<18x8x8xf32> to vector<144x8xf32>
    %cst_56 = arith.constant dense<0.000000e+00> : vector<144x4xf32>
    %163 = tpu.matmul %162, %5, %cst_56 {dimension_numbers = #tpu.dot_dimension_numbers<[1], [0], [0], [1], [0, 0, 1, 1], [], []>} : vector<144x8xf32>, vector<8x4xf32>, vector<144x4xf32> -> vector<144x4xf32>
    %164 = vector.shape_cast %163 : vector<144x4xf32> to vector<18x8x4xf32>
    %165 = vector.shape_cast %13 : vector<4xf32> to vector<1x1x4xf32>
    %166 = vector.broadcast %165 : vector<1x1x4xf32> to vector<18x8x4xf32>
    %167 = arith.addf %164, %166 : vector<18x8x4xf32>
    %168 = tpu.iota {dimensions = array<i32: 0>} : vector<18x1x1xi32>
    %c0_i32_57 = arith.constant 0 : i32
    %169 = arith.cmpi sgt, %arg1, %c0_i32_57 : i32
    %c1_i32 = arith.constant 1 : i32
    %170 = vector.broadcast %c1_i32 : i32 to vector<18x1x1xi32>
    %171 = arith.cmpi sge, %168, %170 : vector<18x1x1xi32>
    %172 = vector.broadcast %169 : i1 to vector<18x1x1xi1>
    %173 = arith.ori %172, %171 : vector<18x1x1xi1>
    %c0_i32_58 = arith.constant 0 : i32
    %174 = arith.cmpi slt, %arg1, %c0_i32_58 : i32
    %c17_i32 = arith.constant 17 : i32
    %175 = vector.broadcast %c17_i32 : i32 to vector<18x1x1xi32>
    %176 = arith.cmpi slt, %168, %175 : vector<18x1x1xi32>
    %177 = vector.broadcast %174 : i1 to vector<18x1x1xi1>
    %178 = arith.ori %177, %176 : vector<18x1x1xi1>
    %179 = arith.andi %173, %178 : vector<18x1x1xi1>
    %180 = arith.extui %179 : vector<18x1x1xi1> to vector<18x1x1xi32>
    %181 = arith.sitofp %180 : vector<18x1x1xi32> to vector<18x1x1xf32>
    %182 = vector.broadcast %181 : vector<18x1x1xf32> to vector<18x8x4xf32>
    %183 = arith.mulf %167, %182 : vector<18x8x4xf32>
    %184 = vector.extract_strided_slice %183 {offsets = [0, 0, 0], sizes = [18, 8, 2], strides = [1, 1, 1]} : vector<18x8x4xf32> to vector<18x8x2xf32>
    %185 = vector.extract_strided_slice %183 {offsets = [0, 0, 2], sizes = [18, 8, 2], strides = [1, 1, 1]} : vector<18x8x4xf32> to vector<18x8x2xf32>
    %cst_59 = arith.constant 0.000000e+00 : f32
    %186 = vector.broadcast %cst_59 : f32 to vector<18x1x2xf32>
    %187 = vector.extract_strided_slice %185 {offsets = [0, 0, 0], sizes = [18, 7, 2], strides = [1, 1, 1]} : vector<18x8x2xf32> to vector<18x7x2xf32>
    %188 = tpu.concatenate %186, %187 in 1 : vector<18x1x2xf32>, vector<18x7x2xf32> -> vector<18x8x2xf32>
    %189 = tpu.concatenate %188, %184 in 2 : vector<18x8x2xf32>, vector<18x8x2xf32> -> vector<18x8x4xf32>
    %cst_60 = arith.constant 0.000000e+00 : f32
    %190 = vector.broadcast %cst_60 : f32 to vector<18x1x2xf32>
    %191 = vector.extract_strided_slice %184 {offsets = [0, 1, 0], sizes = [18, 7, 2], strides = [1, 1, 1]} : vector<18x8x2xf32> to vector<18x7x2xf32>
    %192 = tpu.concatenate %191, %190 in 1 : vector<18x7x2xf32>, vector<18x1x2xf32> -> vector<18x8x2xf32>
    %193 = tpu.concatenate %185, %192 in 2 : vector<18x8x2xf32>, vector<18x8x2xf32> -> vector<18x8x4xf32>
    %cst_61 = arith.constant 0.000000e+00 : f32
    %194 = vector.broadcast %cst_61 : f32 to vector<16x8x4xf32>
    %195 = vector.extract_strided_slice %189 {offsets = [0, 0, 0], sizes = [16, 8, 4], strides = [1, 1, 1]} : vector<18x8x4xf32> to vector<16x8x4xf32>
    %196 = vector.extract_strided_slice %9 {offsets = [0, 0, 0], sizes = [1, 1, 4], strides = [1, 1, 1]} : vector<3x3x4xf32> to vector<1x1x4xf32>
    %197 = vector.shape_cast %196 : vector<1x1x4xf32> to vector<4xf32>
    %198 = vector.shape_cast %197 : vector<4xf32> to vector<1x1x4xf32>
    %199 = vector.broadcast %198 : vector<1x1x4xf32> to vector<16x8x4xf32>
    %200 = arith.mulf %195, %199 : vector<16x8x4xf32>
    %201 = arith.addf %194, %200 : vector<16x8x4xf32>
    %202 = vector.extract_strided_slice %183 {offsets = [0, 0, 0], sizes = [16, 8, 4], strides = [1, 1, 1]} : vector<18x8x4xf32> to vector<16x8x4xf32>
    %203 = vector.extract_strided_slice %9 {offsets = [0, 1, 0], sizes = [1, 1, 4], strides = [1, 1, 1]} : vector<3x3x4xf32> to vector<1x1x4xf32>
    %204 = vector.shape_cast %203 : vector<1x1x4xf32> to vector<4xf32>
    %205 = vector.shape_cast %204 : vector<4xf32> to vector<1x1x4xf32>
    %206 = vector.broadcast %205 : vector<1x1x4xf32> to vector<16x8x4xf32>
    %207 = arith.mulf %202, %206 : vector<16x8x4xf32>
    %208 = arith.addf %201, %207 : vector<16x8x4xf32>
    %209 = vector.extract_strided_slice %193 {offsets = [0, 0, 0], sizes = [16, 8, 4], strides = [1, 1, 1]} : vector<18x8x4xf32> to vector<16x8x4xf32>
    %210 = vector.extract_strided_slice %9 {offsets = [0, 2, 0], sizes = [1, 1, 4], strides = [1, 1, 1]} : vector<3x3x4xf32> to vector<1x1x4xf32>
    %211 = vector.shape_cast %210 : vector<1x1x4xf32> to vector<4xf32>
    %212 = vector.shape_cast %211 : vector<4xf32> to vector<1x1x4xf32>
    %213 = vector.broadcast %212 : vector<1x1x4xf32> to vector<16x8x4xf32>
    %214 = arith.mulf %209, %213 : vector<16x8x4xf32>
    %215 = arith.addf %208, %214 : vector<16x8x4xf32>
    %216 = vector.extract_strided_slice %189 {offsets = [1, 0, 0], sizes = [16, 8, 4], strides = [1, 1, 1]} : vector<18x8x4xf32> to vector<16x8x4xf32>
    %217 = vector.extract_strided_slice %9 {offsets = [1, 0, 0], sizes = [1, 1, 4], strides = [1, 1, 1]} : vector<3x3x4xf32> to vector<1x1x4xf32>
    %218 = vector.shape_cast %217 : vector<1x1x4xf32> to vector<4xf32>
    %219 = vector.shape_cast %218 : vector<4xf32> to vector<1x1x4xf32>
    %220 = vector.broadcast %219 : vector<1x1x4xf32> to vector<16x8x4xf32>
    %221 = arith.mulf %216, %220 : vector<16x8x4xf32>
    %222 = arith.addf %215, %221 : vector<16x8x4xf32>
    %223 = vector.extract_strided_slice %183 {offsets = [1, 0, 0], sizes = [16, 8, 4], strides = [1, 1, 1]} : vector<18x8x4xf32> to vector<16x8x4xf32>
    %224 = vector.extract_strided_slice %9 {offsets = [1, 1, 0], sizes = [1, 1, 4], strides = [1, 1, 1]} : vector<3x3x4xf32> to vector<1x1x4xf32>
    %225 = vector.shape_cast %224 : vector<1x1x4xf32> to vector<4xf32>
    %226 = vector.shape_cast %225 : vector<4xf32> to vector<1x1x4xf32>
    %227 = vector.broadcast %226 : vector<1x1x4xf32> to vector<16x8x4xf32>
    %228 = arith.mulf %223, %227 : vector<16x8x4xf32>
    %229 = arith.addf %222, %228 : vector<16x8x4xf32>
    %230 = vector.extract_strided_slice %193 {offsets = [1, 0, 0], sizes = [16, 8, 4], strides = [1, 1, 1]} : vector<18x8x4xf32> to vector<16x8x4xf32>
    %231 = vector.extract_strided_slice %9 {offsets = [1, 2, 0], sizes = [1, 1, 4], strides = [1, 1, 1]} : vector<3x3x4xf32> to vector<1x1x4xf32>
    %232 = vector.shape_cast %231 : vector<1x1x4xf32> to vector<4xf32>
    %233 = vector.shape_cast %232 : vector<4xf32> to vector<1x1x4xf32>
    %234 = vector.broadcast %233 : vector<1x1x4xf32> to vector<16x8x4xf32>
    %235 = arith.mulf %230, %234 : vector<16x8x4xf32>
    %236 = arith.addf %229, %235 : vector<16x8x4xf32>
    %237 = vector.extract_strided_slice %189 {offsets = [2, 0, 0], sizes = [16, 8, 4], strides = [1, 1, 1]} : vector<18x8x4xf32> to vector<16x8x4xf32>
    %238 = vector.extract_strided_slice %9 {offsets = [2, 0, 0], sizes = [1, 1, 4], strides = [1, 1, 1]} : vector<3x3x4xf32> to vector<1x1x4xf32>
    %239 = vector.shape_cast %238 : vector<1x1x4xf32> to vector<4xf32>
    %240 = vector.shape_cast %239 : vector<4xf32> to vector<1x1x4xf32>
    %241 = vector.broadcast %240 : vector<1x1x4xf32> to vector<16x8x4xf32>
    %242 = arith.mulf %237, %241 : vector<16x8x4xf32>
    %243 = arith.addf %236, %242 : vector<16x8x4xf32>
    %244 = vector.extract_strided_slice %183 {offsets = [2, 0, 0], sizes = [16, 8, 4], strides = [1, 1, 1]} : vector<18x8x4xf32> to vector<16x8x4xf32>
    %245 = vector.extract_strided_slice %9 {offsets = [2, 1, 0], sizes = [1, 1, 4], strides = [1, 1, 1]} : vector<3x3x4xf32> to vector<1x1x4xf32>
    %246 = vector.shape_cast %245 : vector<1x1x4xf32> to vector<4xf32>
    %247 = vector.shape_cast %246 : vector<4xf32> to vector<1x1x4xf32>
    %248 = vector.broadcast %247 : vector<1x1x4xf32> to vector<16x8x4xf32>
    %249 = arith.mulf %244, %248 : vector<16x8x4xf32>
    %250 = arith.addf %243, %249 : vector<16x8x4xf32>
    %251 = vector.extract_strided_slice %193 {offsets = [2, 0, 0], sizes = [16, 8, 4], strides = [1, 1, 1]} : vector<18x8x4xf32> to vector<16x8x4xf32>
    %252 = vector.extract_strided_slice %9 {offsets = [2, 2, 0], sizes = [1, 1, 4], strides = [1, 1, 1]} : vector<3x3x4xf32> to vector<1x1x4xf32>
    %253 = vector.shape_cast %252 : vector<1x1x4xf32> to vector<4xf32>
    %254 = vector.shape_cast %253 : vector<4xf32> to vector<1x1x4xf32>
    %255 = vector.broadcast %254 : vector<1x1x4xf32> to vector<16x8x4xf32>
    %256 = arith.mulf %251, %255 : vector<16x8x4xf32>
    %257 = arith.addf %250, %256 : vector<16x8x4xf32>
    %258 = vector.shape_cast %17 : vector<4xf32> to vector<1x1x4xf32>
    %259 = vector.broadcast %258 : vector<1x1x4xf32> to vector<16x8x4xf32>
    %260 = arith.addf %257, %259 : vector<16x8x4xf32>
    %261 = vector.extract_strided_slice %183 {offsets = [1, 0, 0], sizes = [16, 8, 4], strides = [1, 1, 1]} : vector<18x8x4xf32> to vector<16x8x4xf32>
    %262 = vector.shape_cast %19 : vector<4xf32> to vector<1x1x4xf32>
    %263 = vector.broadcast %262 : vector<1x1x4xf32> to vector<16x8x4xf32>
    %264 = arith.mulf %69, %263 : vector<16x8x4xf32>
    %265 = vector.shape_cast %21 : vector<4xf32> to vector<1x1x4xf32>
    %266 = vector.broadcast %265 : vector<1x1x4xf32> to vector<16x8x4xf32>
    %267 = arith.addf %264, %266 : vector<16x8x4xf32>
    %268 = vector.extract_strided_slice %261 {offsets = [0, 0, 0], sizes = [16, 8, 2], strides = [1, 1, 1]} : vector<16x8x4xf32> to vector<16x8x2xf32>
    %cst_62 = arith.constant 5.000000e-01 : f32
    %269 = vector.broadcast %cst_62 : f32 to vector<16x8x2xf32>
    %270 = arith.mulf %269, %268 : vector<16x8x2xf32>
    %cst_63 = arith.constant 4.471500e-02 : f32
    %271 = vector.broadcast %cst_63 : f32 to vector<16x8x2xf32>
    %272 = arith.mulf %271, %268 : vector<16x8x2xf32>
    %273 = arith.mulf %272, %268 : vector<16x8x2xf32>
    %274 = arith.mulf %273, %268 : vector<16x8x2xf32>
    %275 = arith.addf %268, %274 : vector<16x8x2xf32>
    %cst_64 = arith.constant 0.797884583 : f32
    %276 = vector.broadcast %cst_64 : f32 to vector<16x8x2xf32>
    %277 = arith.mulf %276, %275 : vector<16x8x2xf32>
    %278 = math.tanh %277 : vector<16x8x2xf32>
    %cst_65 = arith.constant 1.000000e+00 : f32
    %279 = vector.broadcast %cst_65 : f32 to vector<16x8x2xf32>
    %280 = arith.addf %279, %278 : vector<16x8x2xf32>
    %281 = arith.mulf %270, %280 : vector<16x8x2xf32>
    %282 = vector.extract_strided_slice %69 {offsets = [0, 0, 0], sizes = [16, 8, 2], strides = [1, 1, 1]} : vector<16x8x4xf32> to vector<16x8x2xf32>
    %283 = arith.addf %281, %282 : vector<16x8x2xf32>
    %284 = vector.extract_strided_slice %260 {offsets = [0, 0, 0], sizes = [16, 8, 2], strides = [1, 1, 1]} : vector<16x8x4xf32> to vector<16x8x2xf32>
    %cst_66 = arith.constant 5.000000e-01 : f32
    %285 = vector.broadcast %cst_66 : f32 to vector<16x8x2xf32>
    %286 = arith.mulf %285, %284 : vector<16x8x2xf32>
    %cst_67 = arith.constant 4.471500e-02 : f32
    %287 = vector.broadcast %cst_67 : f32 to vector<16x8x2xf32>
    %288 = arith.mulf %287, %284 : vector<16x8x2xf32>
    %289 = arith.mulf %288, %284 : vector<16x8x2xf32>
    %290 = arith.mulf %289, %284 : vector<16x8x2xf32>
    %291 = arith.addf %284, %290 : vector<16x8x2xf32>
    %cst_68 = arith.constant 0.797884583 : f32
    %292 = vector.broadcast %cst_68 : f32 to vector<16x8x2xf32>
    %293 = arith.mulf %292, %291 : vector<16x8x2xf32>
    %294 = math.tanh %293 : vector<16x8x2xf32>
    %cst_69 = arith.constant 1.000000e+00 : f32
    %295 = vector.broadcast %cst_69 : f32 to vector<16x8x2xf32>
    %296 = arith.addf %295, %294 : vector<16x8x2xf32>
    %297 = arith.mulf %286, %296 : vector<16x8x2xf32>
    %298 = vector.extract_strided_slice %267 {offsets = [0, 0, 0], sizes = [16, 8, 2], strides = [1, 1, 1]} : vector<16x8x4xf32> to vector<16x8x2xf32>
    %299 = arith.addf %297, %298 : vector<16x8x2xf32>
    %300 = vector.extract_strided_slice %261 {offsets = [0, 0, 2], sizes = [16, 8, 2], strides = [1, 1, 1]} : vector<16x8x4xf32> to vector<16x8x2xf32>
    %cst_70 = arith.constant 5.000000e-01 : f32
    %301 = vector.broadcast %cst_70 : f32 to vector<16x8x2xf32>
    %302 = arith.mulf %301, %300 : vector<16x8x2xf32>
    %cst_71 = arith.constant 4.471500e-02 : f32
    %303 = vector.broadcast %cst_71 : f32 to vector<16x8x2xf32>
    %304 = arith.mulf %303, %300 : vector<16x8x2xf32>
    %305 = arith.mulf %304, %300 : vector<16x8x2xf32>
    %306 = arith.mulf %305, %300 : vector<16x8x2xf32>
    %307 = arith.addf %300, %306 : vector<16x8x2xf32>
    %cst_72 = arith.constant 0.797884583 : f32
    %308 = vector.broadcast %cst_72 : f32 to vector<16x8x2xf32>
    %309 = arith.mulf %308, %307 : vector<16x8x2xf32>
    %310 = math.tanh %309 : vector<16x8x2xf32>
    %cst_73 = arith.constant 1.000000e+00 : f32
    %311 = vector.broadcast %cst_73 : f32 to vector<16x8x2xf32>
    %312 = arith.addf %311, %310 : vector<16x8x2xf32>
    %313 = arith.mulf %302, %312 : vector<16x8x2xf32>
    %314 = vector.extract_strided_slice %69 {offsets = [0, 0, 2], sizes = [16, 8, 2], strides = [1, 1, 1]} : vector<16x8x4xf32> to vector<16x8x2xf32>
    %315 = arith.addf %313, %314 : vector<16x8x2xf32>
    %316 = vector.extract_strided_slice %260 {offsets = [0, 0, 2], sizes = [16, 8, 2], strides = [1, 1, 1]} : vector<16x8x4xf32> to vector<16x8x2xf32>
    %cst_74 = arith.constant 5.000000e-01 : f32
    %317 = vector.broadcast %cst_74 : f32 to vector<16x8x2xf32>
    %318 = arith.mulf %317, %316 : vector<16x8x2xf32>
    %cst_75 = arith.constant 4.471500e-02 : f32
    %319 = vector.broadcast %cst_75 : f32 to vector<16x8x2xf32>
    %320 = arith.mulf %319, %316 : vector<16x8x2xf32>
    %321 = arith.mulf %320, %316 : vector<16x8x2xf32>
    %322 = arith.mulf %321, %316 : vector<16x8x2xf32>
    %323 = arith.addf %316, %322 : vector<16x8x2xf32>
    %cst_76 = arith.constant 0.797884583 : f32
    %324 = vector.broadcast %cst_76 : f32 to vector<16x8x2xf32>
    %325 = arith.mulf %324, %323 : vector<16x8x2xf32>
    %326 = math.tanh %325 : vector<16x8x2xf32>
    %cst_77 = arith.constant 1.000000e+00 : f32
    %327 = vector.broadcast %cst_77 : f32 to vector<16x8x2xf32>
    %328 = arith.addf %327, %326 : vector<16x8x2xf32>
    %329 = arith.mulf %318, %328 : vector<16x8x2xf32>
    %330 = vector.extract_strided_slice %267 {offsets = [0, 0, 2], sizes = [16, 8, 2], strides = [1, 1, 1]} : vector<16x8x4xf32> to vector<16x8x2xf32>
    %331 = arith.addf %329, %330 : vector<16x8x2xf32>
    %332 = tpu.concatenate %283, %299, %315, %331 in 2 : vector<16x8x2xf32>, vector<16x8x2xf32>, vector<16x8x2xf32>, vector<16x8x2xf32> -> vector<16x8x8xf32>
    %c0_78 = arith.constant 0 : index
    %c0_79 = arith.constant 0 : index
    %c0_80 = arith.constant 0 : index
    %c0_81 = arith.constant 0 : index
    %333 = vector.load %arg11[%c0_78, %c0_79, %c0_80, %c0_81] : memref<1x16x8x8xf32, #tpu.memory_space<vmem>>, vector<1x16x8x8xf32>
    %334 = vector.shape_cast %333 : vector<1x16x8x8xf32> to vector<16x8x8xf32>
    %335 = vector.shape_cast %332 : vector<16x8x8xf32> to vector<1x16x8x8xf32>
    tpu.vector_store %arg11[%c0_78, %c0_79, %c0_80, %c0_81], %335 {strides = array<i32>} : memref<1x16x8x8xf32, #tpu.memory_space<vmem>>, vector<1x16x8x8xf32>,
    return
  }
  func.func @transform_0(%arg0: i32, %arg1: i32) -> (i32, i32, i32, i32) {
    %c0_i32 = arith.constant 0 : i32
    %c0_i32_0 = arith.constant 0 : i32
    %c0_i32_1 = arith.constant 0 : i32
    return %arg0, %arg1, %c0_i32, %c0_i32_0 : i32, i32, i32, i32
  }
  func.func @transform_1(%arg0: i32, %arg1: i32) -> (i32, i32, i32, i32) {
    %c8_i32 = arith.constant 8 : i32
    %0 = arith.muli %arg1, %c8_i32 : i32
    %c1_i32 = arith.constant 1 : i32
    %1 = arith.subi %0, %c1_i32 : i32
    %c0_i32 = arith.constant 0 : i32
    %2 = arith.maxsi %1, %c0_i32 : i32
    %c0_i32_0 = arith.constant 0 : i32
    %c0_i32_1 = arith.constant 0 : i32
    %c0_i32_2 = arith.constant 0 : i32
    return %arg0, %2, %c0_i32_0, %c0_i32_1 : i32, i32, i32, i32
  }
  func.func @transform_2(%arg0: i32, %arg1: i32) -> (i32, i32, i32, i32) {
    %c8_i32 = arith.constant 8 : i32
    %0 = arith.muli %arg1, %c8_i32 : i32
    %c8_i32_0 = arith.constant 8 : i32
    %1 = arith.addi %0, %c8_i32_0 : i32
    %c7_i32 = arith.constant 7 : i32
    %2 = arith.minsi %1, %c7_i32 : i32
    %c0_i32 = arith.constant 0 : i32
    %c0_i32_1 = arith.constant 0 : i32
    %c0_i32_2 = arith.constant 0 : i32
    return %arg0, %2, %c0_i32, %c0_i32_1 : i32, i32, i32, i32
  }
  func.func @transform_3(%arg0: i32, %arg1: i32) -> (i32, i32, i32, i32) {
    %c0_i32 = arith.constant 0 : i32
    %c0_i32_0 = arith.constant 0 : i32
    %c0_i32_1 = arith.constant 0 : i32
    return %arg0, %arg1, %c0_i32, %c0_i32_0 : i32, i32, i32, i32
  }
  func.func @transform_4(%arg0: i32, %arg1: i32) -> (i32, i32, i32, i32) {
    %c8_i32 = arith.constant 8 : i32
    %0 = arith.muli %arg1, %c8_i32 : i32
    %c1_i32 = arith.constant 1 : i32
    %1 = arith.subi %0, %c1_i32 : i32
    %c0_i32 = arith.constant 0 : i32
    %2 = arith.maxsi %1, %c0_i32 : i32
    %c0_i32_0 = arith.constant 0 : i32
    %c0_i32_1 = arith.constant 0 : i32
    %c0_i32_2 = arith.constant 0 : i32
    return %arg0, %2, %c0_i32_0, %c0_i32_1 : i32, i32, i32, i32
  }
  func.func @transform_5(%arg0: i32, %arg1: i32) -> (i32, i32, i32, i32) {
    %c8_i32 = arith.constant 8 : i32
    %0 = arith.muli %arg1, %c8_i32 : i32
    %c8_i32_0 = arith.constant 8 : i32
    %1 = arith.addi %0, %c8_i32_0 : i32
    %c7_i32 = arith.constant 7 : i32
    %2 = arith.minsi %1, %c7_i32 : i32
    %c0_i32 = arith.constant 0 : i32
    %c0_i32_1 = arith.constant 0 : i32
    %c0_i32_2 = arith.constant 0 : i32
    return %arg0, %2, %c0_i32, %c0_i32_1 : i32, i32, i32, i32
  }
  func.func @transform_6(%arg0: i32, %arg1: i32) -> (i32, i32, i32) {
    %c0_i32 = arith.constant 0 : i32
    %c0_i32_0 = arith.constant 0 : i32
    %c0_i32_1 = arith.constant 0 : i32
    %c0_i32_2 = arith.constant 0 : i32
    return %c0_i32, %c0_i32_0, %c0_i32_1 : i32, i32, i32
  }
  func.func @transform_7(%arg0: i32, %arg1: i32) -> (i32, i32, i32, i32) {
    %c0_i32 = arith.constant 0 : i32
    %c0_i32_0 = arith.constant 0 : i32
    %c0_i32_1 = arith.constant 0 : i32
    %c0_i32_2 = arith.constant 0 : i32
    %c0_i32_3 = arith.constant 0 : i32
    return %c0_i32, %c0_i32_0, %c0_i32_1, %c0_i32_2 : i32, i32, i32, i32
  }
  func.func @transform_8(%arg0: i32, %arg1: i32) -> (i32, i32) {
    %c0_i32 = arith.constant 0 : i32
    %c0_i32_0 = arith.constant 0 : i32
    %c0_i32_1 = arith.constant 0 : i32
    return %c0_i32, %c0_i32_0 : i32, i32
  }
  func.func @transform_9(%arg0: i32, %arg1: i32) -> (i32, i32, i32, i32) {
    %c0_i32 = arith.constant 0 : i32
    %c0_i32_0 = arith.constant 0 : i32
    %c0_i32_1 = arith.constant 0 : i32
    return %arg0, %arg1, %c0_i32, %c0_i32_0 : i32, i32, i32, i32
  }
}

</mosaic_0001>

<llo_original>
// kernel: finet_ghost_up_block.1
$region0: #{finet_ghost_up_block.1}
  #allocation0 [shape = 'u32[]', space=smem, size = 0x4, offset = 0x4, fixed_abs, tag = 'smem constant byte address 0x4 - core index']
  #allocation1 [shape = 'u32[144,128]{1,0:T(1,128)}', space=vmem, size = 0x12000, scoped, tag = 'internal scratch']
  %s0 = inlined_call_operand.hbm [shape: f32[2,8,8,8], index: 0, kind: input, shape index: {}, may-alias: {0,1,2}]
  %s1 = inlined_call_operand.hbm [shape: f32[2,8,8,8], index: 1, kind: input, shape index: {}, may-alias: {0,1,2}]
  %s2 = inlined_call_operand.hbm [shape: f32[2,8,8,8], index: 2, kind: input, shape index: {}, may-alias: {0,1,2}]
  %s3 = inlined_call_operand.hbm [shape: f32[2,16,8,8], index: 3, kind: input, shape index: {}, may-alias: {3,4,5}]
  %s4 = inlined_call_operand.hbm [shape: f32[2,16,8,8], index: 4, kind: input, shape index: {}, may-alias: {3,4,5}]
  %s5 = inlined_call_operand.hbm [shape: f32[2,16,8,8], index: 5, kind: input, shape index: {}, may-alias: {3,4,5}]
  %s6 = inlined_call_operand.hbm [shape: f32[3,8,16], index: 6, kind: input, shape index: {}]
  %s7 = inlined_call_operand.hbm [shape: f32[2,3,3,4], index: 7, kind: input, shape index: {}]
  %s8 = inlined_call_operand.hbm [shape: f32[6,8], index: 8, kind: input, shape index: {}]
  %s9 = inlined_call_operand.hbm [shape: f32[2,16,8,8], index: 9, kind: output, shape index: {}]
  %s10 = sld [smem:[#allocation0]]
  $region105: #{finet_ghost_up_block.1} parent=0
    _
  %s12 = ssub.s32 1, %s10
  %s13 = scalar_select 0, %s12, %s10
  $region1: #{finet_ghost_up_block.1} parent=0
    #allocation2 [shape = 'u8[65536]{0}', space=vmem, size = 0x10000, scoped, tag = 'input window, operand 0']
    #allocation3 [shape = 's32[2]{0}', space=sflag, size = 0x8, scoped, tag = 'scoped memory for finet_ghost_up_block.1']
    #allocation4 [shape = 's32[2]{0}', space=sflag, size = 0x8, scoped, tag = 'scoped memory for finet_ghost_up_block.1']
    #allocation5 [shape = 'u8[8192]{0}', space=vmem, size = 0x2000, scoped, tag = 'input window, operand 1']
    #allocation6 [shape = 's32[2]{0}', space=sflag, size = 0x8, scoped, tag = 'scoped memory for finet_ghost_up_block.1']
    #allocation7 [shape = 'u8[8192]{0}', space=vmem, size = 0x2000, scoped, tag = 'input window, operand 2']
    #allocation8 [shape = 'u8[131072]{0}', space=vmem, size = 0x20000, scoped, tag = 'input window, operand 3']
    #allocation9 [shape = 's32[2]{0}', space=sflag, size = 0x8, scoped, tag = 'scoped memory for finet_ghost_up_block.1']
    #allocation10 [shape = 'u8[16384]{0}', space=vmem, size = 0x4000, scoped, tag = 'input window, operand 4']
    #allocation11 [shape = 'u8[16384]{0}', space=vmem, size = 0x4000, scoped, tag = 'input window, operand 5']
    #allocation12 [shape = 's32[2]{0}', space=sflag, size = 0x8, scoped, tag = 'scoped memory for finet_ghost_up_block.1']
    #allocation13 [shape = 'u8[12288]{0}', space=vmem, size = 0x3000, scoped, tag = 'input window, operand 6, single buffered']
    #allocation14 [shape = 'u8[12288]{0}', space=vmem, size = 0x3000, scoped, tag = 'input window, operand 7, single buffered']
    #allocation15 [shape = 's32[1]{0}', space=sflag, size = 0x4, scoped, tag = 'scoped memory for finet_ghost_up_block.1']
    #allocation16 [shape = 'u8[4096]{0}', space=vmem, size = 0x1000, scoped, tag = 'input window, operand 8, single buffered']
    #allocation17 [shape = 'u8[131072]{0}', space=vmem, size = 0x20000, scoped, tag = 'output window, operand 0']
    %14 = vsyncpa [#allocation3], 0
    %s15 = scalar_lea.sflag [#allocation3], 1
    %16 = vsyncpa %s15, 0
    %17 = vsyncpa [#allocation6], 0
    %s18 = scalar_lea.sflag [#allocation6], 1
    %19 = vsyncpa %s18, 0
    %20 = vsyncpa [#allocation9], 0
    %s21 = scalar_lea.sflag [#allocation9], 1
    %22 = vsyncpa %s21, 0
    %23 = vsyncpa [#allocation12], 0
    %s24 = scalar_lea.sflag [#allocation12], 1
    %25 = vsyncpa %s24, 0
    %26 = vsyncpa [#allocation15], 0
    %27 = vsyncpa [#allocation4], 0
    %s28 = scalar_lea.sflag [#allocation4], 1
    %29 = vsyncpa %s28, 0
    loop: start=0, step=1, limit=4
    $region2: #{finet_ghost_up_block.1} parent=1 // loop_pre_header
      _
    $region3: #{finet_ghost_up_block.1} parent=1 // loop_header
      %s31 = sphi 0, %s35
      %p32 = scmp.ge.s32.totalorder %s31, 4
      %s38 = sphi 0, %s50
      %s39 = sphi 0, %s46
      %s40 = sphi 0, %s38
      %s41 = sphi 0, %s39
      %s42 = sphi 0, %s40
      %s43 = sphi 0, %s41
      %s55 = sphi 0, %s57
      %s58 = sphi 0, %s55
      %s59 = sphi 0, %s58
      %s75 = sphi 0, %s59
      %s91 = sphi 0, %s93
      %s94 = sphi 0, %s91
      %s95 = sphi 0, %s94
      %s111 = sphi 0, %s95
      %s127 = sphi 0, %s129
      %s130 = sphi 0, %s127
      %s131 = sphi 0, %s130
      %s147 = sphi 0, %s131
      %s155 = sphi 0, %s157
      %s158 = sphi 0, %s155
      %s159 = sphi 0, %s158
      %s175 = sphi 0, %s159
      %s191 = sphi 0, %s193
      %s194 = sphi 0, %s191
      %s195 = sphi 0, %s194
      %s211 = sphi 0, %s195
      %s227 = sphi 0, %s229
      %s230 = sphi 0, %s227
      %s231 = sphi 0, %s230
      %s247 = sphi 0, %s231
      %s251 = sphi 0, %s251
      %s253 = sphi 0, %s251
      %s254 = sphi 0, %s253
      %s268 = sphi 0, %s254
      %s272 = sphi 0, %s272
      %s274 = sphi 0, %s272
      %s275 = sphi 0, %s274
      %s289 = sphi 0, %s275
      %s293 = sphi 0, %s293
      %s295 = sphi 0, %s293
      %s296 = sphi 0, %s295
      %s310 = sphi 0, %s296
      %s318 = sphi 0, %s320
      %s321 = sphi 0, %s318
      %s322 = sphi 0, %s321
      %s338 = sphi 0, %s322
    $region4: #{finet_ghost_up_block.1} parent=1 // loop_header_branch
      %34 = sbr.rel (%p32) target = $region8
    $region5: #{finet_ghost_up_block.1} parent=1 // loop_body
      %s36 = ssub.s32 %s31, 1
      %s37 = ssub.s32 %s31, 2
      %s44 = sadd.s32 1, %s39
      %p45 = scmp.ge.s32.totalorder %s44, 1
      %s46 = scalar_select %p45, 0, %s44
      %s47 = sadd.s32 1, %s38
      %s48 = scalar_select %p45, %s47, %s38
      %p49 = scmp.ge.s32.totalorder %s48, 2
      %s50 = scalar_select %p49, 0, %s48
      %s51 = ssub.s32 %s38, %s50
      %s52 = ssub.s32 %s39, %s46
      %s53 = sor.u32 %s51, %s52
      %p54 = scmp.eq.s32.totalorder %s53, 0
      %s56 = sadd.s32 %s55, 1
      %s57 = scalar_select %p54, %s55, %s56
      %p60 = pneg %p54
      %p61 = scmp.eq.s32.totalorder %s31, 1
      %p62 = por %p60, %p61
      %p63 = scmp.ne.s32.totalorder %s55, %s58
      %p64 = scmp.eq.s32.totalorder %s31, 0
      %p65 = por %p63, %p64
      %p66 = scmp.ne.s32.totalorder %s55, %s58
      %p67 = scmp.eq.s32.totalorder %s36, 1
      %p68 = por %p66, %p67
      %p69 = scmp.ne.s32.totalorder %s58, %s59
      %p70 = scmp.eq.s32.totalorder %s36, 0
      %p71 = por %p69, %p70
      %p72 = scmp.ne.s32.totalorder %s58, %s59
      %p73 = scmp.eq.s32.totalorder %s37, 1
      %p74 = por %p72, %p73
      %p76 = scmp.ne.s32.totalorder %s59, %s75
      %p77 = scmp.eq.s32.totalorder %s37, 0
      %p78 = por %p76, %p77
      %s79 = smul.u32 %s39, 8
      %s80 = ssub.s32 %s79, 1
      %p81 = scmp.gt.s32.totalorder %s80, 0
      %s82 = scalar_select %p81, %s80, 0
      %s83 = smul.u32 %s46, 8
      %s84 = ssub.s32 %s83, 1
      %p85 = scmp.gt.s32.totalorder %s84, 0
      %s86 = scalar_select %p85, %s84, 0
      %s87 = ssub.s32 %s38, %s50
      %s88 = ssub.s32 %s82, %s86
      %s89 = sor.u32 %s87, %s88
      %p90 = scmp.eq.s32.totalorder %s89, 0
      %s92 = sadd.s32 %s91, 1
      %s93 = scalar_select %p90, %s91, %s92
      %p96 = pneg %p90
      %p97 = scmp.eq.s32.totalorder %s31, 1
      %p98 = por %p96, %p97
      %p99 = scmp.ne.s32.totalorder %s91, %s94
      %p100 = scmp.eq.s32.totalorder %s31, 0
      %p101 = por %p99, %p100
      %p102 = scmp.ne.s32.totalorder %s91, %s94
      %p103 = scmp.eq.s32.totalorder %s36, 1
      %p104 = por %p102, %p103
      %p105 = scmp.ne.s32.totalorder %s94, %s95
      %p106 = scmp.eq.s32.totalorder %s36, 0
      %p107 = por %p105, %p106
      %p108 = scmp.ne.s32.totalorder %s94, %s95
      %p109 = scmp.eq.s32.totalorder %s37, 1
      %p110 = por %p108, %p109
      %p112 = scmp.ne.s32.totalorder %s95, %s111
      %p113 = scmp.eq.s32.totalorder %s37, 0
      %p114 = por %p112, %p113
      %s115 = smul.u32 %s39, 8
      %s116 = sadd.s32 %s115, 8
      %p117 = scmp.lt.s32.totalorder %s116, 7
      %s118 = scalar_select %p117, %s116, 7
      %s119 = smul.u32 %s46, 8
      %s120 = sadd.s32 %s119, 8
      %p121 = scmp.lt.s32.totalorder %s120, 7
      %s122 = scalar_select %p121, %s120, 7
      %s123 = ssub.s32 %s38, %s50
      %s124 = ssub.s32 %s118, %s122
      %s125 = sor.u32 %s123, %s124
      %p126 = scmp.eq.s32.totalorder %s125, 0
      %s128 = sadd.s32 %s127, 1
      %s129 = scalar_select %p126, %s127, %s128
      %p132 = pneg %p126
      %p133 = scmp.eq.s32.totalorder %s31, 1
      %p134 = por %p132, %p133
      %p135 = scmp.ne.s32.totalorder %s127, %s130
      %p136 = scmp.eq.s32.totalorder %s31, 0
      %p137 = por %p135, %p136
      %p138 = scmp.ne.s32.totalorder %s127, %s130
      %p139 = scmp.eq.s32.totalorder %s36, 1
      %p140 = por %p138, %p139
      %p141 = scmp.ne.s32.totalorder %s130, %s131
      %p142 = scmp.eq.s32.totalorder %s36, 0
      %p143 = por %p141, %p142
      %p144 = scmp.ne.s32.totalorder %s130, %s131
      %p145 = scmp.eq.s32.totalorder %s37, 1
      %p146 = por %p144, %p145
      %p148 = scmp.ne.s32.totalorder %s131, %s147
      %p149 = scmp.eq.s32.totalorder %s37, 0
      %p150 = por %p148, %p149
      %s151 = ssub.s32 %s38, %s50
      %s152 = ssub.s32 %s39, %s46
      %s153 = sor.u32 %s151, %s152
      %p154 = scmp.eq.s32.totalorder %s153, 0
      %s156 = sadd.s32 %s155, 1
      %s157 = scalar_select %p154, %s155, %s156
      %p160 = pneg %p154
      %p161 = scmp.eq.s32.totalorder %s31, 1
      %p162 = por %p160, %p161
      %p163 = scmp.ne.s32.totalorder %s155, %s158
      %p164 = scmp.eq.s32.totalorder %s31, 0
      %p165 = por %p163, %p164
      %p166 = scmp.ne.s32.totalorder %s155, %s158
      %p167 = scmp.eq.s32.totalorder %s36, 1
      %p168 = por %p166, %p167
      %p169 = scmp.ne.s32.totalorder %s158, %s159
      %p170 = scmp.eq.s32.totalorder %s36, 0
      %p171 = por %p169, %p170
      %p172 = scmp.ne.s32.totalorder %s158, %s159
      %p173 = scmp.eq.s32.totalorder %s37, 1
      %p174 = por %p172, %p173
      %p176 = scmp.ne.s32.totalorder %s159, %s175
      %p177 = scmp.eq.s32.totalorder %s37, 0
      %p178 = por %p176, %p177
      %s179 = smul.u32 %s39, 8
      %s180 = ssub.s32 %s179, 1
      %p181 = scmp.gt.s32.totalorder %s180, 0
      %s182 = scalar_select %p181, %s180, 0
      %s183 = smul.u32 %s46, 8
      %s184 = ssub.s32 %s183, 1
      %p185 = scmp.gt.s32.totalorder %s184, 0
      %s186 = scalar_select %p185, %s184, 0
      %s187 = ssub.s32 %s38, %s50
      %s188 = ssub.s32 %s182, %s186
      %s189 = sor.u32 %s187, %s188
      %p190 = scmp.eq.s32.totalorder %s189, 0
      %s192 = sadd.s32 %s191, 1
      %s193 = scalar_select %p190, %s191, %s192
      %p196 = pneg %p190
      %p197 = scmp.eq.s32.totalorder %s31, 1
      %p198 = por %p196, %p197
      %p199 = scmp.ne.s32.totalorder %s191, %s194
      %p200 = scmp.eq.s32.totalorder %s31, 0
      %p201 = por %p199, %p200
      %p202 = scmp.ne.s32.totalorder %s191, %s194
      %p203 = scmp.eq.s32.totalorder %s36, 1
      %p204 = por %p202, %p203
      %p205 = scmp.ne.s32.totalorder %s194, %s195
      %p206 = scmp.eq.s32.totalorder %s36, 0
      %p207 = por %p205, %p206
      %p208 = scmp.ne.s32.totalorder %s194, %s195
      %p209 = scmp.eq.s32.totalorder %s37, 1
      %p210 = por %p208, %p209
      %p212 = scmp.ne.s32.totalorder %s195, %s211
      %p213 = scmp.eq.s32.totalorder %s37, 0
      %p214 = por %p212, %p213
      %s215 = smul.u32 %s39, 8
      %s216 = sadd.s32 %s215, 8
      %p217 = scmp.lt.s32.totalorder %s216, 7
      %s218 = scalar_select %p217, %s216, 7
      %s219 = smul.u32 %s46, 8
      %s220 = sadd.s32 %s219, 8
      %p221 = scmp.lt.s32.totalorder %s220, 7
      %s222 = scalar_select %p221, %s220, 7
      %s223 = ssub.s32 %s38, %s50
      %s224 = ssub.s32 %s218, %s222
      %s225 = sor.u32 %s223, %s224
      %p226 = scmp.eq.s32.totalorder %s225, 0
      %s228 = sadd.s32 %s227, 1
      %s229 = scalar_select %p226, %s227, %s228
      %p232 = pneg %p226
      %p233 = scmp.eq.s32.totalorder %s31, 1
      %p234 = por %p232, %p233
      %p235 = scmp.ne.s32.totalorder %s227, %s230
      %p236 = scmp.eq.s32.totalorder %s31, 0
      %p237 = por %p235, %p236
      %p238 = scmp.ne.s32.totalorder %s227, %s230
      %p239 = scmp.eq.s32.totalorder %s36, 1
      %p240 = por %p238, %p239
      %p241 = scmp.ne.s32.totalorder %s230, %s231
      %p242 = scmp.eq.s32.totalorder %s36, 0
      %p243 = por %p241, %p242
      %p244 = scmp.ne.s32.totalorder %s230, %s231
      %p245 = scmp.eq.s32.totalorder %s37, 1
      %p246 = por %p244, %p245
      %p248 = scmp.ne.s32.totalorder %s231, %s247
      %p249 = scmp.eq.s32.totalorder %s37, 0
      %p250 = por %p248, %p249
      %s252 = sadd.s32 %s251, 1
      %p255 = scmp.eq.s32.totalorder %s31, 1
      %p256 = scmp.ne.s32.totalorder %s251, %s253
      %p257 = scmp.eq.s32.totalorder %s31, 0
      %p258 = por %p256, %p257
      %p259 = scmp.ne.s32.totalorder %s251, %s253
      %p260 = scmp.eq.s32.totalorder %s36, 1
      %p261 = por %p259, %p260
      %p262 = scmp.ne.s32.totalorder %s253, %s254
      %p263 = scmp.eq.s32.totalorder %s36, 0
      %p264 = por %p262, %p263
      %p265 = scmp.ne.s32.totalorder %s253, %s254
      %p266 = scmp.eq.s32.totalorder %s37, 1
      %p267 = por %p265, %p266
      %p269 = scmp.ne.s32.totalorder %s254, %s268
      %p270 = scmp.eq.s32.totalorder %s37, 0
      %p271 = por %p269, %p270
      %s273 = sadd.s32 %s272, 1
      %p276 = scmp.eq.s32.totalorder %s31, 1
      %p277 = scmp.ne.s32.totalorder %s272, %s274
      %p278 = scmp.eq.s32.totalorder %s31, 0
      %p279 = por %p277, %p278
      %p280 = scmp.ne.s32.totalorder %s272, %s274
      %p281 = scmp.eq.s32.totalorder %s36, 1
      %p282 = por %p280, %p281
      %p283 = scmp.ne.s32.totalorder %s274, %s275
      %p284 = scmp.eq.s32.totalorder %s36, 0
      %p285 = por %p283, %p284
      %p286 = scmp.ne.s32.totalorder %s274, %s275
      %p287 = scmp.eq.s32.totalorder %s37, 1
      %p288 = por %p286, %p287
      %p290 = scmp.ne.s32.totalorder %s275, %s289
      %p291 = scmp.eq.s32.totalorder %s37, 0
      %p292 = por %p290, %p291
      %s294 = sadd.s32 %s293, 1
      %p297 = scmp.eq.s32.totalorder %s31, 1
      %p298 = scmp.ne.s32.totalorder %s293, %s295
      %p299 = scmp.eq.s32.totalorder %s31, 0
      %p300 = por %p298, %p299
      %p301 = scmp.ne.s32.totalorder %s293, %s295
      %p302 = scmp.eq.s32.totalorder %s36, 1
      %p303 = por %p301, %p302
      %p304 = scmp.ne.s32.totalorder %s295, %s296
      %p305 = scmp.eq.s32.totalorder %s36, 0
      %p306 = por %p304, %p305
      %p307 = scmp.ne.s32.totalorder %s295, %s296
      %p308 = scmp.eq.s32.totalorder %s37, 1
      %p309 = por %p307, %p308
      %p311 = scmp.ne.s32.totalorder %s296, %s310
      %p312 = scmp.eq.s32.totalorder %s37, 0
      %p313 = por %p311, %p312
      %s314 = ssub.s32 %s38, %s50
      %s315 = ssub.s32 %s39, %s46
      %s316 = sor.u32 %s314, %s315
      %p317 = scmp.eq.s32.totalorder %s316, 0
      %s319 = sadd.s32 %s318, 1
      %s320 = scalar_select %p317, %s318, %s319
      %p323 = pneg %p317
      %p324 = scmp.eq.s32.totalorder %s31, 1
      %p325 = por %p323, %p324
      %p326 = scmp.ne.s32.totalorder %s318, %s321
      %p327 = scmp.eq.s32.totalorder %s31, 0
      %p328 = por %p326, %p327
      %p329 = scmp.ne.s32.totalorder %s318, %s321
      %p330 = scmp.eq.s32.totalorder %s36, 1
      %p331 = por %p329, %p330
      %p332 = scmp.ne.s32.totalorder %s321, %s322
      %p333 = scmp.eq.s32.totalorder %s36, 0
      %p334 = por %p332, %p333
      %p335 = scmp.ne.s32.totalorder %s321, %s322
      %p336 = scmp.eq.s32.totalorder %s37, 1
      %p337 = por %p335, %p336
      %p339 = scmp.ne.s32.totalorder %s322, %s338
      %p340 = scmp.eq.s32.totalorder %s37, 0
      %p341 = por %p339, %p340
      %p342 = scmp.le.s32.totalorder 1, %s31
      %p343 = scmp.lt.s32.totalorder %s31, 3
      %p344 = pnand %p342, %p343
      %p345 = pneg %p344
      // Predicated region
      $region9: #{finet_ghost_up_block.1} parent=5 // pred_check
        _
      $region10: #{finet_ghost_up_block.1} parent=5 // pred_check_branch
        %347 = sbr.rel (%p344) target = $region12
      $region11: #{finet_ghost_up_block.1} parent=5 // pred_region
        %s348 = ssub.s32 %s31, 1
        // Predicated region
        $region13: #{finet_ghost_up_block.1} parent=11 // pred_check
          %p349 = pneg %p264
        $region14: #{finet_ghost_up_block.1} parent=11 // pred_check_branch
          %351 = sbr.rel (%p349) target = $region16
        $region15: #{finet_ghost_up_block.1} parent=11 // pred_region
          %s353 = ssub.s32 384, 384
          %354 = vsyncadd [#allocation12], %s353
          %s355 = sshll.u32 [#allocation13], 4
          %s356 = int_to_ptr.vmem [resolvable:$true] %s355
          %361 = dma.hbm_to_vmem [thread:$0]  %s6, 384, %s356, [#allocation12], 128, 128, 8
        $region16: #{finet_ghost_up_block.1} parent=11 // pred_fallthru
          _
        // Predicated region
        $region17: #{finet_ghost_up_block.1} parent=11 // pred_check
          %p362 = pneg %p285
        $region18: #{finet_ghost_up_block.1} parent=11 // pred_check_branch
          %364 = sbr.rel (%p362) target = $region20
        $region19: #{finet_ghost_up_block.1} parent=11 // pred_region
          %s366 = ssub.s32 384, 384
          %367 = vsyncadd [#allocation15], %s366
          %s368 = sshll.u32 [#allocation14], 4
          %s369 = int_to_ptr.vmem [resolvable:$true] %s368
          %374 = dma.hbm_to_vmem [thread:$0]  %s7, 384, %s369, [#allocation15], 64, 64, 4
        $region20: #{finet_ghost_up_block.1} parent=11 // pred_fallthru
          _
        // Predicated region
        $region21: #{finet_ghost_up_block.1} parent=11 // pred_check
          %p375 = pneg %p306
        $region22: #{finet_ghost_up_block.1} parent=11 // pred_check_branch
          %377 = sbr.rel (%p375) target = $region24
        $region23: #{finet_ghost_up_block.1} parent=11 // pred_region
          %s379 = ssub.s32 128, 128
          %380 = vsyncadd [#allocation15], %s379
          %s382 = sshll.u32 [#allocation16], 4
          %s383 = int_to_ptr.vmem [resolvable:$true] %s382
          %385 = dma.hbm_to_vmem [thread:$0]  %s8, 128, %s383, [#allocation15]
        $region24: #{finet_ghost_up_block.1} parent=11 // pred_fallthru
          _
      $region12: #{finet_ghost_up_block.1} parent=5 // pred_fallthru
        _
      %p386 = scmp.lt.s32.totalorder %s31, 2
      // Predicated region
      $region25: #{finet_ghost_up_block.1} parent=5 // pred_check
        %p387 = pneg %p386
      $region26: #{finet_ghost_up_block.1} parent=5 // pred_check_branch
        %389 = sbr.rel (%p387) target = $region28
      $region27: #{finet_ghost_up_block.1} parent=5 // pred_region
        // Predicated region
        $region29: #{finet_ghost_up_block.1} parent=27 // pred_check
          %p390 = pneg %p65
        $region30: #{finet_ghost_up_block.1} parent=27 // pred_check_branch
          %392 = sbr.rel (%p390) target = $region32
        $region31: #{finet_ghost_up_block.1} parent=27 // pred_region
          %s393 = sand.u32 %s55, 1
          %s394 = scalar_lea.sflag [#allocation3], %s393
          %s395 = sand.u32 %s55, 1
          %s396 = smul.addr %s395, 64
          %s397 = scalar_lea.vmem [#allocation2], %s396
          %s398 = smul.u32 8, %s39
          %s400 = ssub.s32 1024, 1024
          %401 = vsyncadd %s394, %s400
          %s402 = smul.addr %s38, 8
          %s403 = sadd.s32 %s398, %s402
          %s404 = smul.addr %s403, 128
          %s405 = scalar_lea.hbm %s0, %s404
          %s406 = sshll.u32 %s397, 4
          %s407 = int_to_ptr.vmem [resolvable:$true] %s406
          %412 = dma.hbm_to_vmem [thread:$0]  %s405, 1024, %s407, %s394, 128, 128, 8
        $region32: #{finet_ghost_up_block.1} parent=27 // pred_fallthru
          _
        // Predicated region
        $region33: #{finet_ghost_up_block.1} parent=27 // pred_check
          %p413 = pneg %p101
        $region34: #{finet_ghost_up_block.1} parent=27 // pred_check_branch
          %415 = sbr.rel (%p413) target = $region36
        $region35: #{finet_ghost_up_block.1} parent=27 // pred_region
          %s416 = sand.u32 %s31, 1
          %s417 = scalar_lea.sflag [#allocation6], %s416
          %s418 = sand.u32 %s91, 1
          %s419 = smul.addr %s418, 8
          %s420 = scalar_lea.vmem [#allocation5], %s419
          %s421 = smul.u32 %s39, 8
          %s422 = ssub.s32 %s421, 1
          %p423 = scmp.gt.s32.totalorder %s422, 0
          %s424 = scalar_select %p423, %s422, 0
          %s426 = ssub.s32 128, 128
          %427 = vsyncadd %s417, %s426
          %s428 = smul.addr %s38, 8
          %s429 = sadd.s32 %s424, %s428
          %s430 = smul.addr %s429, 128
          %s431 = scalar_lea.hbm %s1, %s430
          %s433 = sshll.u32 %s420, 4
          %s434 = int_to_ptr.vmem [resolvable:$true] %s433
          %436 = dma.hbm_to_vmem [thread:$0]  %s431, 128, %s434, %s417
        $region36: #{finet_ghost_up_block.1} parent=27 // pred_fallthru
          _
        // Predicated region
        $region37: #{finet_ghost_up_block.1} parent=27 // pred_check
          %p437 = pneg %p137
        $region38: #{finet_ghost_up_block.1} parent=27 // pred_check_branch
          %439 = sbr.rel (%p437) target = $region40
        $region39: #{finet_ghost_up_block.1} parent=27 // pred_region
          %s440 = sand.u32 %s31, 1
          %s441 = scalar_lea.sflag [#allocation6], %s440
          %s442 = sand.u32 %s127, 1
          %s443 = smul.addr %s442, 8
          %s444 = scalar_lea.vmem [#allocation7], %s443
          %s445 = smul.u32 %s39, 8
          %s446 = sadd.s32 %s445, 8
          %p447 = scmp.lt.s32.totalorder %s446, 7
          %s448 = scalar_select %p447, %s446, 7
          %s450 = ssub.s32 128, 128
          %451 = vsyncadd %s441, %s450
          %s452 = smul.addr %s38, 8
          %s453 = sadd.s32 %s448, %s452
          %s454 = smul.addr %s453, 128
          %s455 = scalar_lea.hbm %s2, %s454
          %s457 = sshll.u32 %s444, 4
          %s458 = int_to_ptr.vmem [resolvable:$true] %s457
          %460 = dma.hbm_to_vmem [thread:$0]  %s455, 128, %s458, %s441
        $region40: #{finet_ghost_up_block.1} parent=27 // pred_fallthru
          _
        // Predicated region
        $region41: #{finet_ghost_up_block.1} parent=27 // pred_check
          %p461 = pneg %p165
        $region42: #{finet_ghost_up_block.1} parent=27 // pred_check_branch
          %463 = sbr.rel (%p461) target = $region44
        $region43: #{finet_ghost_up_block.1} parent=27 // pred_region
          %s464 = sand.u32 %s31, 1
          %s465 = scalar_lea.sflag [#allocation9], %s464
          %s466 = sand.u32 %s155, 1
          %s467 = smul.addr %s466, 128
          %s468 = scalar_lea.vmem [#allocation8], %s467
          %s469 = smul.u32 16, %s39
          %s471 = ssub.s32 2048, 2048
          %472 = vsyncadd %s465, %s471
          %s473 = smul.addr %s38, 16
          %s474 = sadd.s32 %s469, %s473
          %s475 = smul.addr %s474, 128
          %s476 = scalar_lea.hbm %s3, %s475
          %s477 = sshll.u32 %s468, 4
          %s478 = int_to_ptr.vmem [resolvable:$true] %s477
          %483 = dma.hbm_to_vmem [thread:$0]  %s476, 2048, %s478, %s465, 128, 128, 8
        $region44: #{finet_ghost_up_block.1} parent=27 // pred_fallthru
          _
        // Predicated region
        $region45: #{finet_ghost_up_block.1} parent=27 // pred_check
          %p484 = pneg %p201
        $region46: #{finet_ghost_up_block.1} parent=27 // pred_check_branch
          %486 = sbr.rel (%p484) target = $region48
        $region47: #{finet_ghost_up_block.1} parent=27 // pred_region
          %s487 = sand.u32 %s31, 1
          %s488 = scalar_lea.sflag [#allocation9], %s487
          %s489 = sand.u32 %s191, 1
          %s490 = smul.addr %s489, 16
          %s491 = scalar_lea.vmem [#allocation10], %s490
          %s492 = smul.u32 %s39, 8
          %s493 = ssub.s32 %s492, 1
          %p494 = scmp.gt.s32.totalorder %s493, 0
          %s495 = scalar_select %p494, %s493, 0
          %s496 = smul.u32 2, %s495
          %s498 = ssub.s32 256, 256
          %499 = vsyncadd %s488, %s498
          %s500 = smul.addr %s38, 16
          %s501 = sadd.s32 %s496, %s500
          %s502 = smul.addr %s501, 128
          %s503 = scalar_lea.hbm %s4, %s502
          %s504 = sshll.u32 %s491, 4
          %s505 = int_to_ptr.vmem [resolvable:$true] %s504
          %510 = dma.hbm_to_vmem [thread:$0]  %s503, 256, %s505, %s488, 128, 128, 8
        $region48: #{finet_ghost_up_block.1} parent=27 // pred_fallthru
          _
        // Predicated region
        $region49: #{finet_ghost_up_block.1} parent=27 // pred_check
          %p511 = pneg %p237
        $region50: #{finet_ghost_up_block.1} parent=27 // pred_check_branch
          %513 = sbr.rel (%p511) target = $region52
        $region51: #{finet_ghost_up_block.1} parent=27 // pred_region
          %s514 = sand.u32 %s31, 1
          %s515 = scalar_lea.sflag [#allocation12], %s514
          %s516 = sand.u32 %s227, 1
          %s517 = smul.addr %s516, 16
          %s518 = scalar_lea.vmem [#allocation11], %s517
          %s519 = smul.u32 %s39, 8
          %s520 = sadd.s32 %s519, 8
          %p521 = scmp.lt.s32.totalorder %s520, 7
          %s522 = scalar_select %p521, %s520, 7
          %s523 = smul.u32 2, %s522
          %s525 = ssub.s32 256, 256
          %526 = vsyncadd %s515, %s525
          %s527 = smul.addr %s38, 16
          %s528 = sadd.s32 %s523, %s527
          %s529 = smul.addr %s528, 128
          %s530 = scalar_lea.hbm %s5, %s529
          %s531 = sshll.u32 %s518, 4
          %s532 = int_to_ptr.vmem [resolvable:$true] %s531
          %537 = dma.hbm_to_vmem [thread:$0]  %s530, 256, %s532, %s515, 128, 128, 8
        $region52: #{finet_ghost_up_block.1} parent=27 // pred_fallthru
          _
      $region28: #{finet_ghost_up_block.1} parent=5 // pred_fallthru
        _
      %p538 = scmp.le.s32.totalorder 1, %s31
      %p539 = scmp.lt.s32.totalorder %s31, 3
      %p540 = pnand %p538, %p539
      %p541 = pneg %p540
      // Predicated region
      $region53: #{finet_ghost_up_block.1} parent=5 // pred_check
        _
      $region54: #{finet_ghost_up_block.1} parent=5 // pred_check_branch
        %543 = sbr.rel (%p540) target = $region56
      $region55: #{finet_ghost_up_block.1} parent=5 // pred_region
        %s544 = ssub.s32 %s31, 1
        %s545 = sand.u32 %s58, 1
        %s546 = scalar_lea.sflag [#allocation3], %s545
        %s547 = sand.u32 %s58, 1
        %s548 = smul.addr %s547, 64
        %s549 = scalar_lea.vmem [#allocation2], %s548
        // Predicated region
        $region57: #{finet_ghost_up_block.1} parent=55 // pred_check
          %p550 = pneg %p71
        $region58: #{finet_ghost_up_block.1} parent=55 // pred_check_branch
          %552 = sbr.rel (%p550) target = $region60
        $region59: #{finet_ghost_up_block.1} parent=55 // pred_region
          %553 = dma.done %s546, 1024
        $region60: #{finet_ghost_up_block.1} parent=55 // pred_fallthru
          _
        %s554 = sand.u32 %s36, 1
        %s555 = scalar_lea.sflag [#allocation6], %s554
        %s556 = sand.u32 %s94, 1
        %s557 = smul.addr %s556, 8
        %s558 = scalar_lea.vmem [#allocation5], %s557
        // Predicated region
        $region61: #{finet_ghost_up_block.1} parent=55 // pred_check
          %p559 = pneg %p107
        $region62: #{finet_ghost_up_block.1} parent=55 // pred_check_branch
          %561 = sbr.rel (%p559) target = $region64
        $region63: #{finet_ghost_up_block.1} parent=55 // pred_region
          %562 = dma.done %s555, 128
        $region64: #{finet_ghost_up_block.1} parent=55 // pred_fallthru
          _
        %s563 = sand.u32 %s36, 1
        %s564 = scalar_lea.sflag [#allocation6], %s563
        %s565 = sand.u32 %s130, 1
        %s566 = smul.addr %s565, 8
        %s567 = scalar_lea.vmem [#allocation7], %s566
        // Predicated region
        $region65: #{finet_ghost_up_block.1} parent=55 // pred_check
          %p568 = pneg %p143
        $region66: #{finet_ghost_up_block.1} parent=55 // pred_check_branch
          %570 = sbr.rel (%p568) target = $region68
        $region67: #{finet_ghost_up_block.1} parent=55 // pred_region
          %571 = dma.done %s564, 128
        $region68: #{finet_ghost_up_block.1} parent=55 // pred_fallthru
          _
        %s572 = sand.u32 %s36, 1
        %s573 = scalar_lea.sflag [#allocation9], %s572
        %s574 = sand.u32 %s158, 1
        %s575 = smul.addr %s574, 128
        %s576 = scalar_lea.vmem [#allocation8], %s575
        // Predicated region
        $region69: #{finet_ghost_up_block.1} parent=55 // pred_check
          %p577 = pneg %p171
        $region70: #{finet_ghost_up_block.1} parent=55 // pred_check_branch
          %579 = sbr.rel (%p577) target = $region72
        $region71: #{finet_ghost_up_block.1} parent=55 // pred_region
          %580 = dma.done %s573, 2048
        $region72: #{finet_ghost_up_block.1} parent=55 // pred_fallthru
          _
        %s581 = sand.u32 %s36, 1
        %s582 = scalar_lea.sflag [#allocation9], %s581
        %s583 = sand.u32 %s194, 1
        %s584 = smul.addr %s583, 16
        %s585 = scalar_lea.vmem [#allocation10], %s584
        // Predicated region
        $region73: #{finet_ghost_up_block.1} parent=55 // pred_check
          %p586 = pneg %p207
        $region74: #{finet_ghost_up_block.1} parent=55 // pred_check_branch
          %588 = sbr.rel (%p586) target = $region76
        $region75: #{finet_ghost_up_block.1} parent=55 // pred_region
          %589 = dma.done %s582, 256
        $region76: #{finet_ghost_up_block.1} parent=55 // pred_fallthru
          _
        %s590 = sand.u32 %s36, 1
        %s591 = scalar_lea.sflag [#allocation12], %s590
        %s592 = sand.u32 %s230, 1
        %s593 = smul.addr %s592, 16
        %s594 = scalar_lea.vmem [#allocation11], %s593
        // Predicated region
        $region77: #{finet_ghost_up_block.1} parent=55 // pred_check
          %p595 = pneg %p243
        $region78: #{finet_ghost_up_block.1} parent=55 // pred_check_branch
          %597 = sbr.rel (%p595) target = $region80
        $region79: #{finet_ghost_up_block.1} parent=55 // pred_region
          %598 = dma.done %s591, 256
        $region80: #{finet_ghost_up_block.1} parent=55 // pred_fallthru
          _
        // Predicated region
        $region81: #{finet_ghost_up_block.1} parent=55 // pred_check
          %p599 = pneg %p264
        $region82: #{finet_ghost_up_block.1} parent=55 // pred_check_branch
          %601 = sbr.rel (%p599) target = $region84
        $region83: #{finet_ghost_up_block.1} parent=55 // pred_region
          %602 = dma.done [#allocation12], 384
        $region84: #{finet_ghost_up_block.1} parent=55 // pred_fallthru
          _
        // Predicated region
        $region85: #{finet_ghost_up_block.1} parent=55 // pred_check
          %p603 = pneg %p285
        $region86: #{finet_ghost_up_block.1} parent=55 // pred_check_branch
          %605 = sbr.rel (%p603) target = $region88
        $region87: #{finet_ghost_up_block.1} parent=55 // pred_region
          %606 = dma.done [#allocation15], 384
        $region88: #{finet_ghost_up_block.1} parent=55 // pred_fallthru
          _
        // Predicated region
        $region89: #{finet_ghost_up_block.1} parent=55 // pred_check
          %p607 = pneg %p306
        $region90: #{finet_ghost_up_block.1} parent=55 // pred_check_branch
          %609 = sbr.rel (%p607) target = $region92
        $region91: #{finet_ghost_up_block.1} parent=55 // pred_region
          %610 = dma.done [#allocation15], 128
        $region92: #{finet_ghost_up_block.1} parent=55 // pred_fallthru
          _
        %s611 = sand.u32 %s58, 1
        %s612 = scalar_lea.sflag [#allocation3], %s611
        %s613 = sand.u32 %s58, 1
        %s614 = smul.addr %s613, 64
        %s615 = scalar_lea.vmem [#allocation2], %s614
        %p616 = pneg %p71
        %p617 = pneg %p68
        %s618 = sand.u32 %s36, 1
        %s619 = scalar_lea.sflag [#allocation6], %s618
        %s620 = sand.u32 %s94, 1
        %s621 = smul.addr %s620, 8
        %s622 = scalar_lea.vmem [#allocation5], %s621
        %p623 = pneg %p107
        %p624 = pneg %p104
        %s625 = sand.u32 %s36, 1
        %s626 = scalar_lea.sflag [#allocation6], %s625
        %s627 = sand.u32 %s130, 1
        %s628 = smul.addr %s627, 8
        %s629 = scalar_lea.vmem [#allocation7], %s628
        %p630 = pneg %p143
        %p631 = pneg %p140
        %s632 = sand.u32 %s36, 1
        %s633 = scalar_lea.sflag [#allocation9], %s632
        %s634 = sand.u32 %s158, 1
        %s635 = smul.addr %s634, 128
        %s636 = scalar_lea.vmem [#allocation8], %s635
        %p637 = pneg %p171
        %p638 = pneg %p168
        %s639 = sand.u32 %s36, 1
        %s640 = scalar_lea.sflag [#allocation9], %s639
        %s641 = sand.u32 %s194, 1
        %s642 = smul.addr %s641, 16
        %s643 = scalar_lea.vmem [#allocation10], %s642
        %p644 = pneg %p207
        %p645 = pneg %p204
        %s646 = sand.u32 %s36, 1
        %s647 = scalar_lea.sflag [#allocation12], %s646
        %s648 = sand.u32 %s230, 1
        %s649 = smul.addr %s648, 16
        %s650 = scalar_lea.vmem [#allocation11], %s649
        %p651 = pneg %p243
        %p652 = pneg %p240
        %p653 = pneg %p264
        %p654 = pneg %p261
        %p655 = pneg %p285
        %p656 = pneg %p282
        %p657 = pneg %p306
        %p658 = pneg %p303
        %p659 = pneg %p334
        %p660 = pneg %p331
        %s661 = sand.u32 %s321, 1
        %s662 = scalar_lea.sflag [#allocation4], %s661
        %s663 = sand.u32 %s321, 1
        %s664 = smul.addr %s663, 128
        %s665 = scalar_lea.vmem [#allocation17], %s664
        %s666 = smul.u32 8, %s41
        %s667 = smul.u32 %s41, 8
        %s668 = ssub.s32 %s667, 1
        %p669 = scmp.gt.s32.totalorder %s668, 0
        %s670 = scalar_select %p669, %s668, 0
        %s671 = smul.u32 %s41, 8
        %s672 = sadd.s32 %s671, 8
        %p673 = scmp.lt.s32.totalorder %s672, 7
        %s674 = scalar_select %p673, %s672, 7
        %s675 = smul.u32 16, %s41
        %s676 = smul.u32 %s41, 8
        %s677 = ssub.s32 %s676, 1
        %p678 = scmp.gt.s32.totalorder %s677, 0
        %s679 = scalar_select %p678, %s677, 0
        %s680 = smul.u32 2, %s679
        %s681 = smul.u32 %s41, 8
        %s682 = sadd.s32 %s681, 8
        %p683 = scmp.lt.s32.totalorder %s682, 7
        %s684 = scalar_select %p683, %s682, 7
        %s685 = smul.u32 2, %s684
        %s686 = smul.u32 16, %s41
        %v687 = vld [vmem:[#allocation13] sm:$0xff]
        %s688 = scalar_lea.vmem [#allocation13], 8
        %v689 = vld [vmem:[%s688] sm:$0xff]
        %s690 = scalar_lea.vmem [#allocation13], 16
        %v691 = vld [vmem:[%s690] sm:$0xff]
        %v692 = vld [vmem:[#allocation14] sm:$0x7]
        %v693 = vld [vmem:[#allocation14 + $0x4] sm:$0x7]
        %v694 = vld [vmem:[#allocation14 + $0x8] sm:$0x7]
        %s695 = scalar_lea.vmem [#allocation14], 12
        %v696 = vld [vmem:[%s695] sm:$0x7]
        %v697 = vld [vmem:[%s695 + $0x4] sm:$0x7]
        %v698 = vld [vmem:[%s695 + $0x8] sm:$0x7]
        %v699 = vld [vmem:[#allocation16] sm:$0x1]
        %v700 = vld [vmem:[#allocation16 + $0x1] sm:$0x1]
        %v701 = vld [vmem:[#allocation16 + $0x2] sm:$0x1]
        %v702 = vld [vmem:[#allocation16 + $0x3] sm:$0x1]
        %v703 = vld [vmem:[#allocation16 + $0x4] sm:$0x1]
        %v704 = vld [vmem:[#allocation16 + $0x5] sm:$0x1]
        %v705 = vld [vmem:[%s558] sm:$0xff]
        %v706 = vld [vmem:[%s549] sm:$0xff]
        %v707 = vld [vmem:[%s549 + $0x8] sm:$0xff]
        %v708 = vld [vmem:[%s549 + $0x10] sm:$0xff]
        %v709 = vld [vmem:[%s549 + $0x18] sm:$0xff]
        %v710 = vld [vmem:[%s549 + $0x20] sm:$0xff]
        %v711 = vld [vmem:[%s549 + $0x28] sm:$0xff]
        %v712 = vld [vmem:[%s549 + $0x30] sm:$0xff]
        %v713 = vld [vmem:[%s549 + $0x38] sm:$0xff]
        %v714 = vld [vmem:[%s567] sm:$0xff]
        %vm715 = vcmask 64512
        %v717 = vsel %vm715, %v705, 0
        %v720 = vsel %vm715, %v706, 0
        %v723 = vsel %vm715, %v707, 0
        %v726 = vsel %vm715, %v708, 0
        %v729 = vsel %vm715, %v709, 0
        %v732 = vsel %vm715, %v710, 0
        %v735 = vsel %vm715, %v711, 0
        %v738 = vsel %vm715, %v712, 0
        %v741 = vsel %vm715, %v713, 0
        %v744 = vsel %vm715, %v714, 0
        %746 = vmatprep.subr.mxu0 0.0
        %747 = vmatpush1.msra.mxu0 %v687
        %748 = vmatprep.subr.mxu0 0.0
        %749 = vmatpush1.msra.mxu0 0.0
        %750 = vmatprep.subr.mxu0 0.0
        %751 = vmatpush1.msra.mxu0 0.0
        %752 = vmatprep.subr.mxu0 0.0
        %753 = vmatpush1.msra.mxu0 0.0
        %754 = vmatprep.subr.mxu0 0.0
        %755 = vmatpush1.msra.mxu0 0.0
        %756 = vmatprep.subr.mxu0 0.0
        %757 = vmatpush1.msra.mxu0 0.0
        %758 = vmatprep.subr.mxu0 0.0
        %759 = vmatpush1.msra.mxu0 0.0
        %760 = vmatprep.subr.mxu0 0.0
        %761 = vmatpush1.msra.mxu0 0.0
        %762 = vmatprep.subr.mxu0 0.0
        %763 = vmatpush1.msra.mxu0 0.0
        %764 = vmatprep.subr.mxu0 0.0
        %765 = vmatpush1.msra.mxu0 0.0
        %766 = vmatprep.subr.mxu0 0.0
        %767 = vmatpush1.msra.mxu0 0.0
        %768 = vmatprep.subr.mxu0 0.0
        %769 = vmatpush1.msra.mxu0 0.0
        %770 = vmatprep.subr.mxu0 0.0
        %771 = vmatpush1.msra.mxu0 0.0
        %772 = vmatprep.subr.mxu0 0.0
        %773 = vmatpush1.msra.mxu0 0.0
        %774 = vmatprep.subr.mxu0 0.0
        %775 = vmatpush1.msra.mxu0 0.0
        %776 = vmatprep.subr.mxu0 0.0
        %777 = vmatpush1.msra.mxu0 0.0
        %778 = vmatprep.subr.mxu0 0.0
        %779 = vmatpush1.msra.mxu0 0.0
        %780 = vmatprep.subr.mxu0 0.0
        %781 = vmatpush1.msra.mxu0 0.0
        %782 = vmatprep.subr.mxu0 0.0
        %783 = vmatpush1.msra.mxu0 0.0
        %784 = vmatprep.subr.mxu0 0.0
        %785 = vmatpush1.msra.mxu0 0.0
        %786 = vmatprep.subr.mxu0 0.0
        %787 = vmatpush1.msra.mxu0 0.0
        %788 = vmatprep.subr.mxu0 0.0
        %789 = vmatpush1.msra.mxu0 0.0
        %790 = vmatprep.subr.mxu0 0.0
        %791 = vmatpush1.msra.mxu0 0.0
        %792 = vmatprep.subr.mxu0 0.0
        %793 = vmatpush1.msra.mxu0 0.0
        %794 = vmatprep.subr.mxu0 0.0
        %795 = vmatpush1.msra.mxu0 0.0
        %796 = vmatprep.subr.mxu0 0.0
        %797 = vmatpush1.msra.mxu0 0.0
        %798 = vmatprep.subr.mxu0 0.0
        %799 = vmatpush1.msra.mxu0 0.0
        %800 = vmatprep.subr.mxu0 0.0
        %801 = vmatpush1.msra.mxu0 0.0
        %802 = vmatprep.subr.mxu0 0.0
        %803 = vmatpush1.msra.mxu0 0.0
        %804 = vmatprep.subr.mxu0 0.0
        %805 = vmatpush1.msra.mxu0 0.0
        %806 = vmatprep.subr.mxu0 0.0
        %807 = vmatpush1.msra.mxu0 0.0
        %808 = vmatprep.subr.mxu0 0.0
        %809 = vmatpush1.msra.mxu0 0.0
        %810 = vmatprep.mubr.f32.mxu0 0.0
        %811 = vmatmul.mubr.f32.gmra.mrb[0].mxu0 %v717
        %v812 = vpop.f32.mrb[0].mxu0
        %v813 = vadd.f32 0.0, %v812
        %v814 = vpop.f32.mrb[0].mxu0
        %815 = vmatprep.mubr.f32.mxu0 0.0
        %816 = vmatmul.mubr.f32.gmra.mrb[0].mxu0 %v720
        %v817 = vpop.f32.mrb[0].mxu0
        %v818 = vadd.f32 0.0, %v817
        %v819 = vpop.f32.mrb[0].mxu0
        %820 = vmatprep.mubr.f32.mxu0 0.0
        %821 = vmatmul.mubr.f32.gmra.mrb[0].mxu0 %v723
        %v822 = vpop.f32.mrb[0].mxu0
        %v823 = vadd.f32 0.0, %v822
        %v824 = vpop.f32.mrb[0].mxu0
        %825 = vmatprep.mubr.f32.mxu0 0.0
        %826 = vmatmul.mubr.f32.gmra.mrb[0].mxu0 %v726
        %v827 = vpop.f32.mrb[0].mxu0
        %v828 = vadd.f32 0.0, %v827
        %v829 = vpop.f32.mrb[0].mxu0
        %830 = vmatprep.mubr.f32.mxu0 0.0
        %831 = vmatmul.mubr.f32.gmra.mrb[0].mxu0 %v729
        %v832 = vpop.f32.mrb[0].mxu0
        %v833 = vadd.f32 0.0, %v832
        %v834 = vpop.f32.mrb[0].mxu0
        %835 = vmatprep.mubr.f32.mxu0 0.0
        %836 = vmatmul.mubr.f32.gmra.mrb[0].mxu0 %v732
        %v837 = vpop.f32.mrb[0].mxu0
        %v838 = vadd.f32 0.0, %v837
        %v839 = vpop.f32.mrb[0].mxu0
        %840 = vmatprep.mubr.f32.mxu0 0.0
        %841 = vmatmul.mubr.f32.gmra.mrb[0].mxu0 %v735
        %v842 = vpop.f32.mrb[0].mxu0
        %v843 = vadd.f32 0.0, %v842
        %v844 = vpop.f32.mrb[0].mxu0
        %845 = vmatprep.mubr.f32.mxu0 0.0
        %846 = vmatmul.mubr.f32.gmra.mrb[0].mxu0 %v738
        %v847 = vpop.f32.mrb[0].mxu0
        %v848 = vadd.f32 0.0, %v847
        %v849 = vpop.f32.mrb[0].mxu0
        %850 = vmatprep.mubr.f32.mxu0 0.0
        %851 = vmatmul.mubr.f32.gmra.mrb[0].mxu0 %v741
        %v852 = vpop.f32.mrb[0].mxu0
        %v853 = vadd.f32 0.0, %v852
        %v854 = vpop.f32.mrb[0].mxu0
        %855 = vmatprep.mubr.f32.mxu0 0.0
        %856 = vmatmul.mubr.f32.gmra.mrb[0].mxu0 %v744
        %v857 = vpop.f32.mrb[0].mxu0
        %v858 = vadd.f32 0.0, %v857
        %v859 = vpop.f32.mrb[0].mxu0
        %860 = vdwg.mxu0
        %871 = vrot.lane.b32.xlu0 %v813, 120
        %v872 = vpop.permute.xlu0 %871
        %873 = vrot.lane.b32.xlu0 %v818, 120
        %v874 = vpop.permute.xlu0 %873
        %875 = vrot.lane.b32.xlu0 %v823, 120
        %v876 = vpop.permute.xlu0 %875
        %877 = vrot.lane.b32.xlu0 %v828, 120
        %v878 = vpop.permute.xlu0 %877
        %879 = vrot.lane.b32.xlu0 %v833, 120
        %v880 = vpop.permute.xlu0 %879
        %881 = vrot.lane.b32.xlu0 %v838, 120
        %v882 = vpop.permute.xlu0 %881
        %883 = vrot.lane.b32.xlu0 %v843, 120
        %v884 = vpop.permute.xlu0 %883
        %885 = vrot.lane.b32.xlu0 %v848, 120
        %v886 = vpop.permute.xlu0 %885
        %887 = vrot.lane.b32.xlu0 %v853, 120
        %v888 = vpop.permute.xlu0 %887
        %889 = vrot.lane.b32.xlu0 %v858, 120
        %v890 = vpop.permute.xlu0 %889
        %v901 = vld [vmem:[%s585] sm:$0xff]
        %v902 = vld [vmem:[%s585 + $0x8] sm:$0xff]
        %v903 = vld [vmem:[%s576] sm:$0xff]
        %v904 = vld [vmem:[%s576 + $0x8] sm:$0xff]
        %v905 = vld [vmem:[%s576 + $0x10] sm:$0xff]
        %v906 = vld [vmem:[%s576 + $0x18] sm:$0xff]
        %v907 = vld [vmem:[%s576 + $0x20] sm:$0xff]
        %v908 = vld [vmem:[%s576 + $0x28] sm:$0xff]
        %v909 = vld [vmem:[%s576 + $0x30] sm:$0xff]
        %v910 = vld [vmem:[%s576 + $0x38] sm:$0xff]
        %v911 = vld [vmem:[%s576 + $0x40] sm:$0xff]
        %v912 = vld [vmem:[%s576 + $0x48] sm:$0xff]
        %v913 = vld [vmem:[%s576 + $0x50] sm:$0xff]
        %v914 = vld [vmem:[%s576 + $0x58] sm:$0xff]
        %v915 = vld [vmem:[%s576 + $0x60] sm:$0xff]
        %v916 = vld [vmem:[%s576 + $0x68] sm:$0xff]
        %v917 = vld [vmem:[%s576 + $0x70] sm:$0xff]
        %v918 = vld [vmem:[%s576 + $0x78] sm:$0xff]
        %v919 = vld [vmem:[%s594] sm:$0xff]
        %v920 = vld [vmem:[%s594 + $0x8] sm:$0xff]
        %v922 = vsel %vm715, %v901, 0
        %v925 = vsel %vm715, %v902, 0
        %v928 = vsel %vm715, %v903, 0
        %v931 = vsel %vm715, %v904, 0
        %v934 = vsel %vm715, %v905, 0
        %v937 = vsel %vm715, %v906, 0
        %v940 = vsel %vm715, %v907, 0
        %v943 = vsel %vm715, %v908, 0
        %v946 = vsel %vm715, %v909, 0
        %v949 = vsel %vm715, %v910, 0
        %v952 = vsel %vm715, %v911, 0
        %v955 = vsel %vm715, %v912, 0
        %v958 = vsel %vm715, %v913, 0
        %v961 = vsel %vm715, %v914, 0
        %v964 = vsel %vm715, %v915, 0
        %v967 = vsel %vm715, %v916, 0
        %v970 = vsel %vm715, %v917, 0
        %v973 = vsel %vm715, %v918, 0
        %v976 = vsel %vm715, %v919, 0
        %v979 = vsel %vm715, %v920, 0
        %981 = vmatprep.subr.mxu0 0.0
        %982 = vmatpush1.msra.mxu0 %v689
        %983 = vmatprep.subr.mxu0 0.0
        %984 = vmatpush1.msra.mxu0 0.0
        %985 = vmatprep.subr.mxu0 0.0
        %986 = vmatpush1.msra.mxu0 0.0
        %987 = vmatprep.subr.mxu0 0.0
        %988 = vmatpush1.msra.mxu0 0.0
        %989 = vmatprep.subr.mxu0 0.0
        %990 = vmatpush1.msra.mxu0 0.0
        %991 = vmatprep.subr.mxu0 0.0
        %992 = vmatpush1.msra.mxu0 0.0
        %993 = vmatprep.subr.mxu0 0.0
        %994 = vmatpush1.msra.mxu0 0.0
        %995 = vmatprep.subr.mxu0 0.0
        %996 = vmatpush1.msra.mxu0 0.0
        %997 = vmatprep.subr.mxu0 0.0
        %998 = vmatpush1.msra.mxu0 0.0
        %999 = vmatprep.subr.mxu0 0.0
        %1000 = vmatpush1.msra.mxu0 0.0
        %1001 = vmatprep.subr.mxu0 0.0
        %1002 = vmatpush1.msra.mxu0 0.0
        %1003 = vmatprep.subr.mxu0 0.0
        %1004 = vmatpush1.msra.mxu0 0.0
        %1005 = vmatprep.subr.mxu0 0.0
        %1006 = vmatpush1.msra.mxu0 0.0
        %1007 = vmatprep.subr.mxu0 0.0
        %1008 = vmatpush1.msra.mxu0 0.0
        %1009 = vmatprep.subr.mxu0 0.0
        %1010 = vmatpush1.msra.mxu0 0.0
        %1011 = vmatprep.subr.mxu0 0.0
        %1012 = vmatpush1.msra.mxu0 0.0
        %1013 = vmatprep.subr.mxu0 0.0
        %1014 = vmatpush1.msra.mxu0 0.0
        %1015 = vmatprep.subr.mxu0 0.0
        %1016 = vmatpush1.msra.mxu0 0.0
        %1017 = vmatprep.subr.mxu0 0.0
        %1018 = vmatpush1.msra.mxu0 0.0
        %1019 = vmatprep.subr.mxu0 0.0
        %1020 = vmatpush1.msra.mxu0 0.0
        %1021 = vmatprep.subr.mxu0 0.0
        %1022 = vmatpush1.msra.mxu0 0.0
        %1023 = vmatprep.subr.mxu0 0.0
        %1024 = vmatpush1.msra.mxu0 0.0
        %1025 = vmatprep.subr.mxu0 0.0
        %1026 = vmatpush1.msra.mxu0 0.0
        %1027 = vmatprep.subr.mxu0 0.0
        %1028 = vmatpush1.msra.mxu0 0.0
        %1029 = vmatprep.subr.mxu0 0.0
        %1030 = vmatpush1.msra.mxu0 0.0
        %1031 = vmatprep.subr.mxu0 0.0
        %1032 = vmatpush1.msra.mxu0 0.0
        %1033 = vmatprep.subr.mxu0 0.0
        %1034 = vmatpush1.msra.mxu0 0.0
        %1035 = vmatprep.subr.mxu0 0.0
        %1036 = vmatpush1.msra.mxu0 0.0
        %1037 = vmatprep.subr.mxu0 0.0
        %1038 = vmatpush1.msra.mxu0 0.0
        %1039 = vmatprep.subr.mxu0 0.0
        %1040 = vmatpush1.msra.mxu0 0.0
        %1041 = vmatprep.subr.mxu0 0.0
        %1042 = vmatpush1.msra.mxu0 0.0
        %1043 = vmatprep.subr.mxu0 0.0
        %1044 = vmatpush1.msra.mxu0 0.0
        %1045 = vmatprep.mubr.f32.mxu0 0.0
        %1046 = vmatmul.mubr.f32.gmra.mrb[0].mxu0 %v922
        %v1047 = vpop.f32.mrb[0].mxu0
        %v1048 = vadd.f32 0.0, %v1047
        %v1049 = vpop.f32.mrb[0].mxu0
        %1050 = vmatprep.mubr.f32.mxu0 0.0
        %1051 = vmatmul.mubr.f32.gmra.mrb[0].mxu0 %v925
        %v1052 = vpop.f32.mrb[0].mxu0
        %v1053 = vadd.f32 0.0, %v1052
        %v1054 = vpop.f32.mrb[0].mxu0
        %1055 = vmatprep.mubr.f32.mxu0 0.0
        %1056 = vmatmul.mubr.f32.gmra.mrb[0].mxu0 %v928
        %v1057 = vpop.f32.mrb[0].mxu0
        %v1058 = vadd.f32 0.0, %v1057
        %v1059 = vpop.f32.mrb[0].mxu0
        %1060 = vmatprep.mubr.f32.mxu0 0.0
        %1061 = vmatmul.mubr.f32.gmra.mrb[0].mxu0 %v931
        %v1062 = vpop.f32.mrb[0].mxu0
        %v1063 = vadd.f32 0.0, %v1062
        %v1064 = vpop.f32.mrb[0].mxu0
        %1065 = vmatprep.mubr.f32.mxu0 0.0
        %1066 = vmatmul.mubr.f32.gmra.mrb[0].mxu0 %v934
        %v1067 = vpop.f32.mrb[0].mxu0
        %v1068 = vadd.f32 0.0, %v1067
        %v1069 = vpop.f32.mrb[0].mxu0
        %1070 = vmatprep.mubr.f32.mxu0 0.0
        %1071 = vmatmul.mubr.f32.gmra.mrb[0].mxu0 %v937
        %v1072 = vpop.f32.mrb[0].mxu0
        %v1073 = vadd.f32 0.0, %v1072
        %v1074 = vpop.f32.mrb[0].mxu0
        %1075 = vmatprep.mubr.f32.mxu0 0.0
        %1076 = vmatmul.mubr.f32.gmra.mrb[0].mxu0 %v940
        %v1077 = vpop.f32.mrb[0].mxu0
        %v1078 = vadd.f32 0.0, %v1077
        %v1079 = vpop.f32.mrb[0].mxu0
        %1080 = vmatprep.mubr.f32.mxu0 0.0
        %1081 = vmatmul.mubr.f32.gmra.mrb[0].mxu0 %v943
        %v1082 = vpop.f32.mrb[0].mxu0
        %v1083 = vadd.f32 0.0, %v1082
        %v1084 = vpop.f32.mrb[0].mxu0
        %1085 = vmatprep.mubr.f32.mxu0 0.0
        %1086 = vmatmul.mubr.f32.gmra.mrb[0].mxu0 %v946
        %v1087 = vpop.f32.mrb[0].mxu0
        %v1088 = vadd.f32 0.0, %v1087
        %v1089 = vpop.f32.mrb[0].mxu0
        %1090 = vmatprep.mubr.f32.mxu0 0.0
        %1091 = vmatmul.mubr.f32.gmra.mrb[0].mxu0 %v949
        %v1092 = vpop.f32.mrb[0].mxu0
        %v1093 = vadd.f32 0.0, %v1092
        %v1094 = vpop.f32.mrb[0].mxu0
        %1095 = vmatprep.mubr.f32.mxu0 0.0
        %1096 = vmatmul.mubr.f32.gmra.mrb[0].mxu0 %v952
        %v1097 = vpop.f32.mrb[0].mxu0
        %v1098 = vadd.f32 0.0, %v1097
        %v1099 = vpop.f32.mrb[0].mxu0
        %1100 = vmatprep.mubr.f32.mxu0 0.0
        %1101 = vmatmul.mubr.f32.gmra.mrb[0].mxu0 %v955
        %v1102 = vpop.f32.mrb[0].mxu0
        %v1103 = vadd.f32 0.0, %v1102
        %v1104 = vpop.f32.mrb[0].mxu0
        %1105 = vmatprep.mubr.f32.mxu0 0.0
        %1106 = vmatmul.mubr.f32.gmra.mrb[0].mxu0 %v958
        %v1107 = vpop.f32.mrb[0].mxu0
        %v1108 = vadd.f32 0.0, %v1107
        %v1109 = vpop.f32.mrb[0].mxu0
        %1110 = vmatprep.mubr.f32.mxu0 0.0
        %1111 = vmatmul.mubr.f32.gmra.mrb[0].mxu0 %v961
        %v1112 = vpop.f32.mrb[0].mxu0
        %v1113 = vadd.f32 0.0, %v1112
        %v1114 = vpop.f32.mrb[0].mxu0
        %1115 = vmatprep.mubr.f32.mxu0 0.0
        %1116 = vmatmul.mubr.f32.gmra.mrb[0].mxu0 %v964
        %v1117 = vpop.f32.mrb[0].mxu0
        %v1118 = vadd.f32 0.0, %v1117
        %v1119 = vpop.f32.mrb[0].mxu0
        %1120 = vmatprep.mubr.f32.mxu0 0.0
        %1121 = vmatmul.mubr.f32.gmra.mrb[0].mxu0 %v967
        %v1122 = vpop.f32.mrb[0].mxu0
        %v1123 = vadd.f32 0.0, %v1122
        %v1124 = vpop.f32.mrb[0].mxu0
        %1125 = vmatprep.mubr.f32.mxu0 0.0
        %1126 = vmatmul.mubr.f32.gmra.mrb[0].mxu0 %v970
        %v1127 = vpop.f32.mrb[0].mxu0
        %v1128 = vadd.f32 0.0, %v1127
        %v1129 = vpop.f32.mrb[0].mxu0
        %1130 = vmatprep.mubr.f32.mxu0 0.0
        %1131 = vmatmul.mubr.f32.gmra.mrb[0].mxu0 %v973
        %v1132 = vpop.f32.mrb[0].mxu0
        %v1133 = vadd.f32 0.0, %v1132
        %v1134 = vpop.f32.mrb[0].mxu0
        %1135 = vmatprep.mubr.f32.mxu0 0.0
        %1136 = vmatmul.mubr.f32.gmra.mrb[0].mxu0 %v976
        %v1137 = vpop.f32.mrb[0].mxu0
        %v1138 = vadd.f32 0.0, %v1137
        %v1139 = vpop.f32.mrb[0].mxu0
        %1140 = vmatprep.mubr.f32.mxu0 0.0
        %1141 = vmatmul.mubr.f32.gmra.mrb[0].mxu0 %v979
        %v1142 = vpop.f32.mrb[0].mxu0
        %v1143 = vadd.f32 0.0, %v1142
        %v1144 = vpop.f32.mrb[0].mxu0
        %1145 = vdwg.mxu0
        %v1146 = vadd.f32 %v813, %v1048
        %v1147 = vadd.f32 %v872, %v1053
        %v1148 = vadd.f32 %v818, %v1058
        %v1149 = vadd.f32 %v874, %v1063
        %v1150 = vadd.f32 %v823, %v1068
        %v1151 = vadd.f32 %v876, %v1073
        %v1152 = vadd.f32 %v828, %v1078
        %v1153 = vadd.f32 %v878, %v1083
        %v1154 = vadd.f32 %v833, %v1088
        %v1155 = vadd.f32 %v880, %v1093
        %v1156 = vadd.f32 %v838, %v1098
        %v1157 = vadd.f32 %v882, %v1103
        %v1158 = vadd.f32 %v843, %v1108
        %v1159 = vadd.f32 %v884, %v1113
        %v1160 = vadd.f32 %v848, %v1118
        %v1161 = vadd.f32 %v886, %v1123
        %v1162 = vadd.f32 %v853, %v1128
        %v1163 = vadd.f32 %v888, %v1133
        %v1164 = vadd.f32 %v858, %v1138
        %v1165 = vadd.f32 %v890, %v1143
        %v1166 = vlaneseq
        %v1167 = vshrl.u32 %v1166, 7
        %v1168 = vsub.s32 0, %v1167
        %v1169 = vrot.slane %v699, %v1168
        %v1170 = vadd.f32 %v1146, %v1169
        %v1171 = vadd.f32 %v1147, %v1169
        %v1172 = vadd.f32 %v1148, %v1169
        %v1173 = vadd.f32 %v1149, %v1169
        %v1174 = vadd.f32 %v1150, %v1169
        %v1175 = vadd.f32 %v1151, %v1169
        %v1176 = vadd.f32 %v1152, %v1169
        %v1177 = vadd.f32 %v1153, %v1169
        %v1178 = vadd.f32 %v1154, %v1169
        %v1179 = vadd.f32 %v1155, %v1169
        %v1180 = vadd.f32 %v1156, %v1169
        %v1181 = vadd.f32 %v1157, %v1169
        %v1182 = vadd.f32 %v1158, %v1169
        %v1183 = vadd.f32 %v1159, %v1169
        %v1184 = vadd.f32 %v1160, %v1169
        %v1185 = vadd.f32 %v1161, %v1169
        %v1186 = vadd.f32 %v1162, %v1169
        %v1187 = vadd.f32 %v1163, %v1169
        %v1188 = vadd.f32 %v1164, %v1169
        %v1189 = vadd.f32 %v1165, %v1169
        %p1190 = scmp.gt.s32.totalorder %s41, 0
        %s1191 = scalar_select %p1190, 1, 0
        %v1192 = vstv %s1191
        %vm1193 = vcmp.eq.s32.totalorder %v1192, 1
        %p1194 = scmp.lt.s32.totalorder %s41, 0
        %s1195 = scalar_select %p1194, 1, 0
        %v1196 = vstv %s1195
        %vm1197 = vcmp.eq.s32.totalorder %v1196, 1
        %v1198 = vsel %vm1193, 1, 0
        %v1199 = vsel %vm1197, 1, 0
        %v1200 = vcvt.s32.f32 %v1198
        %v1201 = vcvt.s32.f32 1
        %v1202 = vcvt.s32.f32 %v1199
        %v1203 = vmul.f32 %v1170, %v1200
        %v1204 = vmul.f32 %v1171, %v1200
        %v1205 = vmul.f32 %v1172, %v1201
        %v1206 = vmul.f32 %v1173, %v1201
        %v1207 = vmul.f32 %v1174, %v1201
        %v1208 = vmul.f32 %v1175, %v1201
        %v1209 = vmul.f32 %v1176, %v1201
        %v1210 = vmul.f32 %v1177, %v1201
        %v1211 = vmul.f32 %v1178, %v1201
        %v1212 = vmul.f32 %v1179, %v1201
        %v1213 = vmul.f32 %v1180, %v1201
        %v1214 = vmul.f32 %v1181, %v1201
        %v1215 = vmul.f32 %v1182, %v1201
        %v1216 = vmul.f32 %v1183, %v1201
        %v1217 = vmul.f32 %v1184, %v1201
        %v1218 = vmul.f32 %v1185, %v1201
        %v1219 = vmul.f32 %v1186, %v1201
        %v1220 = vmul.f32 %v1187, %v1201
        %v1221 = vmul.f32 %v1188, %v1202
        %v1222 = vmul.f32 %v1189, %v1202
        %v1243 = vrot.slane %v1203, 7
        %v1244 = vrot.slane %v1204, 7
        %v1245 = vrot.slane %v1205, 7
        %v1246 = vrot.slane %v1206, 7
        %v1247 = vrot.slane %v1207, 7
        %v1248 = vrot.slane %v1208, 7
        %v1249 = vrot.slane %v1209, 7
        %v1250 = vrot.slane %v1210, 7
        %v1251 = vrot.slane %v1211, 7
        %v1252 = vrot.slane %v1212, 7
        %v1253 = vrot.slane %v1213, 7
        %v1254 = vrot.slane %v1214, 7
        %v1255 = vrot.slane %v1215, 7
        %v1256 = vrot.slane %v1216, 7
        %v1257 = vrot.slane %v1217, 7
        %v1258 = vrot.slane %v1218, 7
        %v1259 = vrot.slane %v1219, 7
        %v1260 = vrot.slane %v1220, 7
        %v1261 = vrot.slane %v1221, 7
        %v1262 = vrot.slane %v1222, 7
        %1263 = vrot.lane.b32.xlu0 %v1243, 126
        %v1264 = vpop.permute.xlu0 %1263
        %1265 = vrot.lane.b32.xlu0 %v1244, 126
        %v1266 = vpop.permute.xlu0 %1265
        %1267 = vrot.lane.b32.xlu0 %v1245, 126
        %v1268 = vpop.permute.xlu0 %1267
        %1269 = vrot.lane.b32.xlu0 %v1246, 126
        %v1270 = vpop.permute.xlu0 %1269
        %1271 = vrot.lane.b32.xlu0 %v1247, 126
        %v1272 = vpop.permute.xlu0 %1271
        %1273 = vrot.lane.b32.xlu0 %v1248, 126
        %v1274 = vpop.permute.xlu0 %1273
        %1275 = vrot.lane.b32.xlu0 %v1249, 126
        %v1276 = vpop.permute.xlu0 %1275
        %1277 = vrot.lane.b32.xlu0 %v1250, 126
        %v1278 = vpop.permute.xlu0 %1277
        %1279 = vrot.lane.b32.xlu0 %v1251, 126
        %v1280 = vpop.permute.xlu0 %1279
        %1281 = vrot.lane.b32.xlu0 %v1252, 126
        %v1282 = vpop.permute.xlu0 %1281
        %1283 = vrot.lane.b32.xlu0 %v1253, 126
        %v1284 = vpop.permute.xlu0 %1283
        %1285 = vrot.lane.b32.xlu0 %v1254, 126
        %v1286 = vpop.permute.xlu0 %1285
        %1287 = vrot.lane.b32.xlu0 %v1255, 126
        %v1288 = vpop.permute.xlu0 %1287
        %1289 = vrot.lane.b32.xlu0 %v1256, 126
        %v1290 = vpop.permute.xlu0 %1289
        %1291 = vrot.lane.b32.xlu0 %v1257, 126
        %v1292 = vpop.permute.xlu0 %1291
        %1293 = vrot.lane.b32.xlu0 %v1258, 126
        %v1294 = vpop.permute.xlu0 %1293
        %1295 = vrot.lane.b32.xlu0 %v1259, 126
        %v1296 = vpop.permute.xlu0 %1295
        %1297 = vrot.lane.b32.xlu0 %v1260, 126
        %v1298 = vpop.permute.xlu0 %1297
        %1299 = vrot.lane.b32.xlu0 %v1261, 126
        %v1300 = vpop.permute.xlu0 %1299
        %1301 = vrot.lane.b32.xlu0 %v1262, 126
        %v1302 = vpop.permute.xlu0 %1301
        %vm1323 = vcmask 1040384
        %v1324 = vsel %vm1323, 0.0, %v1264
        %v1325 = vsel %vm1323, 0.0, %v1266
        %v1326 = vsel %vm1323, 0.0, %v1268
        %v1327 = vsel %vm1323, 0.0, %v1270
        %v1328 = vsel %vm1323, 0.0, %v1272
        %v1329 = vsel %vm1323, 0.0, %v1274
        %v1330 = vsel %vm1323, 0.0, %v1276
        %v1331 = vsel %vm1323, 0.0, %v1278
        %v1332 = vsel %vm1323, 0.0, %v1280
        %v1333 = vsel %vm1323, 0.0, %v1282
        %v1334 = vsel %vm1323, 0.0, %v1284
        %v1335 = vsel %vm1323, 0.0, %v1286
        %v1336 = vsel %vm1323, 0.0, %v1288
        %v1337 = vsel %vm1323, 0.0, %v1290
        %v1338 = vsel %vm1323, 0.0, %v1292
        %v1339 = vsel %vm1323, 0.0, %v1294
        %v1340 = vsel %vm1323, 0.0, %v1296
        %v1341 = vsel %vm1323, 0.0, %v1298
        %v1342 = vsel %vm1323, 0.0, %v1300
        %v1343 = vsel %vm1323, 0.0, %v1302
        %1344 = vrot.lane.b32.xlu0 %v1203, 2
        %v1345 = vpop.permute.xlu0 %1344
        %1346 = vrot.lane.b32.xlu0 %v1204, 2
        %v1347 = vpop.permute.xlu0 %1346
        %1348 = vrot.lane.b32.xlu0 %v1205, 2
        %v1349 = vpop.permute.xlu0 %1348
        %1350 = vrot.lane.b32.xlu0 %v1206, 2
        %v1351 = vpop.permute.xlu0 %1350
        %1352 = vrot.lane.b32.xlu0 %v1207, 2
        %v1353 = vpop.permute.xlu0 %1352
        %1354 = vrot.lane.b32.xlu0 %v1208, 2
        %v1355 = vpop.permute.xlu0 %1354
        %1356 = vrot.lane.b32.xlu0 %v1209, 2
        %v1357 = vpop.permute.xlu0 %1356
        %1358 = vrot.lane.b32.xlu0 %v1210, 2
        %v1359 = vpop.permute.xlu0 %1358
        %1360 = vrot.lane.b32.xlu0 %v1211, 2
        %v1361 = vpop.permute.xlu0 %1360
        %1362 = vrot.lane.b32.xlu0 %v1212, 2
        %v1363 = vpop.permute.xlu0 %1362
        %1364 = vrot.lane.b32.xlu0 %v1213, 2
        %v1365 = vpop.permute.xlu0 %1364
        %1366 = vrot.lane.b32.xlu0 %v1214, 2
        %v1367 = vpop.permute.xlu0 %1366
        %1368 = vrot.lane.b32.xlu0 %v1215, 2
        %v1369 = vpop.permute.xlu0 %1368
        %1370 = vrot.lane.b32.xlu0 %v1216, 2
        %v1371 = vpop.permute.xlu0 %1370
        %1372 = vrot.lane.b32.xlu0 %v1217, 2
        %v1373 = vpop.permute.xlu0 %1372
        %1374 = vrot.lane.b32.xlu0 %v1218, 2
        %v1375 = vpop.permute.xlu0 %1374
        %1376 = vrot.lane.b32.xlu0 %v1219, 2
        %v1377 = vpop.permute.xlu0 %1376
        %1378 = vrot.lane.b32.xlu0 %v1220, 2
        %v1379 = vpop.permute.xlu0 %1378
        %1380 = vrot.lane.b32.xlu0 %v1221, 2
        %v1381 = vpop.permute.xlu0 %1380
        %1382 = vrot.lane.b32.xlu0 %v1222, 2
        %v1383 = vpop.permute.xlu0 %1382
        %vm1404 = vcmask 15360
        %v1405 = vsel %vm1404, %v1324, %v1345
        %v1406 = vsel %vm1404, %v1325, %v1347
        %v1407 = vsel %vm1404, %v1326, %v1349
        %v1408 = vsel %vm1404, %v1327, %v1351
        %v1409 = vsel %vm1404, %v1328, %v1353
        %v1410 = vsel %vm1404, %v1329, %v1355
        %v1411 = vsel %vm1404, %v1330, %v1357
        %v1412 = vsel %vm1404, %v1331, %v1359
        %v1413 = vsel %vm1404, %v1332, %v1361
        %v1414 = vsel %vm1404, %v1333, %v1363
        %v1415 = vsel %vm1404, %v1334, %v1365
        %v1416 = vsel %vm1404, %v1335, %v1367
        %v1417 = vsel %vm1404, %v1336, %v1369
        %v1418 = vsel %vm1404, %v1337, %v1371
        %v1419 = vsel %vm1404, %v1338, %v1373
        %v1420 = vsel %vm1404, %v1339, %v1375
        %v1421 = vsel %vm1404, %v1340, %v1377
        %v1422 = vsel %vm1404, %v1341, %v1379
        %v1423 = vsel %vm1404, %v1342, %v1381
        %v1424 = vsel %vm1404, %v1343, %v1383
        %v1425 = vrot.slane %v1203, 1
        %v1426 = vrot.slane %v1204, 1
        %v1427 = vrot.slane %v1205, 1
        %v1428 = vrot.slane %v1206, 1
        %v1429 = vrot.slane %v1207, 1
        %v1430 = vrot.slane %v1208, 1
        %v1431 = vrot.slane %v1209, 1
        %v1432 = vrot.slane %v1210, 1
        %v1433 = vrot.slane %v1211, 1
        %v1434 = vrot.slane %v1212, 1
        %v1435 = vrot.slane %v1213, 1
        %v1436 = vrot.slane %v1214, 1
        %v1437 = vrot.slane %v1215, 1
        %v1438 = vrot.slane %v1216, 1
        %v1439 = vrot.slane %v1217, 1
        %v1440 = vrot.slane %v1218, 1
        %v1441 = vrot.slane %v1219, 1
        %v1442 = vrot.slane %v1220, 1
        %v1443 = vrot.slane %v1221, 1
        %v1444 = vrot.slane %v1222, 1
        %vm1465 = vcmask 1046528
        %v1466 = vsel %vm1465, %v1425, 0.0
        %v1467 = vsel %vm1465, %v1426, 0.0
        %v1468 = vsel %vm1465, %v1427, 0.0
        %v1469 = vsel %vm1465, %v1428, 0.0
        %v1470 = vsel %vm1465, %v1429, 0.0
        %v1471 = vsel %vm1465, %v1430, 0.0
        %v1472 = vsel %vm1465, %v1431, 0.0
        %v1473 = vsel %vm1465, %v1432, 0.0
        %v1474 = vsel %vm1465, %v1433, 0.0
        %v1475 = vsel %vm1465, %v1434, 0.0
        %v1476 = vsel %vm1465, %v1435, 0.0
        %v1477 = vsel %vm1465, %v1436, 0.0
        %v1478 = vsel %vm1465, %v1437, 0.0
        %v1479 = vsel %vm1465, %v1438, 0.0
        %v1480 = vsel %vm1465, %v1439, 0.0
        %v1481 = vsel %vm1465, %v1440, 0.0
        %v1482 = vsel %vm1465, %v1441, 0.0
        %v1483 = vsel %vm1465, %v1442, 0.0
        %v1484 = vsel %vm1465, %v1443, 0.0
        %v1485 = vsel %vm1465, %v1444, 0.0
        %1486 = vrot.lane.b32.xlu0 %v1203, 126
        %v1487 = vpop.permute.xlu0 %1486
        %1488 = vrot.lane.b32.xlu0 %v1204, 126
        %v1489 = vpop.permute.xlu0 %1488
        %1490 = vrot.lane.b32.xlu0 %v1205, 126
        %v1491 = vpop.permute.xlu0 %1490
        %1492 = vrot.lane.b32.xlu0 %v1206, 126
        %v1493 = vpop.permute.xlu0 %1492
        %1494 = vrot.lane.b32.xlu0 %v1207, 126
        %v1495 = vpop.permute.xlu0 %1494
        %1496 = vrot.lane.b32.xlu0 %v1208, 126
        %v1497 = vpop.permute.xlu0 %1496
        %1498 = vrot.lane.b32.xlu0 %v1209, 126
        %v1499 = vpop.permute.xlu0 %1498
        %1500 = vrot.lane.b32.xlu0 %v1210, 126
        %v1501 = vpop.permute.xlu0 %1500
        %1502 = vrot.lane.b32.xlu0 %v1211, 126
        %v1503 = vpop.permute.xlu0 %1502
        %1504 = vrot.lane.b32.xlu0 %v1212, 126
        %v1505 = vpop.permute.xlu0 %1504
        %1506 = vrot.lane.b32.xlu0 %v1213, 126
        %v1507 = vpop.permute.xlu0 %1506
        %1508 = vrot.lane.b32.xlu0 %v1214, 126
        %v1509 = vpop.permute.xlu0 %1508
        %1510 = vrot.lane.b32.xlu0 %v1215, 126
        %v1511 = vpop.permute.xlu0 %1510
        %1512 = vrot.lane.b32.xlu0 %v1216, 126
        %v1513 = vpop.permute.xlu0 %1512
        %1514 = vrot.lane.b32.xlu0 %v1217, 126
        %v1515 = vpop.permute.xlu0 %1514
        %1516 = vrot.lane.b32.xlu0 %v1218, 126
        %v1517 = vpop.permute.xlu0 %1516
        %1518 = vrot.lane.b32.xlu0 %v1219, 126
        %v1519 = vpop.permute.xlu0 %1518
        %1520 = vrot.lane.b32.xlu0 %v1220, 126
        %v1521 = vpop.permute.xlu0 %1520
        %1522 = vrot.lane.b32.xlu0 %v1221, 126
        %v1523 = vpop.permute.xlu0 %1522
        %1524 = vrot.lane.b32.xlu0 %v1222, 126
        %v1525 = vpop.permute.xlu0 %1524
        %1566 = vrot.lane.b32.xlu0 %v1466, 2
        %v1567 = vpop.permute.xlu0 %1566
        %1568 = vrot.lane.b32.xlu0 %v1467, 2
        %v1569 = vpop.permute.xlu0 %1568
        %1570 = vrot.lane.b32.xlu0 %v1468, 2
        %v1571 = vpop.permute.xlu0 %1570
        %1572 = vrot.lane.b32.xlu0 %v1469, 2
        %v1573 = vpop.permute.xlu0 %1572
        %1574 = vrot.lane.b32.xlu0 %v1470, 2
        %v1575 = vpop.permute.xlu0 %1574
        %1576 = vrot.lane.b32.xlu0 %v1471, 2
        %v1577 = vpop.permute.xlu0 %1576
        %1578 = vrot.lane.b32.xlu0 %v1472, 2
        %v1579 = vpop.permute.xlu0 %1578
        %1580 = vrot.lane.b32.xlu0 %v1473, 2
        %v1581 = vpop.permute.xlu0 %1580
        %1582 = vrot.lane.b32.xlu0 %v1474, 2
        %v1583 = vpop.permute.xlu0 %1582
        %1584 = vrot.lane.b32.xlu0 %v1475, 2
        %v1585 = vpop.permute.xlu0 %1584
        %1586 = vrot.lane.b32.xlu0 %v1476, 2
        %v1587 = vpop.permute.xlu0 %1586
        %1588 = vrot.lane.b32.xlu0 %v1477, 2
        %v1589 = vpop.permute.xlu0 %1588
        %1590 = vrot.lane.b32.xlu0 %v1478, 2
        %v1591 = vpop.permute.xlu0 %1590
        %1592 = vrot.lane.b32.xlu0 %v1479, 2
        %v1593 = vpop.permute.xlu0 %1592
        %1594 = vrot.lane.b32.xlu0 %v1480, 2
        %v1595 = vpop.permute.xlu0 %1594
        %1596 = vrot.lane.b32.xlu0 %v1481, 2
        %v1597 = vpop.permute.xlu0 %1596
        %1598 = vrot.lane.b32.xlu0 %v1482, 2
        %v1599 = vpop.permute.xlu0 %1598
        %1600 = vrot.lane.b32.xlu0 %v1483, 2
        %v1601 = vpop.permute.xlu0 %1600
        %1602 = vrot.lane.b32.xlu0 %v1484, 2
        %v1603 = vpop.permute.xlu0 %1602
        %1604 = vrot.lane.b32.xlu0 %v1485, 2
        %v1605 = vpop.permute.xlu0 %1604
        %v1626 = vsel %vm1404, %v1487, %v1567
        %v1627 = vsel %vm1404, %v1489, %v1569
        %v1628 = vsel %vm1404, %v1491, %v1571
        %v1629 = vsel %vm1404, %v1493, %v1573
        %v1630 = vsel %vm1404, %v1495, %v1575
        %v1631 = vsel %vm1404, %v1497, %v1577
        %v1632 = vsel %vm1404, %v1499, %v1579
        %v1633 = vsel %vm1404, %v1501, %v1581
        %v1634 = vsel %vm1404, %v1503, %v1583
        %v1635 = vsel %vm1404, %v1505, %v1585
        %v1636 = vsel %vm1404, %v1507, %v1587
        %v1637 = vsel %vm1404, %v1509, %v1589
        %v1638 = vsel %vm1404, %v1511, %v1591
        %v1639 = vsel %vm1404, %v1513, %v1593
        %v1640 = vsel %vm1404, %v1515, %v1595
        %v1641 = vsel %vm1404, %v1517, %v1597
        %v1642 = vsel %vm1404, %v1519, %v1599
        %v1643 = vsel %vm1404, %v1521, %v1601
        %v1644 = vsel %vm1404, %v1523, %v1603
        %v1645 = vsel %vm1404, %v1525, %v1605
        %v1646 = vlaneseq
        %v1647 = vshrl.u32 %v1646, 7
        %v1648 = vsub.s32 0, %v1647
        %v1649 = vrot.slane %v692, %v1648
        %v1650 = vmul.f32 %v1405, %v1649
        %v1651 = vmul.f32 %v1406, %v1649
        %v1652 = vmul.f32 %v1407, %v1649
        %v1653 = vmul.f32 %v1408, %v1649
        %v1654 = vmul.f32 %v1409, %v1649
        %v1655 = vmul.f32 %v1410, %v1649
        %v1656 = vmul.f32 %v1411, %v1649
        %v1657 = vmul.f32 %v1412, %v1649
        %v1658 = vmul.f32 %v1413, %v1649
        %v1659 = vmul.f32 %v1414, %v1649
        %v1660 = vmul.f32 %v1415, %v1649
        %v1661 = vmul.f32 %v1416, %v1649
        %v1662 = vmul.f32 %v1417, %v1649
        %v1663 = vmul.f32 %v1418, %v1649
        %v1664 = vmul.f32 %v1419, %v1649
        %v1665 = vmul.f32 %v1420, %v1649
        %v1666 = vmul.f32 %v1421, %v1649
        %v1667 = vmul.f32 %v1422, %v1649
        %v1668 = vadd.f32 %v1650, 0.0
        %v1669 = vadd.f32 %v1651, 0.0
        %v1670 = vadd.f32 %v1652, 0.0
        %v1671 = vadd.f32 %v1653, 0.0
        %v1672 = vadd.f32 %v1654, 0.0
        %v1673 = vadd.f32 %v1655, 0.0
        %v1674 = vadd.f32 %v1656, 0.0
        %v1675 = vadd.f32 %v1657, 0.0
        %v1676 = vadd.f32 %v1658, 0.0
        %v1677 = vadd.f32 %v1659, 0.0
        %v1678 = vadd.f32 %v1660, 0.0
        %v1679 = vadd.f32 %v1661, 0.0
        %v1680 = vadd.f32 %v1662, 0.0
        %v1681 = vadd.f32 %v1663, 0.0
        %v1682 = vadd.f32 %v1664, 0.0
        %v1683 = vadd.f32 %v1665, 0.0
        %v1684 = vadd.f32 %v1666, 0.0
        %v1685 = vadd.f32 %v1667, 0.0
        %v1686 = vlaneseq
        %v1687 = vshrl.u32 %v1686, 7
        %v1688 = vsub.s32 1, %v1687
        %v1689 = vrot.slane %v692, %v1688
        %v1690 = vmul.f32 %v1203, %v1689
        %v1691 = vmul.f32 %v1204, %v1689
        %v1692 = vmul.f32 %v1205, %v1689
        %v1693 = vmul.f32 %v1206, %v1689
        %v1694 = vmul.f32 %v1207, %v1689
        %v1695 = vmul.f32 %v1208, %v1689
        %v1696 = vmul.f32 %v1209, %v1689
        %v1697 = vmul.f32 %v1210, %v1689
        %v1698 = vmul.f32 %v1211, %v1689
        %v1699 = vmul.f32 %v1212, %v1689
        %v1700 = vmul.f32 %v1213, %v1689
        %v1701 = vmul.f32 %v1214, %v1689
        %v1702 = vmul.f32 %v1215, %v1689
        %v1703 = vmul.f32 %v1216, %v1689
        %v1704 = vmul.f32 %v1217, %v1689
        %v1705 = vmul.f32 %v1218, %v1689
        %v1706 = vmul.f32 %v1219, %v1689
        %v1707 = vmul.f32 %v1220, %v1689
        %v1708 = vadd.f32 %v1668, %v1690
        %v1709 = vadd.f32 %v1669, %v1691
        %v1710 = vadd.f32 %v1670, %v1692
        %v1711 = vadd.f32 %v1671, %v1693
        %v1712 = vadd.f32 %v1672, %v1694
        %v1713 = vadd.f32 %v1673, %v1695
        %v1714 = vadd.f32 %v1674, %v1696
        %v1715 = vadd.f32 %v1675, %v1697
        %v1716 = vadd.f32 %v1676, %v1698
        %v1717 = vadd.f32 %v1677, %v1699
        %v1718 = vadd.f32 %v1678, %v1700
        %v1719 = vadd.f32 %v1679, %v1701
        %v1720 = vadd.f32 %v1680, %v1702
        %v1721 = vadd.f32 %v1681, %v1703
        %v1722 = vadd.f32 %v1682, %v1704
        %v1723 = vadd.f32 %v1683, %v1705
        %v1724 = vadd.f32 %v1684, %v1706
        %v1725 = vadd.f32 %v1685, %v1707
        %v1726 = vlaneseq
        %v1727 = vshrl.u32 %v1726, 7
        %v1728 = vsub.s32 2, %v1727
        %v1729 = vrot.slane %v692, %v1728
        %v1730 = vmul.f32 %v1626, %v1729
        %v1731 = vmul.f32 %v1627, %v1729
        %v1732 = vmul.f32 %v1628, %v1729
        %v1733 = vmul.f32 %v1629, %v1729
        %v1734 = vmul.f32 %v1630, %v1729
        %v1735 = vmul.f32 %v1631, %v1729
        %v1736 = vmul.f32 %v1632, %v1729
        %v1737 = vmul.f32 %v1633, %v1729
        %v1738 = vmul.f32 %v1634, %v1729
        %v1739 = vmul.f32 %v1635, %v1729
        %v1740 = vmul.f32 %v1636, %v1729
        %v1741 = vmul.f32 %v1637, %v1729
        %v1742 = vmul.f32 %v1638, %v1729
        %v1743 = vmul.f32 %v1639, %v1729
        %v1744 = vmul.f32 %v1640, %v1729
        %v1745 = vmul.f32 %v1641, %v1729
        %v1746 = vmul.f32 %v1642, %v1729
        %v1747 = vmul.f32 %v1643, %v1729
        %v1748 = vadd.f32 %v1708, %v1730
        %v1749 = vadd.f32 %v1709, %v1731
        %v1750 = vadd.f32 %v1710, %v1732
        %v1751 = vadd.f32 %v1711, %v1733
        %v1752 = vadd.f32 %v1712, %v1734
        %v1753 = vadd.f32 %v1713, %v1735
        %v1754 = vadd.f32 %v1714, %v1736
        %v1755 = vadd.f32 %v1715, %v1737
        %v1756 = vadd.f32 %v1716, %v1738
        %v1757 = vadd.f32 %v1717, %v1739
        %v1758 = vadd.f32 %v1718, %v1740
        %v1759 = vadd.f32 %v1719, %v1741
        %v1760 = vadd.f32 %v1720, %v1742
        %v1761 = vadd.f32 %v1721, %v1743
        %v1762 = vadd.f32 %v1722, %v1744
        %v1763 = vadd.f32 %v1723, %v1745
        %v1764 = vadd.f32 %v1724, %v1746
        %v1765 = vadd.f32 %v1725, %v1747
        %v1766 = vlaneseq
        %v1767 = vshrl.u32 %v1766, 7
        %v1768 = vsub.s32 0, %v1767
        %v1769 = vrot.slane %v693, %v1768
        %v1770 = vmul.f32 %v1406, %v1769
        %v1771 = vmul.f32 %v1407, %v1769
        %v1772 = vmul.f32 %v1408, %v1769
        %v1773 = vmul.f32 %v1409, %v1769
        %v1774 = vmul.f32 %v1410, %v1769
        %v1775 = vmul.f32 %v1411, %v1769
        %v1776 = vmul.f32 %v1412, %v1769
        %v1777 = vmul.f32 %v1413, %v1769
        %v1778 = vmul.f32 %v1414, %v1769
        %v1779 = vmul.f32 %v1415, %v1769
        %v1780 = vmul.f32 %v1416, %v1769
        %v1781 = vmul.f32 %v1417, %v1769
        %v1782 = vmul.f32 %v1418, %v1769
        %v1783 = vmul.f32 %v1419, %v1769
        %v1784 = vmul.f32 %v1420, %v1769
        %v1785 = vmul.f32 %v1421, %v1769
        %v1786 = vmul.f32 %v1422, %v1769
        %v1787 = vmul.f32 %v1423, %v1769
        %v1788 = vadd.f32 %v1748, %v1770
        %v1789 = vadd.f32 %v1749, %v1771
        %v1790 = vadd.f32 %v1750, %v1772
        %v1791 = vadd.f32 %v1751, %v1773
        %v1792 = vadd.f32 %v1752, %v1774
        %v1793 = vadd.f32 %v1753, %v1775
        %v1794 = vadd.f32 %v1754, %v1776
        %v1795 = vadd.f32 %v1755, %v1777
        %v1796 = vadd.f32 %v1756, %v1778
        %v1797 = vadd.f32 %v1757, %v1779
        %v1798 = vadd.f32 %v1758, %v1780
        %v1799 = vadd.f32 %v1759, %v1781
        %v1800 = vadd.f32 %v1760, %v1782
        %v1801 = vadd.f32 %v1761, %v1783
        %v1802 = vadd.f32 %v1762, %v1784
        %v1803 = vadd.f32 %v1763, %v1785
        %v1804 = vadd.f32 %v1764, %v1786
        %v1805 = vadd.f32 %v1765, %v1787
        %v1806 = vlaneseq
        %v1807 = vshrl.u32 %v1806, 7
        %v1808 = vsub.s32 1, %v1807
        %v1809 = vrot.slane %v693, %v1808
        %v1810 = vmul.f32 %v1204, %v1809
        %v1811 = vmul.f32 %v1205, %v1809
        %v1812 = vmul.f32 %v1206, %v1809
        %v1813 = vmul.f32 %v1207, %v1809
        %v1814 = vmul.f32 %v1208, %v1809
        %v1815 = vmul.f32 %v1209, %v1809
        %v1816 = vmul.f32 %v1210, %v1809
        %v1817 = vmul.f32 %v1211, %v1809
        %v1818 = vmul.f32 %v1212, %v1809
        %v1819 = vmul.f32 %v1213, %v1809
        %v1820 = vmul.f32 %v1214, %v1809
        %v1821 = vmul.f32 %v1215, %v1809
        %v1822 = vmul.f32 %v1216, %v1809
        %v1823 = vmul.f32 %v1217, %v1809
        %v1824 = vmul.f32 %v1218, %v1809
        %v1825 = vmul.f32 %v1219, %v1809
        %v1826 = vmul.f32 %v1220, %v1809
        %v1827 = vmul.f32 %v1221, %v1809
        %v1828 = vadd.f32 %v1788, %v1810
        %v1829 = vadd.f32 %v1789, %v1811
        %v1830 = vadd.f32 %v1790, %v1812
        %v1831 = vadd.f32 %v1791, %v1813
        %v1832 = vadd.f32 %v1792, %v1814
        %v1833 = vadd.f32 %v1793, %v1815
        %v1834 = vadd.f32 %v1794, %v1816
        %v1835 = vadd.f32 %v1795, %v1817
        %v1836 = vadd.f32 %v1796, %v1818
        %v1837 = vadd.f32 %v1797, %v1819
        %v1838 = vadd.f32 %v1798, %v1820
        %v1839 = vadd.f32 %v1799, %v1821
        %v1840 = vadd.f32 %v1800, %v1822
        %v1841 = vadd.f32 %v1801, %v1823
        %v1842 = vadd.f32 %v1802, %v1824
        %v1843 = vadd.f32 %v1803, %v1825
        %v1844 = vadd.f32 %v1804, %v1826
        %v1845 = vadd.f32 %v1805, %v1827
        %v1846 = vlaneseq
        %v1847 = vshrl.u32 %v1846, 7
        %v1848 = vsub.s32 2, %v1847
        %v1849 = vrot.slane %v693, %v1848
        %v1850 = vmul.f32 %v1627, %v1849
        %v1851 = vmul.f32 %v1628, %v1849
        %v1852 = vmul.f32 %v1629, %v1849
        %v1853 = vmul.f32 %v1630, %v1849
        %v1854 = vmul.f32 %v1631, %v1849
        %v1855 = vmul.f32 %v1632, %v1849
        %v1856 = vmul.f32 %v1633, %v1849
        %v1857 = vmul.f32 %v1634, %v1849
        %v1858 = vmul.f32 %v1635, %v1849
        %v1859 = vmul.f32 %v1636, %v1849
        %v1860 = vmul.f32 %v1637, %v1849
        %v1861 = vmul.f32 %v1638, %v1849
        %v1862 = vmul.f32 %v1639, %v1849
        %v1863 = vmul.f32 %v1640, %v1849
        %v1864 = vmul.f32 %v1641, %v1849
        %v1865 = vmul.f32 %v1642, %v1849
        %v1866 = vmul.f32 %v1643, %v1849
        %v1867 = vmul.f32 %v1644, %v1849
        %v1868 = vadd.f32 %v1828, %v1850
        %v1869 = vadd.f32 %v1829, %v1851
        %v1870 = vadd.f32 %v1830, %v1852
        %v1871 = vadd.f32 %v1831, %v1853
        %v1872 = vadd.f32 %v1832, %v1854
        %v1873 = vadd.f32 %v1833, %v1855
        %v1874 = vadd.f32 %v1834, %v1856
        %v1875 = vadd.f32 %v1835, %v1857
        %v1876 = vadd.f32 %v1836, %v1858
        %v1877 = vadd.f32 %v1837, %v1859
        %v1878 = vadd.f32 %v1838, %v1860
        %v1879 = vadd.f32 %v1839, %v1861
        %v1880 = vadd.f32 %v1840, %v1862
        %v1881 = vadd.f32 %v1841, %v1863
        %v1882 = vadd.f32 %v1842, %v1864
        %v1883 = vadd.f32 %v1843, %v1865
        %v1884 = vadd.f32 %v1844, %v1866
        %v1885 = vadd.f32 %v1845, %v1867
        %v1886 = vlaneseq
        %v1887 = vshrl.u32 %v1886, 7
        %v1888 = vsub.s32 0, %v1887
        %v1889 = vrot.slane %v694, %v1888
        %v1890 = vmul.f32 %v1407, %v1889
        %v1891 = vmul.f32 %v1408, %v1889
        %v1892 = vmul.f32 %v1409, %v1889
        %v1893 = vmul.f32 %v1410, %v1889
        %v1894 = vmul.f32 %v1411, %v1889
        %v1895 = vmul.f32 %v1412, %v1889
        %v1896 = vmul.f32 %v1413, %v1889
        %v1897 = vmul.f32 %v1414, %v1889
        %v1898 = vmul.f32 %v1415, %v1889
        %v1899 = vmul.f32 %v1416, %v1889
        %v1900 = vmul.f32 %v1417, %v1889
        %v1901 = vmul.f32 %v1418, %v1889
        %v1902 = vmul.f32 %v1419, %v1889
        %v1903 = vmul.f32 %v1420, %v1889
        %v1904 = vmul.f32 %v1421, %v1889
        %v1905 = vmul.f32 %v1422, %v1889
        %v1906 = vmul.f32 %v1423, %v1889
        %v1907 = vmul.f32 %v1424, %v1889
        %v1908 = vadd.f32 %v1868, %v1890
        %v1909 = vadd.f32 %v1869, %v1891
        %v1910 = vadd.f32 %v1870, %v1892
        %v1911 = vadd.f32 %v1871, %v1893
        %v1912 = vadd.f32 %v1872, %v1894
        %v1913 = vadd.f32 %v1873, %v1895
        %v1914 = vadd.f32 %v1874, %v1896
        %v1915 = vadd.f32 %v1875, %v1897
        %v1916 = vadd.f32 %v1876, %v1898
        %v1917 = vadd.f32 %v1877, %v1899
        %v1918 = vadd.f32 %v1878, %v1900
        %v1919 = vadd.f32 %v1879, %v1901
        %v1920 = vadd.f32 %v1880, %v1902
        %v1921 = vadd.f32 %v1881, %v1903
        %v1922 = vadd.f32 %v1882, %v1904
        %v1923 = vadd.f32 %v1883, %v1905
        %v1924 = vadd.f32 %v1884, %v1906
        %v1925 = vadd.f32 %v1885, %v1907
        %v1926 = vlaneseq
        %v1927 = vshrl.u32 %v1926, 7
        %v1928 = vsub.s32 1, %v1927
        %v1929 = vrot.slane %v694, %v1928
        %v1930 = vmul.f32 %v1205, %v1929
        %v1931 = vmul.f32 %v1206, %v1929
        %v1932 = vmul.f32 %v1207, %v1929
        %v1933 = vmul.f32 %v1208, %v1929
        %v1934 = vmul.f32 %v1209, %v1929
        %v1935 = vmul.f32 %v1210, %v1929
        %v1936 = vmul.f32 %v1211, %v1929
        %v1937 = vmul.f32 %v1212, %v1929
        %v1938 = vmul.f32 %v1213, %v1929
        %v1939 = vmul.f32 %v1214, %v1929
        %v1940 = vmul.f32 %v1215, %v1929
        %v1941 = vmul.f32 %v1216, %v1929
        %v1942 = vmul.f32 %v1217, %v1929
        %v1943 = vmul.f32 %v1218, %v1929
        %v1944 = vmul.f32 %v1219, %v1929
        %v1945 = vmul.f32 %v1220, %v1929
        %v1946 = vmul.f32 %v1221, %v1929
        %v1947 = vmul.f32 %v1222, %v1929
        %v1948 = vadd.f32 %v1908, %v1930
        %v1949 = vadd.f32 %v1909, %v1931
        %v1950 = vadd.f32 %v1910, %v1932
        %v1951 = vadd.f32 %v1911, %v1933
        %v1952 = vadd.f32 %v1912, %v1934
        %v1953 = vadd.f32 %v1913, %v1935
        %v1954 = vadd.f32 %v1914, %v1936
        %v1955 = vadd.f32 %v1915, %v1937
        %v1956 = vadd.f32 %v1916, %v1938
        %v1957 = vadd.f32 %v1917, %v1939
        %v1958 = vadd.f32 %v1918, %v1940
        %v1959 = vadd.f32 %v1919, %v1941
        %v1960 = vadd.f32 %v1920, %v1942
        %v1961 = vadd.f32 %v1921, %v1943
        %v1962 = vadd.f32 %v1922, %v1944
        %v1963 = vadd.f32 %v1923, %v1945
        %v1964 = vadd.f32 %v1924, %v1946
        %v1965 = vadd.f32 %v1925, %v1947
        %v1966 = vlaneseq
        %v1967 = vshrl.u32 %v1966, 7
        %v1968 = vsub.s32 2, %v1967
        %v1969 = vrot.slane %v694, %v1968
        %v1970 = vmul.f32 %v1628, %v1969
        %v1971 = vmul.f32 %v1629, %v1969
        %v1972 = vmul.f32 %v1630, %v1969
        %v1973 = vmul.f32 %v1631, %v1969
        %v1974 = vmul.f32 %v1632, %v1969
        %v1975 = vmul.f32 %v1633, %v1969
        %v1976 = vmul.f32 %v1634, %v1969
        %v1977 = vmul.f32 %v1635, %v1969
        %v1978 = vmul.f32 %v1636, %v1969
        %v1979 = vmul.f32 %v1637, %v1969
        %v1980 = vmul.f32 %v1638, %v1969
        %v1981 = vmul.f32 %v1639, %v1969
        %v1982 = vmul.f32 %v1640, %v1969
        %v1983 = vmul.f32 %v1641, %v1969
        %v1984 = vmul.f32 %v1642, %v1969
        %v1985 = vmul.f32 %v1643, %v1969
        %v1986 = vmul.f32 %v1644, %v1969
        %v1987 = vmul.f32 %v1645, %v1969
        %v1988 = vadd.f32 %v1948, %v1970
        %v1989 = vadd.f32 %v1949, %v1971
        %v1990 = vadd.f32 %v1950, %v1972
        %v1991 = vadd.f32 %v1951, %v1973
        %v1992 = vadd.f32 %v1952, %v1974
        %v1993 = vadd.f32 %v1953, %v1975
        %v1994 = vadd.f32 %v1954, %v1976
        %v1995 = vadd.f32 %v1955, %v1977
        %v1996 = vadd.f32 %v1956, %v1978
        %v1997 = vadd.f32 %v1957, %v1979
        %v1998 = vadd.f32 %v1958, %v1980
        %v1999 = vadd.f32 %v1959, %v1981
        %v2000 = vadd.f32 %v1960, %v1982
        %v2001 = vadd.f32 %v1961, %v1983
        %v2002 = vadd.f32 %v1962, %v1984
        %v2003 = vadd.f32 %v1963, %v1985
        %v2004 = vadd.f32 %v1964, %v1986
        %v2005 = vadd.f32 %v1965, %v1987
        %v2006 = vlaneseq
        %v2007 = vshrl.u32 %v2006, 7
        %v2008 = vsub.s32 0, %v2007
        %v2009 = vrot.slane %v701, %v2008
        %v2010 = vadd.f32 %v1988, %v2009
        %v2011 = vadd.f32 %v1989, %v2009
        %v2012 = vadd.f32 %v1990, %v2009
        %v2013 = vadd.f32 %v1991, %v2009
        %v2014 = vadd.f32 %v1992, %v2009
        %v2015 = vadd.f32 %v1993, %v2009
        %v2016 = vadd.f32 %v1994, %v2009
        %v2017 = vadd.f32 %v1995, %v2009
        %v2018 = vadd.f32 %v1996, %v2009
        %v2019 = vadd.f32 %v1997, %v2009
        %v2020 = vadd.f32 %v1998, %v2009
        %v2021 = vadd.f32 %v1999, %v2009
        %v2022 = vadd.f32 %v2000, %v2009
        %v2023 = vadd.f32 %v2001, %v2009
        %v2024 = vadd.f32 %v2002, %v2009
        %v2025 = vadd.f32 %v2003, %v2009
        %v2026 = vadd.f32 %v2004, %v2009
        %v2027 = vadd.f32 %v2005, %v2009
        %2046 = vrot.lane.b32.xlu0 %v2010, 4
        %v2047 = vpop.permute.xlu0 %2046
        %2048 = vrot.lane.b32.xlu0 %v2011, 4
        %v2049 = vpop.permute.xlu0 %2048
        %2050 = vrot.lane.b32.xlu0 %v2012, 4
        %v2051 = vpop.permute.xlu0 %2050
        %2052 = vrot.lane.b32.xlu0 %v2013, 4
        %v2053 = vpop.permute.xlu0 %2052
        %2054 = vrot.lane.b32.xlu0 %v2014, 4
        %v2055 = vpop.permute.xlu0 %2054
        %2056 = vrot.lane.b32.xlu0 %v2015, 4
        %v2057 = vpop.permute.xlu0 %2056
        %2058 = vrot.lane.b32.xlu0 %v2016, 4
        %v2059 = vpop.permute.xlu0 %2058
        %2060 = vrot.lane.b32.xlu0 %v2017, 4
        %v2061 = vpop.permute.xlu0 %2060
        %2062 = vrot.lane.b32.xlu0 %v2018, 4
        %v2063 = vpop.permute.xlu0 %2062
        %2064 = vrot.lane.b32.xlu0 %v2019, 4
        %v2065 = vpop.permute.xlu0 %2064
        %2066 = vrot.lane.b32.xlu0 %v2020, 4
        %v2067 = vpop.permute.xlu0 %2066
        %2068 = vrot.lane.b32.xlu0 %v2021, 4
        %v2069 = vpop.permute.xlu0 %2068
        %2070 = vrot.lane.b32.xlu0 %v2022, 4
        %v2071 = vpop.permute.xlu0 %2070
        %2072 = vrot.lane.b32.xlu0 %v2023, 4
        %v2073 = vpop.permute.xlu0 %2072
        %2074 = vrot.lane.b32.xlu0 %v2024, 4
        %v2075 = vpop.permute.xlu0 %2074
        %2076 = vrot.lane.b32.xlu0 %v2025, 4
        %v2077 = vpop.permute.xlu0 %2076
        %2078 = vrot.lane.b32.xlu0 %v2026, 4
        %v2079 = vpop.permute.xlu0 %2078
        %2080 = vrot.lane.b32.xlu0 %v2027, 4
        %v2081 = vpop.permute.xlu0 %2080
        %vm2100 = vcmask 31744
        %v2101 = vsel %vm2100, %v1204, %v2047
        %v2102 = vsel %vm2100, %v1205, %v2049
        %v2103 = vsel %vm2100, %v1206, %v2051
        %v2104 = vsel %vm2100, %v1207, %v2053
        %v2105 = vsel %vm2100, %v1208, %v2055
        %v2106 = vsel %vm2100, %v1209, %v2057
        %v2107 = vsel %vm2100, %v1210, %v2059
        %v2108 = vsel %vm2100, %v1211, %v2061
        %v2109 = vsel %vm2100, %v1212, %v2063
        %v2110 = vsel %vm2100, %v1213, %v2065
        %v2111 = vsel %vm2100, %v1214, %v2067
        %v2112 = vsel %vm2100, %v1215, %v2069
        %v2113 = vsel %vm2100, %v1216, %v2071
        %v2114 = vsel %vm2100, %v1217, %v2073
        %v2115 = vsel %vm2100, %v1218, %v2075
        %v2116 = vsel %vm2100, %v1219, %v2077
        %v2117 = vsel %vm2100, %v1220, %v2079
        %v2118 = vsel %vm2100, %v1221, %v2081
        %v2119 = vmul.f32 %v2101, 0.5
        %v2120 = vmul.f32 %v2102, 0.5
        %v2121 = vmul.f32 %v2103, 0.5
        %v2122 = vmul.f32 %v2104, 0.5
        %v2123 = vmul.f32 %v2105, 0.5
        %v2124 = vmul.f32 %v2106, 0.5
        %v2125 = vmul.f32 %v2107, 0.5
        %v2126 = vmul.f32 %v2108, 0.5
        %v2127 = vmul.f32 %v2109, 0.5
        %v2128 = vmul.f32 %v2110, 0.5
        %v2129 = vmul.f32 %v2111, 0.5
        %v2130 = vmul.f32 %v2112, 0.5
        %v2131 = vmul.f32 %v2113, 0.5
        %v2132 = vmul.f32 %v2114, 0.5
        %v2133 = vmul.f32 %v2115, 0.5
        %v2134 = vmul.f32 %v2116, 0.5
        %v2135 = vmul.f32 %v2117, 0.5
        %v2136 = vmul.f32 %v2118, 0.5
        %v2137 = vmul.f32 %v2101, 0.044715
        %v2138 = vmul.f32 %v2102, 0.044715
        %v2139 = vmul.f32 %v2103, 0.044715
        %v2140 = vmul.f32 %v2104, 0.044715
        %v2141 = vmul.f32 %v2105, 0.044715
        %v2142 = vmul.f32 %v2106, 0.044715
        %v2143 = vmul.f32 %v2107, 0.044715
        %v2144 = vmul.f32 %v2108, 0.044715
        %v2145 = vmul.f32 %v2109, 0.044715
        %v2146 = vmul.f32 %v2110, 0.044715
        %v2147 = vmul.f32 %v2111, 0.044715
        %v2148 = vmul.f32 %v2112, 0.044715
        %v2149 = vmul.f32 %v2113, 0.044715
        %v2150 = vmul.f32 %v2114, 0.044715
        %v2151 = vmul.f32 %v2115, 0.044715
        %v2152 = vmul.f32 %v2116, 0.044715
        %v2153 = vmul.f32 %v2117, 0.044715
        %v2154 = vmul.f32 %v2118, 0.044715
        %v2155 = vmul.f32 %v2137, %v2101
        %v2156 = vmul.f32 %v2138, %v2102
        %v2157 = vmul.f32 %v2139, %v2103
        %v2158 = vmul.f32 %v2140, %v2104
        %v2159 = vmul.f32 %v2141, %v2105
        %v2160 = vmul.f32 %v2142, %v2106
        %v2161 = vmul.f32 %v2143, %v2107
        %v2162 = vmul.f32 %v2144, %v2108
        %v2163 = vmul.f32 %v2145, %v2109
        %v2164 = vmul.f32 %v2146, %v2110
        %v2165 = vmul.f32 %v2147, %v2111
        %v2166 = vmul.f32 %v2148, %v2112
        %v2167 = vmul.f32 %v2149, %v2113
        %v2168 = vmul.f32 %v2150, %v2114
        %v2169 = vmul.f32 %v2151, %v2115
        %v2170 = vmul.f32 %v2152, %v2116
        %v2171 = vmul.f32 %v2153, %v2117
        %v2172 = vmul.f32 %v2154, %v2118
        %v2173 = vmul.f32 %v2155, %v2101
        %v2174 = vmul.f32 %v2156, %v2102
        %v2175 = vmul.f32 %v2157, %v2103
        %v2176 = vmul.f32 %v2158, %v2104
        %v2177 = vmul.f32 %v2159, %v2105
        %v2178 = vmul.f32 %v2160, %v2106
        %v2179 = vmul.f32 %v2161, %v2107
        %v2180 = vmul.f32 %v2162, %v2108
        %v2181 = vmul.f32 %v2163, %v2109
        %v2182 = vmul.f32 %v2164, %v2110
        %v2183 = vmul.f32 %v2165, %v2111
        %v2184 = vmul.f32 %v2166, %v2112
        %v2185 = vmul.f32 %v2167, %v2113
        %v2186 = vmul.f32 %v2168, %v2114
        %v2187 = vmul.f32 %v2169, %v2115
        %v2188 = vmul.f32 %v2170, %v2116
        %v2189 = vmul.f32 %v2171, %v2117
        %v2190 = vmul.f32 %v2172, %v2118
        %v2191 = vadd.f32 %v2101, %v2173
        %v2192 = vadd.f32 %v2102, %v2174
        %v2193 = vadd.f32 %v2103, %v2175
        %v2194 = vadd.f32 %v2104, %v2176
        %v2195 = vadd.f32 %v2105, %v2177
        %v2196 = vadd.f32 %v2106, %v2178
        %v2197 = vadd.f32 %v2107, %v2179
        %v2198 = vadd.f32 %v2108, %v2180
        %v2199 = vadd.f32 %v2109, %v2181
        %v2200 = vadd.f32 %v2110, %v2182
        %v2201 = vadd.f32 %v2111, %v2183
        %v2202 = vadd.f32 %v2112, %v2184
        %v2203 = vadd.f32 %v2113, %v2185
        %v2204 = vadd.f32 %v2114, %v2186
        %v2205 = vadd.f32 %v2115, %v2187
        %v2206 = vadd.f32 %v2116, %v2188
        %v2207 = vadd.f32 %v2117, %v2189
        %v2208 = vadd.f32 %v2118, %v2190
        %v2209 = vmul.f32 %v2191, 0.7978846
        %v2210 = vmul.f32 %v2192, 0.7978846
        %v2211 = vmul.f32 %v2193, 0.7978846
        %v2212 = vmul.f32 %v2194, 0.7978846
        %v2213 = vmul.f32 %v2195, 0.7978846
        %v2214 = vmul.f32 %v2196, 0.7978846
        %v2215 = vmul.f32 %v2197, 0.7978846
        %v2216 = vmul.f32 %v2198, 0.7978846
        %v2217 = vmul.f32 %v2199, 0.7978846
        %v2218 = vmul.f32 %v2200, 0.7978846
        %v2219 = vmul.f32 %v2201, 0.7978846
        %v2220 = vmul.f32 %v2202, 0.7978846
        %v2221 = vmul.f32 %v2203, 0.7978846
        %v2222 = vmul.f32 %v2204, 0.7978846
        %v2223 = vmul.f32 %v2205, 0.7978846
        %v2224 = vmul.f32 %v2206, 0.7978846
        %v2225 = vmul.f32 %v2207, 0.7978846
        %v2226 = vmul.f32 %v2208, 0.7978846
        %v2227 = vtanh.pop %v2209
        %v2228 = vtanh.pop %v2210
        %v2229 = vtanh.pop %v2211
        %v2230 = vtanh.pop %v2212
        %v2231 = vtanh.pop %v2213
        %v2232 = vtanh.pop %v2214
        %v2233 = vtanh.pop %v2215
        %v2234 = vtanh.pop %v2216
        %v2235 = vtanh.pop %v2217
        %v2236 = vtanh.pop %v2218
        %v2237 = vtanh.pop %v2219
        %v2238 = vtanh.pop %v2220
        %v2239 = vtanh.pop %v2221
        %v2240 = vtanh.pop %v2222
        %v2241 = vtanh.pop %v2223
        %v2242 = vtanh.pop %v2224
        %v2243 = vtanh.pop %v2225
        %v2244 = vtanh.pop %v2226
        %v2245 = vadd.f32 %v2227, 1.0
        %v2246 = vadd.f32 %v2228, 1.0
        %v2247 = vadd.f32 %v2229, 1.0
        %v2248 = vadd.f32 %v2230, 1.0
        %v2249 = vadd.f32 %v2231, 1.0
        %v2250 = vadd.f32 %v2232, 1.0
        %v2251 = vadd.f32 %v2233, 1.0
        %v2252 = vadd.f32 %v2234, 1.0
        %v2253 = vadd.f32 %v2235, 1.0
        %v2254 = vadd.f32 %v2236, 1.0
        %v2255 = vadd.f32 %v2237, 1.0
        %v2256 = vadd.f32 %v2238, 1.0
        %v2257 = vadd.f32 %v2239, 1.0
        %v2258 = vadd.f32 %v2240, 1.0
        %v2259 = vadd.f32 %v2241, 1.0
        %v2260 = vadd.f32 %v2242, 1.0
        %v2261 = vadd.f32 %v2243, 1.0
        %v2262 = vadd.f32 %v2244, 1.0
        %v2263 = vmul.f32 %v2119, %v2245
        %v2264 = vmul.f32 %v2120, %v2246
        %v2265 = vmul.f32 %v2121, %v2247
        %v2266 = vmul.f32 %v2122, %v2248
        %v2267 = vmul.f32 %v2123, %v2249
        %v2268 = vmul.f32 %v2124, %v2250
        %v2269 = vmul.f32 %v2125, %v2251
        %v2270 = vmul.f32 %v2126, %v2252
        %v2271 = vmul.f32 %v2127, %v2253
        %v2272 = vmul.f32 %v2128, %v2254
        %v2273 = vmul.f32 %v2129, %v2255
        %v2274 = vmul.f32 %v2130, %v2256
        %v2275 = vmul.f32 %v2131, %v2257
        %v2276 = vmul.f32 %v2132, %v2258
        %v2277 = vmul.f32 %v2133, %v2259
        %v2278 = vmul.f32 %v2134, %v2260
        %v2279 = vmul.f32 %v2135, %v2261
        %v2280 = vmul.f32 %v2136, %v2262
        %v2282 = vsel %vm715, %v2263, 0
        %v2285 = vsel %vm715, %v2264, 0
        %v2288 = vsel %vm715, %v2265, 0
        %v2291 = vsel %vm715, %v2266, 0
        %v2294 = vsel %vm715, %v2267, 0
        %v2297 = vsel %vm715, %v2268, 0
        %v2300 = vsel %vm715, %v2269, 0
        %v2303 = vsel %vm715, %v2270, 0
        %v2306 = vsel %vm715, %v2271, 0
        %v2309 = vsel %vm715, %v2272, 0
        %v2312 = vsel %vm715, %v2273, 0
        %v2315 = vsel %vm715, %v2274, 0
        %v2318 = vsel %vm715, %v2275, 0
        %v2321 = vsel %vm715, %v2276, 0
        %v2324 = vsel %vm715, %v2277, 0
        %v2327 = vsel %vm715, %v2278, 0
        %v2330 = vsel %vm715, %v2279, 0
        %v2333 = vsel %vm715, %v2280, 0
        %2335 = vmatprep.subr.mxu0 0.0
        %2336 = vmatpush1.msra.mxu0 %v691
        %2337 = vmatprep.subr.mxu0 0.0
        %2338 = vmatpush1.msra.mxu0 0.0
        %2339 = vmatprep.subr.mxu0 0.0
        %2340 = vmatpush1.msra.mxu0 0.0
        %2341 = vmatprep.subr.mxu0 0.0
        %2342 = vmatpush1.msra.mxu0 0.0
        %2343 = vmatprep.subr.mxu0 0.0
        %2344 = vmatpush1.msra.mxu0 0.0
        %2345 = vmatprep.subr.mxu0 0.0
        %2346 = vmatpush1.msra.mxu0 0.0
        %2347 = vmatprep.subr.mxu0 0.0
        %2348 = vmatpush1.msra.mxu0 0.0
        %2349 = vmatprep.subr.mxu0 0.0
        %2350 = vmatpush1.msra.mxu0 0.0
        %2351 = vmatprep.subr.mxu0 0.0
        %2352 = vmatpush1.msra.mxu0 0.0
        %2353 = vmatprep.subr.mxu0 0.0
        %2354 = vmatpush1.msra.mxu0 0.0
        %2355 = vmatprep.subr.mxu0 0.0
        %2356 = vmatpush1.msra.mxu0 0.0
        %2357 = vmatprep.subr.mxu0 0.0
        %2358 = vmatpush1.msra.mxu0 0.0
        %2359 = vmatprep.subr.mxu0 0.0
        %2360 = vmatpush1.msra.mxu0 0.0
        %2361 = vmatprep.subr.mxu0 0.0
        %2362 = vmatpush1.msra.mxu0 0.0
        %2363 = vmatprep.subr.mxu0 0.0
        %2364 = vmatpush1.msra.mxu0 0.0
        %2365 = vmatprep.subr.mxu0 0.0
        %2366 = vmatpush1.msra.mxu0 0.0
        %2367 = vmatprep.subr.mxu0 0.0
        %2368 = vmatpush1.msra.mxu0 0.0
        %2369 = vmatprep.subr.mxu0 0.0
        %2370 = vmatpush1.msra.mxu0 0.0
        %2371 = vmatprep.subr.mxu0 0.0
        %2372 = vmatpush1.msra.mxu0 0.0
        %2373 = vmatprep.subr.mxu0 0.0
        %2374 = vmatpush1.msra.mxu0 0.0
        %2375 = vmatprep.subr.mxu0 0.0
        %2376 = vmatpush1.msra.mxu0 0.0
        %2377 = vmatprep.subr.mxu0 0.0
        %2378 = vmatpush1.msra.mxu0 0.0
        %2379 = vmatprep.subr.mxu0 0.0
        %2380 = vmatpush1.msra.mxu0 0.0
        %2381 = vmatprep.subr.mxu0 0.0
        %2382 = vmatpush1.msra.mxu0 0.0
        %2383 = vmatprep.subr.mxu0 0.0
        %2384 = vmatpush1.msra.mxu0 0.0
        %2385 = vmatprep.subr.mxu0 0.0
        %2386 = vmatpush1.msra.mxu0 0.0
        %2387 = vmatprep.subr.mxu0 0.0
        %2388 = vmatpush1.msra.mxu0 0.0
        %2389 = vmatprep.subr.mxu0 0.0
        %2390 = vmatpush1.msra.mxu0 0.0
        %2391 = vmatprep.subr.mxu0 0.0
        %2392 = vmatpush1.msra.mxu0 0.0
        %2393 = vmatprep.subr.mxu0 0.0
        %2394 = vmatpush1.msra.mxu0 0.0
        %2395 = vmatprep.subr.mxu0 0.0
        %2396 = vmatpush1.msra.mxu0 0.0
        %2397 = vmatprep.subr.mxu0 0.0
        %2398 = vmatpush1.msra.mxu0 0.0
        %2399 = vmatprep.mubr.f32.mxu0 0.0
        %2400 = vmatmul.mubr.f32.gmra.mrb[0].mxu0 %v2282
        %v2401 = vpop.f32.mrb[0].mxu0
        %v2402 = vadd.f32 0.0, %v2401
        %v2403 = vpop.f32.mrb[0].mxu0
        %2404 = vmatprep.mubr.f32.mxu0 0.0
        %2405 = vmatmul.mubr.f32.gmra.mrb[0].mxu0 %v2285
        %v2406 = vpop.f32.mrb[0].mxu0
        %v2407 = vadd.f32 0.0, %v2406
        %v2408 = vpop.f32.mrb[0].mxu0
        %2409 = vmatprep.mubr.f32.mxu0 0.0
        %2410 = vmatmul.mubr.f32.gmra.mrb[0].mxu0 %v2288
        %v2411 = vpop.f32.mrb[0].mxu0
        %v2412 = vadd.f32 0.0, %v2411
        %v2413 = vpop.f32.mrb[0].mxu0
        %2414 = vmatprep.mubr.f32.mxu0 0.0
        %2415 = vmatmul.mubr.f32.gmra.mrb[0].mxu0 %v2291
        %v2416 = vpop.f32.mrb[0].mxu0
        %v2417 = vadd.f32 0.0, %v2416
        %v2418 = vpop.f32.mrb[0].mxu0
        %2419 = vmatprep.mubr.f32.mxu0 0.0
        %2420 = vmatmul.mubr.f32.gmra.mrb[0].mxu0 %v2294
        %v2421 = vpop.f32.mrb[0].mxu0
        %v2422 = vadd.f32 0.0, %v2421
        %v2423 = vpop.f32.mrb[0].mxu0
        %2424 = vmatprep.mubr.f32.mxu0 0.0
        %2425 = vmatmul.mubr.f32.gmra.mrb[0].mxu0 %v2297
        %v2426 = vpop.f32.mrb[0].mxu0
        %v2427 = vadd.f32 0.0, %v2426
        %v2428 = vpop.f32.mrb[0].mxu0
        %2429 = vmatprep.mubr.f32.mxu0 0.0
        %2430 = vmatmul.mubr.f32.gmra.mrb[0].mxu0 %v2300
        %v2431 = vpop.f32.mrb[0].mxu0
        %v2432 = vadd.f32 0.0, %v2431
        %v2433 = vpop.f32.mrb[0].mxu0
        %2434 = vmatprep.mubr.f32.mxu0 0.0
        %2435 = vmatmul.mubr.f32.gmra.mrb[0].mxu0 %v2303
        %v2436 = vpop.f32.mrb[0].mxu0
        %v2437 = vadd.f32 0.0, %v2436
        %v2438 = vpop.f32.mrb[0].mxu0
        %2439 = vmatprep.mubr.f32.mxu0 0.0
        %2440 = vmatmul.mubr.f32.gmra.mrb[0].mxu0 %v2306
        %v2441 = vpop.f32.mrb[0].mxu0
        %v2442 = vadd.f32 0.0, %v2441
        %v2443 = vpop.f32.mrb[0].mxu0
        %2444 = vmatprep.mubr.f32.mxu0 0.0
        %2445 = vmatmul.mubr.f32.gmra.mrb[0].mxu0 %v2309
        %v2446 = vpop.f32.mrb[0].mxu0
        %v2447 = vadd.f32 0.0, %v2446
        %v2448 = vpop.f32.mrb[0].mxu0
        %2449 = vmatprep.mubr.f32.mxu0 0.0
        %2450 = vmatmul.mubr.f32.gmra.mrb[0].mxu0 %v2312
        %v2451 = vpop.f32.mrb[0].mxu0
        %v2452 = vadd.f32 0.0, %v2451
        %v2453 = vpop.f32.mrb[0].mxu0
        %2454 = vmatprep.mubr.f32.mxu0 0.0
        %2455 = vmatmul.mubr.f32.gmra.mrb[0].mxu0 %v2315
        %v2456 = vpop.f32.mrb[0].mxu0
        %v2457 = vadd.f32 0.0, %v2456
        %v2458 = vpop.f32.mrb[0].mxu0
        %2459 = vmatprep.mubr.f32.mxu0 0.0
        %2460 = vmatmul.mubr.f32.gmra.mrb[0].mxu0 %v2318
        %v2461 = vpop.f32.mrb[0].mxu0
        %v2462 = vadd.f32 0.0, %v2461
        %v2463 = vpop.f32.mrb[0].mxu0
        %2464 = vmatprep.mubr.f32.mxu0 0.0
        %2465 = vmatmul.mubr.f32.gmra.mrb[0].mxu0 %v2321
        %v2466 = vpop.f32.mrb[0].mxu0
        %v2467 = vadd.f32 0.0, %v2466
        %v2468 = vpop.f32.mrb[0].mxu0
        %2469 = vmatprep.mubr.f32.mxu0 0.0
        %2470 = vmatmul.mubr.f32.gmra.mrb[0].mxu0 %v2324
        %v2471 = vpop.f32.mrb[0].mxu0
        %v2472 = vadd.f32 0.0, %v2471
        %v2473 = vpop.f32.mrb[0].mxu0
        %2474 = vmatprep.mubr.f32.mxu0 0.0
        %2475 = vmatmul.mubr.f32.gmra.mrb[0].mxu0 %v2327
        %v2476 = vpop.f32.mrb[0].mxu0
        %v2477 = vadd.f32 0.0, %v2476
        %v2478 = vpop.f32.mrb[0].mxu0
        %2479 = vmatprep.mubr.f32.mxu0 0.0
        %2480 = vmatmul.mubr.f32.gmra.mrb[0].mxu0 %v2330
        %v2481 = vpop.f32.mrb[0].mxu0
        %v2482 = vadd.f32 0.0, %v2481
        %v2483 = vpop.f32.mrb[0].mxu0
        %2484 = vmatprep.mubr.f32.mxu0 0.0
        %2485 = vmatmul.mubr.f32.gmra.mrb[0].mxu0 %v2333
        %v2486 = vpop.f32.mrb[0].mxu0
        %v2487 = vadd.f32 0.0, %v2486
        %v2488 = vpop.f32.mrb[0].mxu0
        %2489 = vdwg.mxu0
        %v2490 = vlaneseq
        %v2491 = vshrl.u32 %v2490, 7
        %v2492 = vsub.s32 0, %v2491
        %v2493 = vrot.slane %v700, %v2492
        %v2494 = vadd.f32 %v2402, %v2493
        %v2495 = vadd.f32 %v2407, %v2493
        %v2496 = vadd.f32 %v2412, %v2493
        %v2497 = vadd.f32 %v2417, %v2493
        %v2498 = vadd.f32 %v2422, %v2493
        %v2499 = vadd.f32 %v2427, %v2493
        %v2500 = vadd.f32 %v2432, %v2493
        %v2501 = vadd.f32 %v2437, %v2493
        %v2502 = vadd.f32 %v2442, %v2493
        %v2503 = vadd.f32 %v2447, %v2493
        %v2504 = vadd.f32 %v2452, %v2493
        %v2505 = vadd.f32 %v2457, %v2493
        %v2506 = vadd.f32 %v2462, %v2493
        %v2507 = vadd.f32 %v2467, %v2493
        %v2508 = vadd.f32 %v2472, %v2493
        %v2509 = vadd.f32 %v2477, %v2493
        %v2510 = vadd.f32 %v2482, %v2493
        %v2511 = vadd.f32 %v2487, %v2493
        %v2512 = vmul.f32 %v2494, %v1200
        %v2513 = vmul.f32 %v2495, %v1201
        %v2514 = vmul.f32 %v2496, %v1201
        %v2515 = vmul.f32 %v2497, %v1201
        %v2516 = vmul.f32 %v2498, %v1201
        %v2517 = vmul.f32 %v2499, %v1201
        %v2518 = vmul.f32 %v2500, %v1201
        %v2519 = vmul.f32 %v2501, %v1201
        %v2520 = vmul.f32 %v2502, %v1201
        %v2521 = vmul.f32 %v2503, %v1201
        %v2522 = vmul.f32 %v2504, %v1201
        %v2523 = vmul.f32 %v2505, %v1201
        %v2524 = vmul.f32 %v2506, %v1201
        %v2525 = vmul.f32 %v2507, %v1201
        %v2526 = vmul.f32 %v2508, %v1201
        %v2527 = vmul.f32 %v2509, %v1201
        %v2528 = vmul.f32 %v2510, %v1201
        %v2529 = vmul.f32 %v2511, %v1202
        %v2548 = vrot.slane %v2512, 7
        %v2549 = vrot.slane %v2513, 7
        %v2550 = vrot.slane %v2514, 7
        %v2551 = vrot.slane %v2515, 7
        %v2552 = vrot.slane %v2516, 7
        %v2553 = vrot.slane %v2517, 7
        %v2554 = vrot.slane %v2518, 7
        %v2555 = vrot.slane %v2519, 7
        %v2556 = vrot.slane %v2520, 7
        %v2557 = vrot.slane %v2521, 7
        %v2558 = vrot.slane %v2522, 7
        %v2559 = vrot.slane %v2523, 7
        %v2560 = vrot.slane %v2524, 7
        %v2561 = vrot.slane %v2525, 7
        %v2562 = vrot.slane %v2526, 7
        %v2563 = vrot.slane %v2527, 7
        %v2564 = vrot.slane %v2528, 7
        %v2565 = vrot.slane %v2529, 7
        %2566 = vrot.lane.b32.xlu0 %v2548, 126
        %v2567 = vpop.permute.xlu0 %2566
        %2568 = vrot.lane.b32.xlu0 %v2549, 126
        %v2569 = vpop.permute.xlu0 %2568
        %2570 = vrot.lane.b32.xlu0 %v2550, 126
        %v2571 = vpop.permute.xlu0 %2570
        %2572 = vrot.lane.b32.xlu0 %v2551, 126
        %v2573 = vpop.permute.xlu0 %2572
        %2574 = vrot.lane.b32.xlu0 %v2552, 126
        %v2575 = vpop.permute.xlu0 %2574
        %2576 = vrot.lane.b32.xlu0 %v2553, 126
        %v2577 = vpop.permute.xlu0 %2576
        %2578 = vrot.lane.b32.xlu0 %v2554, 126
        %v2579 = vpop.permute.xlu0 %2578
        %2580 = vrot.lane.b32.xlu0 %v2555, 126
        %v2581 = vpop.permute.xlu0 %2580
        %2582 = vrot.lane.b32.xlu0 %v2556, 126
        %v2583 = vpop.permute.xlu0 %2582
        %2584 = vrot.lane.b32.xlu0 %v2557, 126
        %v2585 = vpop.permute.xlu0 %2584
        %2586 = vrot.lane.b32.xlu0 %v2558, 126
        %v2587 = vpop.permute.xlu0 %2586
        %2588 = vrot.lane.b32.xlu0 %v2559, 126
        %v2589 = vpop.permute.xlu0 %2588
        %2590 = vrot.lane.b32.xlu0 %v2560, 126
        %v2591 = vpop.permute.xlu0 %2590
        %2592 = vrot.lane.b32.xlu0 %v2561, 126
        %v2593 = vpop.permute.xlu0 %2592
        %2594 = vrot.lane.b32.xlu0 %v2562, 126
        %v2595 = vpop.permute.xlu0 %2594
        %2596 = vrot.lane.b32.xlu0 %v2563, 126
        %v2597 = vpop.permute.xlu0 %2596
        %2598 = vrot.lane.b32.xlu0 %v2564, 126
        %v2599 = vpop.permute.xlu0 %2598
        %2600 = vrot.lane.b32.xlu0 %v2565, 126
        %v2601 = vpop.permute.xlu0 %2600
        %v2620 = vsel %vm1323, 0.0, %v2567
        %v2621 = vsel %vm1323, 0.0, %v2569
        %v2622 = vsel %vm1323, 0.0, %v2571
        %v2623 = vsel %vm1323, 0.0, %v2573
        %v2624 = vsel %vm1323, 0.0, %v2575
        %v2625 = vsel %vm1323, 0.0, %v2577
        %v2626 = vsel %vm1323, 0.0, %v2579
        %v2627 = vsel %vm1323, 0.0, %v2581
        %v2628 = vsel %vm1323, 0.0, %v2583
        %v2629 = vsel %vm1323, 0.0, %v2585
        %v2630 = vsel %vm1323, 0.0, %v2587
        %v2631 = vsel %vm1323, 0.0, %v2589
        %v2632 = vsel %vm1323, 0.0, %v2591
        %v2633 = vsel %vm1323, 0.0, %v2593
        %v2634 = vsel %vm1323, 0.0, %v2595
        %v2635 = vsel %vm1323, 0.0, %v2597
        %v2636 = vsel %vm1323, 0.0, %v2599
        %v2637 = vsel %vm1323, 0.0, %v2601
        %2638 = vrot.lane.b32.xlu0 %v2512, 2
        %v2639 = vpop.permute.xlu0 %2638
        %2640 = vrot.lane.b32.xlu0 %v2513, 2
        %v2641 = vpop.permute.xlu0 %2640
        %2642 = vrot.lane.b32.xlu0 %v2514, 2
        %v2643 = vpop.permute.xlu0 %2642
        %2644 = vrot.lane.b32.xlu0 %v2515, 2
        %v2645 = vpop.permute.xlu0 %2644
        %2646 = vrot.lane.b32.xlu0 %v2516, 2
        %v2647 = vpop.permute.xlu0 %2646
        %2648 = vrot.lane.b32.xlu0 %v2517, 2
        %v2649 = vpop.permute.xlu0 %2648
        %2650 = vrot.lane.b32.xlu0 %v2518, 2
        %v2651 = vpop.permute.xlu0 %2650
        %2652 = vrot.lane.b32.xlu0 %v2519, 2
        %v2653 = vpop.permute.xlu0 %2652
        %2654 = vrot.lane.b32.xlu0 %v2520, 2
        %v2655 = vpop.permute.xlu0 %2654
        %2656 = vrot.lane.b32.xlu0 %v2521, 2
        %v2657 = vpop.permute.xlu0 %2656
        %2658 = vrot.lane.b32.xlu0 %v2522, 2
        %v2659 = vpop.permute.xlu0 %2658
        %2660 = vrot.lane.b32.xlu0 %v2523, 2
        %v2661 = vpop.permute.xlu0 %2660
        %2662 = vrot.lane.b32.xlu0 %v2524, 2
        %v2663 = vpop.permute.xlu0 %2662
        %2664 = vrot.lane.b32.xlu0 %v2525, 2
        %v2665 = vpop.permute.xlu0 %2664
        %2666 = vrot.lane.b32.xlu0 %v2526, 2
        %v2667 = vpop.permute.xlu0 %2666
        %2668 = vrot.lane.b32.xlu0 %v2527, 2
        %v2669 = vpop.permute.xlu0 %2668
        %2670 = vrot.lane.b32.xlu0 %v2528, 2
        %v2671 = vpop.permute.xlu0 %2670
        %2672 = vrot.lane.b32.xlu0 %v2529, 2
        %v2673 = vpop.permute.xlu0 %2672
        %v2692 = vsel %vm1404, %v2620, %v2639
        %v2693 = vsel %vm1404, %v2621, %v2641
        %v2694 = vsel %vm1404, %v2622, %v2643
        %v2695 = vsel %vm1404, %v2623, %v2645
        %v2696 = vsel %vm1404, %v2624, %v2647
        %v2697 = vsel %vm1404, %v2625, %v2649
        %v2698 = vsel %vm1404, %v2626, %v2651
        %v2699 = vsel %vm1404, %v2627, %v2653
        %v2700 = vsel %vm1404, %v2628, %v2655
        %v2701 = vsel %vm1404, %v2629, %v2657
        %v2702 = vsel %vm1404, %v2630, %v2659
        %v2703 = vsel %vm1404, %v2631, %v2661
        %v2704 = vsel %vm1404, %v2632, %v2663
        %v2705 = vsel %vm1404, %v2633, %v2665
        %v2706 = vsel %vm1404, %v2634, %v2667
        %v2707 = vsel %vm1404, %v2635, %v2669
        %v2708 = vsel %vm1404, %v2636, %v2671
        %v2709 = vsel %vm1404, %v2637, %v2673
        %v2710 = vrot.slane %v2512, 1
        %v2711 = vrot.slane %v2513, 1
        %v2712 = vrot.slane %v2514, 1
        %v2713 = vrot.slane %v2515, 1
        %v2714 = vrot.slane %v2516, 1
        %v2715 = vrot.slane %v2517, 1
        %v2716 = vrot.slane %v2518, 1
        %v2717 = vrot.slane %v2519, 1
        %v2718 = vrot.slane %v2520, 1
        %v2719 = vrot.slane %v2521, 1
        %v2720 = vrot.slane %v2522, 1
        %v2721 = vrot.slane %v2523, 1
        %v2722 = vrot.slane %v2524, 1
        %v2723 = vrot.slane %v2525, 1
        %v2724 = vrot.slane %v2526, 1
        %v2725 = vrot.slane %v2527, 1
        %v2726 = vrot.slane %v2528, 1
        %v2727 = vrot.slane %v2529, 1
        %v2746 = vsel %vm1465, %v2710, 0.0
        %v2747 = vsel %vm1465, %v2711, 0.0
        %v2748 = vsel %vm1465, %v2712, 0.0
        %v2749 = vsel %vm1465, %v2713, 0.0
        %v2750 = vsel %vm1465, %v2714, 0.0
        %v2751 = vsel %vm1465, %v2715, 0.0
        %v2752 = vsel %vm1465, %v2716, 0.0
        %v2753 = vsel %vm1465, %v2717, 0.0
        %v2754 = vsel %vm1465, %v2718, 0.0
        %v2755 = vsel %vm1465, %v2719, 0.0
        %v2756 = vsel %vm1465, %v2720, 0.0
        %v2757 = vsel %vm1465, %v2721, 0.0
        %v2758 = vsel %vm1465, %v2722, 0.0
        %v2759 = vsel %vm1465, %v2723, 0.0
        %v2760 = vsel %vm1465, %v2724, 0.0
        %v2761 = vsel %vm1465, %v2725, 0.0
        %v2762 = vsel %vm1465, %v2726, 0.0
        %v2763 = vsel %vm1465, %v2727, 0.0
        %2764 = vrot.lane.b32.xlu0 %v2512, 126
        %v2765 = vpop.permute.xlu0 %2764
        %2766 = vrot.lane.b32.xlu0 %v2513, 126
        %v2767 = vpop.permute.xlu0 %2766
        %2768 = vrot.lane.b32.xlu0 %v2514, 126
        %v2769 = vpop.permute.xlu0 %2768
        %2770 = vrot.lane.b32.xlu0 %v2515, 126
        %v2771 = vpop.permute.xlu0 %2770
        %2772 = vrot.lane.b32.xlu0 %v2516, 126
        %v2773 = vpop.permute.xlu0 %2772
        %2774 = vrot.lane.b32.xlu0 %v2517, 126
        %v2775 = vpop.permute.xlu0 %2774
        %2776 = vrot.lane.b32.xlu0 %v2518, 126
        %v2777 = vpop.permute.xlu0 %2776
        %2778 = vrot.lane.b32.xlu0 %v2519, 126
        %v2779 = vpop.permute.xlu0 %2778
        %2780 = vrot.lane.b32.xlu0 %v2520, 126
        %v2781 = vpop.permute.xlu0 %2780
        %2782 = vrot.lane.b32.xlu0 %v2521, 126
        %v2783 = vpop.permute.xlu0 %2782
        %2784 = vrot.lane.b32.xlu0 %v2522, 126
        %v2785 = vpop.permute.xlu0 %2784
        %2786 = vrot.lane.b32.xlu0 %v2523, 126
        %v2787 = vpop.permute.xlu0 %2786
        %2788 = vrot.lane.b32.xlu0 %v2524, 126
        %v2789 = vpop.permute.xlu0 %2788
        %2790 = vrot.lane.b32.xlu0 %v2525, 126
        %v2791 = vpop.permute.xlu0 %2790
        %2792 = vrot.lane.b32.xlu0 %v2526, 126
        %v2793 = vpop.permute.xlu0 %2792
        %2794 = vrot.lane.b32.xlu0 %v2527, 126
        %v2795 = vpop.permute.xlu0 %2794
        %2796 = vrot.lane.b32.xlu0 %v2528, 126
        %v2797 = vpop.permute.xlu0 %2796
        %2798 = vrot.lane.b32.xlu0 %v2529, 126
        %v2799 = vpop.permute.xlu0 %2798
        %2836 = vrot.lane.b32.xlu0 %v2746, 2
        %v2837 = vpop.permute.xlu0 %2836
        %2838 = vrot.lane.b32.xlu0 %v2747, 2
        %v2839 = vpop.permute.xlu0 %2838
        %2840 = vrot.lane.b32.xlu0 %v2748, 2
        %v2841 = vpop.permute.xlu0 %2840
        %2842 = vrot.lane.b32.xlu0 %v2749, 2
        %v2843 = vpop.permute.xlu0 %2842
        %2844 = vrot.lane.b32.xlu0 %v2750, 2
        %v2845 = vpop.permute.xlu0 %2844
        %2846 = vrot.lane.b32.xlu0 %v2751, 2
        %v2847 = vpop.permute.xlu0 %2846
        %2848 = vrot.lane.b32.xlu0 %v2752, 2
        %v2849 = vpop.permute.xlu0 %2848
        %2850 = vrot.lane.b32.xlu0 %v2753, 2
        %v2851 = vpop.permute.xlu0 %2850
        %2852 = vrot.lane.b32.xlu0 %v2754, 2
        %v2853 = vpop.permute.xlu0 %2852
        %2854 = vrot.lane.b32.xlu0 %v2755, 2
        %v2855 = vpop.permute.xlu0 %2854
        %2856 = vrot.lane.b32.xlu0 %v2756, 2
        %v2857 = vpop.permute.xlu0 %2856
        %2858 = vrot.lane.b32.xlu0 %v2757, 2
        %v2859 = vpop.permute.xlu0 %2858
        %2860 = vrot.lane.b32.xlu0 %v2758, 2
        %v2861 = vpop.permute.xlu0 %2860
        %2862 = vrot.lane.b32.xlu0 %v2759, 2
        %v2863 = vpop.permute.xlu0 %2862
        %2864 = vrot.lane.b32.xlu0 %v2760, 2
        %v2865 = vpop.permute.xlu0 %2864
        %2866 = vrot.lane.b32.xlu0 %v2761, 2
        %v2867 = vpop.permute.xlu0 %2866
        %2868 = vrot.lane.b32.xlu0 %v2762, 2
        %v2869 = vpop.permute.xlu0 %2868
        %2870 = vrot.lane.b32.xlu0 %v2763, 2
        %v2871 = vpop.permute.xlu0 %2870
        %v2890 = vsel %vm1404, %v2765, %v2837
        %v2891 = vsel %vm1404, %v2767, %v2839
        %v2892 = vsel %vm1404, %v2769, %v2841
        %v2893 = vsel %vm1404, %v2771, %v2843
        %v2894 = vsel %vm1404, %v2773, %v2845
        %v2895 = vsel %vm1404, %v2775, %v2847
        %v2896 = vsel %vm1404, %v2777, %v2849
        %v2897 = vsel %vm1404, %v2779, %v2851
        %v2898 = vsel %vm1404, %v2781, %v2853
        %v2899 = vsel %vm1404, %v2783, %v2855
        %v2900 = vsel %vm1404, %v2785, %v2857
        %v2901 = vsel %vm1404, %v2787, %v2859
        %v2902 = vsel %vm1404, %v2789, %v2861
        %v2903 = vsel %vm1404, %v2791, %v2863
        %v2904 = vsel %vm1404, %v2793, %v2865
        %v2905 = vsel %vm1404, %v2795, %v2867
        %v2906 = vsel %vm1404, %v2797, %v2869
        %v2907 = vsel %vm1404, %v2799, %v2871
        %v2908 = vlaneseq
        %v2909 = vshrl.u32 %v2908, 7
        %v2910 = vsub.s32 0, %v2909
        %v2911 = vrot.slane %v696, %v2910
        %v2912 = vmul.f32 %v2692, %v2911
        %v2913 = vmul.f32 %v2693, %v2911
        %v2914 = vmul.f32 %v2694, %v2911
        %v2915 = vmul.f32 %v2695, %v2911
        %v2916 = vmul.f32 %v2696, %v2911
        %v2917 = vmul.f32 %v2697, %v2911
        %v2918 = vmul.f32 %v2698, %v2911
        %v2919 = vmul.f32 %v2699, %v2911
        %v2920 = vmul.f32 %v2700, %v2911
        %v2921 = vmul.f32 %v2701, %v2911
        %v2922 = vmul.f32 %v2702, %v2911
        %v2923 = vmul.f32 %v2703, %v2911
        %v2924 = vmul.f32 %v2704, %v2911
        %v2925 = vmul.f32 %v2705, %v2911
        %v2926 = vmul.f32 %v2706, %v2911
        %v2927 = vmul.f32 %v2707, %v2911
        %v2928 = vadd.f32 %v2912, 0.0
        %v2929 = vadd.f32 %v2913, 0.0
        %v2930 = vadd.f32 %v2914, 0.0
        %v2931 = vadd.f32 %v2915, 0.0
        %v2932 = vadd.f32 %v2916, 0.0
        %v2933 = vadd.f32 %v2917, 0.0
        %v2934 = vadd.f32 %v2918, 0.0
        %v2935 = vadd.f32 %v2919, 0.0
        %v2936 = vadd.f32 %v2920, 0.0
        %v2937 = vadd.f32 %v2921, 0.0
        %v2938 = vadd.f32 %v2922, 0.0
        %v2939 = vadd.f32 %v2923, 0.0
        %v2940 = vadd.f32 %v2924, 0.0
        %v2941 = vadd.f32 %v2925, 0.0
        %v2942 = vadd.f32 %v2926, 0.0
        %v2943 = vadd.f32 %v2927, 0.0
        %v2944 = vlaneseq
        %v2945 = vshrl.u32 %v2944, 7
        %v2946 = vsub.s32 1, %v2945
        %v2947 = vrot.slane %v696, %v2946
        %v2948 = vmul.f32 %v2512, %v2947
        %v2949 = vmul.f32 %v2513, %v2947
        %v2950 = vmul.f32 %v2514, %v2947
        %v2951 = vmul.f32 %v2515, %v2947
        %v2952 = vmul.f32 %v2516, %v2947
        %v2953 = vmul.f32 %v2517, %v2947
        %v2954 = vmul.f32 %v2518, %v2947
        %v2955 = vmul.f32 %v2519, %v2947
        %v2956 = vmul.f32 %v2520, %v2947
        %v2957 = vmul.f32 %v2521, %v2947
        %v2958 = vmul.f32 %v2522, %v2947
        %v2959 = vmul.f32 %v2523, %v2947
        %v2960 = vmul.f32 %v2524, %v2947
        %v2961 = vmul.f32 %v2525, %v2947
        %v2962 = vmul.f32 %v2526, %v2947
        %v2963 = vmul.f32 %v2527, %v2947
        %v2964 = vadd.f32 %v2928, %v2948
        %v2965 = vadd.f32 %v2929, %v2949
        %v2966 = vadd.f32 %v2930, %v2950
        %v2967 = vadd.f32 %v2931, %v2951
        %v2968 = vadd.f32 %v2932, %v2952
        %v2969 = vadd.f32 %v2933, %v2953
        %v2970 = vadd.f32 %v2934, %v2954
        %v2971 = vadd.f32 %v2935, %v2955
        %v2972 = vadd.f32 %v2936, %v2956
        %v2973 = vadd.f32 %v2937, %v2957
        %v2974 = vadd.f32 %v2938, %v2958
        %v2975 = vadd.f32 %v2939, %v2959
        %v2976 = vadd.f32 %v2940, %v2960
        %v2977 = vadd.f32 %v2941, %v2961
        %v2978 = vadd.f32 %v2942, %v2962
        %v2979 = vadd.f32 %v2943, %v2963
        %v2980 = vlaneseq
        %v2981 = vshrl.u32 %v2980, 7
        %v2982 = vsub.s32 2, %v2981
        %v2983 = vrot.slane %v696, %v2982
        %v2984 = vmul.f32 %v2890, %v2983
        %v2985 = vmul.f32 %v2891, %v2983
        %v2986 = vmul.f32 %v2892, %v2983
        %v2987 = vmul.f32 %v2893, %v2983
        %v2988 = vmul.f32 %v2894, %v2983
        %v2989 = vmul.f32 %v2895, %v2983
        %v2990 = vmul.f32 %v2896, %v2983
        %v2991 = vmul.f32 %v2897, %v2983
        %v2992 = vmul.f32 %v2898, %v2983
        %v2993 = vmul.f32 %v2899, %v2983
        %v2994 = vmul.f32 %v2900, %v2983
        %v2995 = vmul.f32 %v2901, %v2983
        %v2996 = vmul.f32 %v2902, %v2983
        %v2997 = vmul.f32 %v2903, %v2983
        %v2998 = vmul.f32 %v2904, %v2983
        %v2999 = vmul.f32 %v2905, %v2983
        %v3000 = vadd.f32 %v2964, %v2984
        %v3001 = vadd.f32 %v2965, %v2985
        %v3002 = vadd.f32 %v2966, %v2986
        %v3003 = vadd.f32 %v2967, %v2987
        %v3004 = vadd.f32 %v2968, %v2988
        %v3005 = vadd.f32 %v2969, %v2989
        %v3006 = vadd.f32 %v2970, %v2990
        %v3007 = vadd.f32 %v2971, %v2991
        %v3008 = vadd.f32 %v2972, %v2992
        %v3009 = vadd.f32 %v2973, %v2993
        %v3010 = vadd.f32 %v2974, %v2994
        %v3011 = vadd.f32 %v2975, %v2995
        %v3012 = vadd.f32 %v2976, %v2996
        %v3013 = vadd.f32 %v2977, %v2997
        %v3014 = vadd.f32 %v2978, %v2998
        %v3015 = vadd.f32 %v2979, %v2999
        %v3016 = vlaneseq
        %v3017 = vshrl.u32 %v3016, 7
        %v3018 = vsub.s32 0, %v3017
        %v3019 = vrot.slane %v697, %v3018
        %v3020 = vmul.f32 %v2693, %v3019
        %v3021 = vmul.f32 %v2694, %v3019
        %v3022 = vmul.f32 %v2695, %v3019
        %v3023 = vmul.f32 %v2696, %v3019
        %v3024 = vmul.f32 %v2697, %v3019
        %v3025 = vmul.f32 %v2698, %v3019
        %v3026 = vmul.f32 %v2699, %v3019
        %v3027 = vmul.f32 %v2700, %v3019
        %v3028 = vmul.f32 %v2701, %v3019
        %v3029 = vmul.f32 %v2702, %v3019
        %v3030 = vmul.f32 %v2703, %v3019
        %v3031 = vmul.f32 %v2704, %v3019
        %v3032 = vmul.f32 %v2705, %v3019
        %v3033 = vmul.f32 %v2706, %v3019
        %v3034 = vmul.f32 %v2707, %v3019
        %v3035 = vmul.f32 %v2708, %v3019
        %v3036 = vadd.f32 %v3000, %v3020
        %v3037 = vadd.f32 %v3001, %v3021
        %v3038 = vadd.f32 %v3002, %v3022
        %v3039 = vadd.f32 %v3003, %v3023
        %v3040 = vadd.f32 %v3004, %v3024
        %v3041 = vadd.f32 %v3005, %v3025
        %v3042 = vadd.f32 %v3006, %v3026
        %v3043 = vadd.f32 %v3007, %v3027
        %v3044 = vadd.f32 %v3008, %v3028
        %v3045 = vadd.f32 %v3009, %v3029
        %v3046 = vadd.f32 %v3010, %v3030
        %v3047 = vadd.f32 %v3011, %v3031
        %v3048 = vadd.f32 %v3012, %v3032
        %v3049 = vadd.f32 %v3013, %v3033
        %v3050 = vadd.f32 %v3014, %v3034
        %v3051 = vadd.f32 %v3015, %v3035
        %v3052 = vlaneseq
        %v3053 = vshrl.u32 %v3052, 7
        %v3054 = vsub.s32 1, %v3053
        %v3055 = vrot.slane %v697, %v3054
        %v3056 = vmul.f32 %v2513, %v3055
        %v3057 = vmul.f32 %v2514, %v3055
        %v3058 = vmul.f32 %v2515, %v3055
        %v3059 = vmul.f32 %v2516, %v3055
        %v3060 = vmul.f32 %v2517, %v3055
        %v3061 = vmul.f32 %v2518, %v3055
        %v3062 = vmul.f32 %v2519, %v3055
        %v3063 = vmul.f32 %v2520, %v3055
        %v3064 = vmul.f32 %v2521, %v3055
        %v3065 = vmul.f32 %v2522, %v3055
        %v3066 = vmul.f32 %v2523, %v3055
        %v3067 = vmul.f32 %v2524, %v3055
        %v3068 = vmul.f32 %v2525, %v3055
        %v3069 = vmul.f32 %v2526, %v3055
        %v3070 = vmul.f32 %v2527, %v3055
        %v3071 = vmul.f32 %v2528, %v3055
        %v3072 = vadd.f32 %v3036, %v3056
        %v3073 = vadd.f32 %v3037, %v3057
        %v3074 = vadd.f32 %v3038, %v3058
        %v3075 = vadd.f32 %v3039, %v3059
        %v3076 = vadd.f32 %v3040, %v3060
        %v3077 = vadd.f32 %v3041, %v3061
        %v3078 = vadd.f32 %v3042, %v3062
        %v3079 = vadd.f32 %v3043, %v3063
        %v3080 = vadd.f32 %v3044, %v3064
        %v3081 = vadd.f32 %v3045, %v3065
        %v3082 = vadd.f32 %v3046, %v3066
        %v3083 = vadd.f32 %v3047, %v3067
        %v3084 = vadd.f32 %v3048, %v3068
        %v3085 = vadd.f32 %v3049, %v3069
        %v3086 = vadd.f32 %v3050, %v3070
        %v3087 = vadd.f32 %v3051, %v3071
        %v3088 = vlaneseq
        %v3089 = vshrl.u32 %v3088, 7
        %v3090 = vsub.s32 2, %v3089
        %v3091 = vrot.slane %v697, %v3090
        %v3092 = vmul.f32 %v2891, %v3091
        %v3093 = vmul.f32 %v2892, %v3091
        %v3094 = vmul.f32 %v2893, %v3091
        %v3095 = vmul.f32 %v2894, %v3091
        %v3096 = vmul.f32 %v2895, %v3091
        %v3097 = vmul.f32 %v2896, %v3091
        %v3098 = vmul.f32 %v2897, %v3091
        %v3099 = vmul.f32 %v2898, %v3091
        %v3100 = vmul.f32 %v2899, %v3091
        %v3101 = vmul.f32 %v2900, %v3091
        %v3102 = vmul.f32 %v2901, %v3091
        %v3103 = vmul.f32 %v2902, %v3091
        %v3104 = vmul.f32 %v2903, %v3091
        %v3105 = vmul.f32 %v2904, %v3091
        %v3106 = vmul.f32 %v2905, %v3091
        %v3107 = vmul.f32 %v2906, %v3091
        %v3108 = vadd.f32 %v3072, %v3092
        %v3109 = vadd.f32 %v3073, %v3093
        %v3110 = vadd.f32 %v3074, %v3094
        %v3111 = vadd.f32 %v3075, %v3095
        %v3112 = vadd.f32 %v3076, %v3096
        %v3113 = vadd.f32 %v3077, %v3097
        %v3114 = vadd.f32 %v3078, %v3098
        %v3115 = vadd.f32 %v3079, %v3099
        %v3116 = vadd.f32 %v3080, %v3100
        %v3117 = vadd.f32 %v3081, %v3101
        %v3118 = vadd.f32 %v3082, %v3102
        %v3119 = vadd.f32 %v3083, %v3103
        %v3120 = vadd.f32 %v3084, %v3104
        %v3121 = vadd.f32 %v3085, %v3105
        %v3122 = vadd.f32 %v3086, %v3106
        %v3123 = vadd.f32 %v3087, %v3107
        %v3124 = vlaneseq
        %v3125 = vshrl.u32 %v3124, 7
        %v3126 = vsub.s32 0, %v3125
        %v3127 = vrot.slane %v698, %v3126
        %v3128 = vmul.f32 %v2694, %v3127
        %v3129 = vmul.f32 %v2695, %v3127
        %v3130 = vmul.f32 %v2696, %v3127
        %v3131 = vmul.f32 %v2697, %v3127
        %v3132 = vmul.f32 %v2698, %v3127
        %v3133 = vmul.f32 %v2699, %v3127
        %v3134 = vmul.f32 %v2700, %v3127
        %v3135 = vmul.f32 %v2701, %v3127
        %v3136 = vmul.f32 %v2702, %v3127
        %v3137 = vmul.f32 %v2703, %v3127
        %v3138 = vmul.f32 %v2704, %v3127
        %v3139 = vmul.f32 %v2705, %v3127
        %v3140 = vmul.f32 %v2706, %v3127
        %v3141 = vmul.f32 %v2707, %v3127
        %v3142 = vmul.f32 %v2708, %v3127
        %v3143 = vmul.f32 %v2709, %v3127
        %v3144 = vadd.f32 %v3108, %v3128
        %v3145 = vadd.f32 %v3109, %v3129
        %v3146 = vadd.f32 %v3110, %v3130
        %v3147 = vadd.f32 %v3111, %v3131
        %v3148 = vadd.f32 %v3112, %v3132
        %v3149 = vadd.f32 %v3113, %v3133
        %v3150 = vadd.f32 %v3114, %v3134
        %v3151 = vadd.f32 %v3115, %v3135
        %v3152 = vadd.f32 %v3116, %v3136
        %v3153 = vadd.f32 %v3117, %v3137
        %v3154 = vadd.f32 %v3118, %v3138
        %v3155 = vadd.f32 %v3119, %v3139
        %v3156 = vadd.f32 %v3120, %v3140
        %v3157 = vadd.f32 %v3121, %v3141
        %v3158 = vadd.f32 %v3122, %v3142
        %v3159 = vadd.f32 %v3123, %v3143
        %v3160 = vlaneseq
        %v3161 = vshrl.u32 %v3160, 7
        %v3162 = vsub.s32 1, %v3161
        %v3163 = vrot.slane %v698, %v3162
        %v3164 = vmul.f32 %v2514, %v3163
        %v3165 = vmul.f32 %v2515, %v3163
        %v3166 = vmul.f32 %v2516, %v3163
        %v3167 = vmul.f32 %v2517, %v3163
        %v3168 = vmul.f32 %v2518, %v3163
        %v3169 = vmul.f32 %v2519, %v3163
        %v3170 = vmul.f32 %v2520, %v3163
        %v3171 = vmul.f32 %v2521, %v3163
        %v3172 = vmul.f32 %v2522, %v3163
        %v3173 = vmul.f32 %v2523, %v3163
        %v3174 = vmul.f32 %v2524, %v3163
        %v3175 = vmul.f32 %v2525, %v3163
        %v3176 = vmul.f32 %v2526, %v3163
        %v3177 = vmul.f32 %v2527, %v3163
        %v3178 = vmul.f32 %v2528, %v3163
        %v3179 = vmul.f32 %v2529, %v3163
        %v3180 = vadd.f32 %v3144, %v3164
        %v3181 = vadd.f32 %v3145, %v3165
        %v3182 = vadd.f32 %v3146, %v3166
        %v3183 = vadd.f32 %v3147, %v3167
        %v3184 = vadd.f32 %v3148, %v3168
        %v3185 = vadd.f32 %v3149, %v3169
        %v3186 = vadd.f32 %v3150, %v3170
        %v3187 = vadd.f32 %v3151, %v3171
        %v3188 = vadd.f32 %v3152, %v3172
        %v3189 = vadd.f32 %v3153, %v3173
        %v3190 = vadd.f32 %v3154, %v3174
        %v3191 = vadd.f32 %v3155, %v3175
        %v3192 = vadd.f32 %v3156, %v3176
        %v3193 = vadd.f32 %v3157, %v3177
        %v3194 = vadd.f32 %v3158, %v3178
        %v3195 = vadd.f32 %v3159, %v3179
        %v3196 = vlaneseq
        %v3197 = vshrl.u32 %v3196, 7
        %v3198 = vsub.s32 2, %v3197
        %v3199 = vrot.slane %v698, %v3198
        %v3200 = vmul.f32 %v2892, %v3199
        %v3201 = vmul.f32 %v2893, %v3199
        %v3202 = vmul.f32 %v2894, %v3199
        %v3203 = vmul.f32 %v2895, %v3199
        %v3204 = vmul.f32 %v2896, %v3199
        %v3205 = vmul.f32 %v2897, %v3199
        %v3206 = vmul.f32 %v2898, %v3199
        %v3207 = vmul.f32 %v2899, %v3199
        %v3208 = vmul.f32 %v2900, %v3199
        %v3209 = vmul.f32 %v2901, %v3199
        %v3210 = vmul.f32 %v2902, %v3199
        %v3211 = vmul.f32 %v2903, %v3199
        %v3212 = vmul.f32 %v2904, %v3199
        %v3213 = vmul.f32 %v2905, %v3199
        %v3214 = vmul.f32 %v2906, %v3199
        %v3215 = vmul.f32 %v2907, %v3199
        %v3216 = vadd.f32 %v3180, %v3200
        %v3217 = vadd.f32 %v3181, %v3201
        %v3218 = vadd.f32 %v3182, %v3202
        %v3219 = vadd.f32 %v3183, %v3203
        %v3220 = vadd.f32 %v3184, %v3204
        %v3221 = vadd.f32 %v3185, %v3205
        %v3222 = vadd.f32 %v3186, %v3206
        %v3223 = vadd.f32 %v3187, %v3207
        %v3224 = vadd.f32 %v3188, %v3208
        %v3225 = vadd.f32 %v3189, %v3209
        %v3226 = vadd.f32 %v3190, %v3210
        %v3227 = vadd.f32 %v3191, %v3211
        %v3228 = vadd.f32 %v3192, %v3212
        %v3229 = vadd.f32 %v3193, %v3213
        %v3230 = vadd.f32 %v3194, %v3214
        %v3231 = vadd.f32 %v3195, %v3215
        %v3232 = vlaneseq
        %v3233 = vshrl.u32 %v3232, 7
        %v3234 = vsub.s32 0, %v3233
        %v3235 = vrot.slane %v702, %v3234
        %v3236 = vadd.f32 %v3216, %v3235
        %v3237 = vadd.f32 %v3217, %v3235
        %v3238 = vadd.f32 %v3218, %v3235
        %v3239 = vadd.f32 %v3219, %v3235
        %v3240 = vadd.f32 %v3220, %v3235
        %v3241 = vadd.f32 %v3221, %v3235
        %v3242 = vadd.f32 %v3222, %v3235
        %v3243 = vadd.f32 %v3223, %v3235
        %v3244 = vadd.f32 %v3224, %v3235
        %v3245 = vadd.f32 %v3225, %v3235
        %v3246 = vadd.f32 %v3226, %v3235
        %v3247 = vadd.f32 %v3227, %v3235
        %v3248 = vadd.f32 %v3228, %v3235
        %v3249 = vadd.f32 %v3229, %v3235
        %v3250 = vadd.f32 %v3230, %v3235
        %v3251 = vadd.f32 %v3231, %v3235
        %v3252 = vlaneseq
        %v3253 = vshrl.u32 %v3252, 7
        %v3254 = vsub.s32 0, %v3253
        %v3255 = vrot.slane %v703, %v3254
        %3257 = vrot.lane.b32.xlu0 %v3255, 4
        %v3258 = vpop.permute.xlu0 %3257
        %v3260 = vmul.f32 %v1205, %v3258
        %v3261 = vmul.f32 %v1206, %v3258
        %v3262 = vmul.f32 %v1207, %v3258
        %v3263 = vmul.f32 %v1208, %v3258
        %v3264 = vmul.f32 %v1209, %v3258
        %v3265 = vmul.f32 %v1210, %v3258
        %v3266 = vmul.f32 %v1211, %v3258
        %v3267 = vmul.f32 %v1212, %v3258
        %v3268 = vmul.f32 %v1213, %v3258
        %v3269 = vmul.f32 %v1214, %v3258
        %v3270 = vmul.f32 %v1215, %v3258
        %v3271 = vmul.f32 %v1216, %v3258
        %v3272 = vmul.f32 %v1217, %v3258
        %v3273 = vmul.f32 %v1218, %v3258
        %v3274 = vmul.f32 %v1219, %v3258
        %v3275 = vmul.f32 %v1220, %v3258
        %v3276 = vlaneseq
        %v3277 = vshrl.u32 %v3276, 7
        %v3278 = vsub.s32 0, %v3277
        %v3279 = vrot.slane %v704, %v3278
        %3281 = vrot.lane.b32.xlu0 %v3279, 4
        %v3282 = vpop.permute.xlu0 %3281
        %v3284 = vadd.f32 %v3260, %v3282
        %v3285 = vadd.f32 %v3261, %v3282
        %v3286 = vadd.f32 %v3262, %v3282
        %v3287 = vadd.f32 %v3263, %v3282
        %v3288 = vadd.f32 %v3264, %v3282
        %v3289 = vadd.f32 %v3265, %v3282
        %v3290 = vadd.f32 %v3266, %v3282
        %v3291 = vadd.f32 %v3267, %v3282
        %v3292 = vadd.f32 %v3268, %v3282
        %v3293 = vadd.f32 %v3269, %v3282
        %v3294 = vadd.f32 %v3270, %v3282
        %v3295 = vadd.f32 %v3271, %v3282
        %v3296 = vadd.f32 %v3272, %v3282
        %v3297 = vadd.f32 %v3273, %v3282
        %v3298 = vadd.f32 %v3274, %v3282
        %v3299 = vadd.f32 %v3275, %v3282
        %v3300 = vmul.f32 %v2513, 0.5
        %v3301 = vmul.f32 %v2514, 0.5
        %v3302 = vmul.f32 %v2515, 0.5
        %v3303 = vmul.f32 %v2516, 0.5
        %v3304 = vmul.f32 %v2517, 0.5
        %v3305 = vmul.f32 %v2518, 0.5
        %v3306 = vmul.f32 %v2519, 0.5
        %v3307 = vmul.f32 %v2520, 0.5
        %v3308 = vmul.f32 %v2521, 0.5
        %v3309 = vmul.f32 %v2522, 0.5
        %v3310 = vmul.f32 %v2523, 0.5
        %v3311 = vmul.f32 %v2524, 0.5
        %v3312 = vmul.f32 %v2525, 0.5
        %v3313 = vmul.f32 %v2526, 0.5
        %v3314 = vmul.f32 %v2527, 0.5
        %v3315 = vmul.f32 %v2528, 0.5
        %v3316 = vmul.f32 %v2513, 0.044715
        %v3317 = vmul.f32 %v2514, 0.044715
        %v3318 = vmul.f32 %v2515, 0.044715
        %v3319 = vmul.f32 %v2516, 0.044715
        %v3320 = vmul.f32 %v2517, 0.044715
        %v3321 = vmul.f32 %v2518, 0.044715
        %v3322 = vmul.f32 %v2519, 0.044715
        %v3323 = vmul.f32 %v2520, 0.044715
        %v3324 = vmul.f32 %v2521, 0.044715
        %v3325 = vmul.f32 %v2522, 0.044715
        %v3326 = vmul.f32 %v2523, 0.044715
        %v3327 = vmul.f32 %v2524, 0.044715
        %v3328 = vmul.f32 %v2525, 0.044715
        %v3329 = vmul.f32 %v2526, 0.044715
        %v3330 = vmul.f32 %v2527, 0.044715
        %v3331 = vmul.f32 %v2528, 0.044715
        %v3332 = vmul.f32 %v3316, %v2513
        %v3333 = vmul.f32 %v3317, %v2514
        %v3334 = vmul.f32 %v3318, %v2515
        %v3335 = vmul.f32 %v3319, %v2516
        %v3336 = vmul.f32 %v3320, %v2517
        %v3337 = vmul.f32 %v3321, %v2518
        %v3338 = vmul.f32 %v3322, %v2519
        %v3339 = vmul.f32 %v3323, %v2520
        %v3340 = vmul.f32 %v3324, %v2521
        %v3341 = vmul.f32 %v3325, %v2522
        %v3342 = vmul.f32 %v3326, %v2523
        %v3343 = vmul.f32 %v3327, %v2524
        %v3344 = vmul.f32 %v3328, %v2525
        %v3345 = vmul.f32 %v3329, %v2526
        %v3346 = vmul.f32 %v3330, %v2527
        %v3347 = vmul.f32 %v3331, %v2528
        %v3348 = vmul.f32 %v3332, %v2513
        %v3349 = vmul.f32 %v3333, %v2514
        %v3350 = vmul.f32 %v3334, %v2515
        %v3351 = vmul.f32 %v3335, %v2516
        %v3352 = vmul.f32 %v3336, %v2517
        %v3353 = vmul.f32 %v3337, %v2518
        %v3354 = vmul.f32 %v3338, %v2519
        %v3355 = vmul.f32 %v3339, %v2520
        %v3356 = vmul.f32 %v3340, %v2521
        %v3357 = vmul.f32 %v3341, %v2522
        %v3358 = vmul.f32 %v3342, %v2523
        %v3359 = vmul.f32 %v3343, %v2524
        %v3360 = vmul.f32 %v3344, %v2525
        %v3361 = vmul.f32 %v3345, %v2526
        %v3362 = vmul.f32 %v3346, %v2527
        %v3363 = vmul.f32 %v3347, %v2528
        %v3364 = vadd.f32 %v2513, %v3348
        %v3365 = vadd.f32 %v2514, %v3349
        %v3366 = vadd.f32 %v2515, %v3350
        %v3367 = vadd.f32 %v2516, %v3351
        %v3368 = vadd.f32 %v2517, %v3352
        %v3369 = vadd.f32 %v2518, %v3353
        %v3370 = vadd.f32 %v2519, %v3354
        %v3371 = vadd.f32 %v2520, %v3355
        %v3372 = vadd.f32 %v2521, %v3356
        %v3373 = vadd.f32 %v2522, %v3357
        %v3374 = vadd.f32 %v2523, %v3358
        %v3375 = vadd.f32 %v2524, %v3359
        %v3376 = vadd.f32 %v2525, %v3360
        %v3377 = vadd.f32 %v2526, %v3361
        %v3378 = vadd.f32 %v2527, %v3362
        %v3379 = vadd.f32 %v2528, %v3363
        %v3380 = vmul.f32 %v3364, 0.7978846
        %v3381 = vmul.f32 %v3365, 0.7978846
        %v3382 = vmul.f32 %v3366, 0.7978846
        %v3383 = vmul.f32 %v3367, 0.7978846
        %v3384 = vmul.f32 %v3368, 0.7978846
        %v3385 = vmul.f32 %v3369, 0.7978846
        %v3386 = vmul.f32 %v3370, 0.7978846
        %v3387 = vmul.f32 %v3371, 0.7978846
        %v3388 = vmul.f32 %v3372, 0.7978846
        %v3389 = vmul.f32 %v3373, 0.7978846
        %v3390 = vmul.f32 %v3374, 0.7978846
        %v3391 = vmul.f32 %v3375, 0.7978846
        %v3392 = vmul.f32 %v3376, 0.7978846
        %v3393 = vmul.f32 %v3377, 0.7978846
        %v3394 = vmul.f32 %v3378, 0.7978846
        %v3395 = vmul.f32 %v3379, 0.7978846
        %v3396 = vtanh.pop %v3380
        %v3397 = vtanh.pop %v3381
        %v3398 = vtanh.pop %v3382
        %v3399 = vtanh.pop %v3383
        %v3400 = vtanh.pop %v3384
        %v3401 = vtanh.pop %v3385
        %v3402 = vtanh.pop %v3386
        %v3403 = vtanh.pop %v3387
        %v3404 = vtanh.pop %v3388
        %v3405 = vtanh.pop %v3389
        %v3406 = vtanh.pop %v3390
        %v3407 = vtanh.pop %v3391
        %v3408 = vtanh.pop %v3392
        %v3409 = vtanh.pop %v3393
        %v3410 = vtanh.pop %v3394
        %v3411 = vtanh.pop %v3395
        %v3412 = vadd.f32 %v3396, 1.0
        %v3413 = vadd.f32 %v3397, 1.0
        %v3414 = vadd.f32 %v3398, 1.0
        %v3415 = vadd.f32 %v3399, 1.0
        %v3416 = vadd.f32 %v3400, 1.0
        %v3417 = vadd.f32 %v3401, 1.0
        %v3418 = vadd.f32 %v3402, 1.0
        %v3419 = vadd.f32 %v3403, 1.0
        %v3420 = vadd.f32 %v3404, 1.0
        %v3421 = vadd.f32 %v3405, 1.0
        %v3422 = vadd.f32 %v3406, 1.0
        %v3423 = vadd.f32 %v3407, 1.0
        %v3424 = vadd.f32 %v3408, 1.0
        %v3425 = vadd.f32 %v3409, 1.0
        %v3426 = vadd.f32 %v3410, 1.0
        %v3427 = vadd.f32 %v3411, 1.0
        %v3428 = vmul.f32 %v3300, %v3412
        %v3429 = vmul.f32 %v3301, %v3413
        %v3430 = vmul.f32 %v3302, %v3414
        %v3431 = vmul.f32 %v3303, %v3415
        %v3432 = vmul.f32 %v3304, %v3416
        %v3433 = vmul.f32 %v3305, %v3417
        %v3434 = vmul.f32 %v3306, %v3418
        %v3435 = vmul.f32 %v3307, %v3419
        %v3436 = vmul.f32 %v3308, %v3420
        %v3437 = vmul.f32 %v3309, %v3421
        %v3438 = vmul.f32 %v3310, %v3422
        %v3439 = vmul.f32 %v3311, %v3423
        %v3440 = vmul.f32 %v3312, %v3424
        %v3441 = vmul.f32 %v3313, %v3425
        %v3442 = vmul.f32 %v3314, %v3426
        %v3443 = vmul.f32 %v3315, %v3427
        %3444 = vrot.lane.b32.xlu0 %v1205, 124
        %v3445 = vpop.permute.xlu0 %3444
        %3446 = vrot.lane.b32.xlu0 %v1206, 124
        %v3447 = vpop.permute.xlu0 %3446
        %3448 = vrot.lane.b32.xlu0 %v1207, 124
        %v3449 = vpop.permute.xlu0 %3448
        %3450 = vrot.lane.b32.xlu0 %v1208, 124
        %v3451 = vpop.permute.xlu0 %3450
        %3452 = vrot.lane.b32.xlu0 %v1209, 124
        %v3453 = vpop.permute.xlu0 %3452
        %3454 = vrot.lane.b32.xlu0 %v1210, 124
        %v3455 = vpop.permute.xlu0 %3454
        %3456 = vrot.lane.b32.xlu0 %v1211, 124
        %v3457 = vpop.permute.xlu0 %3456
        %3458 = vrot.lane.b32.xlu0 %v1212, 124
        %v3459 = vpop.permute.xlu0 %3458
        %3460 = vrot.lane.b32.xlu0 %v1213, 124
        %v3461 = vpop.permute.xlu0 %3460
        %3462 = vrot.lane.b32.xlu0 %v1214, 124
        %v3463 = vpop.permute.xlu0 %3462
        %3464 = vrot.lane.b32.xlu0 %v1215, 124
        %v3465 = vpop.permute.xlu0 %3464
        %3466 = vrot.lane.b32.xlu0 %v1216, 124
        %v3467 = vpop.permute.xlu0 %3466
        %3468 = vrot.lane.b32.xlu0 %v1217, 124
        %v3469 = vpop.permute.xlu0 %3468
        %3470 = vrot.lane.b32.xlu0 %v1218, 124
        %v3471 = vpop.permute.xlu0 %3470
        %3472 = vrot.lane.b32.xlu0 %v1219, 124
        %v3473 = vpop.permute.xlu0 %3472
        %3474 = vrot.lane.b32.xlu0 %v1220, 124
        %v3475 = vpop.permute.xlu0 %3474
        %v3492 = vadd.f32 %v3428, %v3445
        %v3493 = vadd.f32 %v3429, %v3447
        %v3494 = vadd.f32 %v3430, %v3449
        %v3495 = vadd.f32 %v3431, %v3451
        %v3496 = vadd.f32 %v3432, %v3453
        %v3497 = vadd.f32 %v3433, %v3455
        %v3498 = vadd.f32 %v3434, %v3457
        %v3499 = vadd.f32 %v3435, %v3459
        %v3500 = vadd.f32 %v3436, %v3461
        %v3501 = vadd.f32 %v3437, %v3463
        %v3502 = vadd.f32 %v3438, %v3465
        %v3503 = vadd.f32 %v3439, %v3467
        %v3504 = vadd.f32 %v3440, %v3469
        %v3505 = vadd.f32 %v3441, %v3471
        %v3506 = vadd.f32 %v3442, %v3473
        %v3507 = vadd.f32 %v3443, %v3475
        %v3508 = vmul.f32 %v3236, 0.5
        %v3509 = vmul.f32 %v3237, 0.5
        %v3510 = vmul.f32 %v3238, 0.5
        %v3511 = vmul.f32 %v3239, 0.5
        %v3512 = vmul.f32 %v3240, 0.5
        %v3513 = vmul.f32 %v3241, 0.5
        %v3514 = vmul.f32 %v3242, 0.5
        %v3515 = vmul.f32 %v3243, 0.5
        %v3516 = vmul.f32 %v3244, 0.5
        %v3517 = vmul.f32 %v3245, 0.5
        %v3518 = vmul.f32 %v3246, 0.5
        %v3519 = vmul.f32 %v3247, 0.5
        %v3520 = vmul.f32 %v3248, 0.5
        %v3521 = vmul.f32 %v3249, 0.5
        %v3522 = vmul.f32 %v3250, 0.5
        %v3523 = vmul.f32 %v3251, 0.5
        %v3524 = vmul.f32 %v3236, 0.044715
        %v3525 = vmul.f32 %v3237, 0.044715
        %v3526 = vmul.f32 %v3238, 0.044715
        %v3527 = vmul.f32 %v3239, 0.044715
        %v3528 = vmul.f32 %v3240, 0.044715
        %v3529 = vmul.f32 %v3241, 0.044715
        %v3530 = vmul.f32 %v3242, 0.044715
        %v3531 = vmul.f32 %v3243, 0.044715
        %v3532 = vmul.f32 %v3244, 0.044715
        %v3533 = vmul.f32 %v3245, 0.044715
        %v3534 = vmul.f32 %v3246, 0.044715
        %v3535 = vmul.f32 %v3247, 0.044715
        %v3536 = vmul.f32 %v3248, 0.044715
        %v3537 = vmul.f32 %v3249, 0.044715
        %v3538 = vmul.f32 %v3250, 0.044715
        %v3539 = vmul.f32 %v3251, 0.044715
        %v3540 = vmul.f32 %v3524, %v3236
        %v3541 = vmul.f32 %v3525, %v3237
        %v3542 = vmul.f32 %v3526, %v3238
        %v3543 = vmul.f32 %v3527, %v3239
        %v3544 = vmul.f32 %v3528, %v3240
        %v3545 = vmul.f32 %v3529, %v3241
        %v3546 = vmul.f32 %v3530, %v3242
        %v3547 = vmul.f32 %v3531, %v3243
        %v3548 = vmul.f32 %v3532, %v3244
        %v3549 = vmul.f32 %v3533, %v3245
        %v3550 = vmul.f32 %v3534, %v3246
        %v3551 = vmul.f32 %v3535, %v3247
        %v3552 = vmul.f32 %v3536, %v3248
        %v3553 = vmul.f32 %v3537, %v3249
        %v3554 = vmul.f32 %v3538, %v3250
        %v3555 = vmul.f32 %v3539, %v3251
        %v3556 = vmul.f32 %v3540, %v3236
        %v3557 = vmul.f32 %v3541, %v3237
        %v3558 = vmul.f32 %v3542, %v3238
        %v3559 = vmul.f32 %v3543, %v3239
        %v3560 = vmul.f32 %v3544, %v3240
        %v3561 = vmul.f32 %v3545, %v3241
        %v3562 = vmul.f32 %v3546, %v3242
        %v3563 = vmul.f32 %v3547, %v3243
        %v3564 = vmul.f32 %v3548, %v3244
        %v3565 = vmul.f32 %v3549, %v3245
        %v3566 = vmul.f32 %v3550, %v3246
        %v3567 = vmul.f32 %v3551, %v3247
        %v3568 = vmul.f32 %v3552, %v3248
        %v3569 = vmul.f32 %v3553, %v3249
        %v3570 = vmul.f32 %v3554, %v3250
        %v3571 = vmul.f32 %v3555, %v3251
        %v3572 = vadd.f32 %v3236, %v3556
        %v3573 = vadd.f32 %v3237, %v3557
        %v3574 = vadd.f32 %v3238, %v3558
        %v3575 = vadd.f32 %v3239, %v3559
        %v3576 = vadd.f32 %v3240, %v3560
        %v3577 = vadd.f32 %v3241, %v3561
        %v3578 = vadd.f32 %v3242, %v3562
        %v3579 = vadd.f32 %v3243, %v3563
        %v3580 = vadd.f32 %v3244, %v3564
        %v3581 = vadd.f32 %v3245, %v3565
        %v3582 = vadd.f32 %v3246, %v3566
        %v3583 = vadd.f32 %v3247, %v3567
        %v3584 = vadd.f32 %v3248, %v3568
        %v3585 = vadd.f32 %v3249, %v3569
        %v3586 = vadd.f32 %v3250, %v3570
        %v3587 = vadd.f32 %v3251, %v3571
        %v3588 = vmul.f32 %v3572, 0.7978846
        %v3589 = vmul.f32 %v3573, 0.7978846
        %v3590 = vmul.f32 %v3574, 0.7978846
        %v3591 = vmul.f32 %v3575, 0.7978846
        %v3592 = vmul.f32 %v3576, 0.7978846
        %v3593 = vmul.f32 %v3577, 0.7978846
        %v3594 = vmul.f32 %v3578, 0.7978846
        %v3595 = vmul.f32 %v3579, 0.7978846
        %v3596 = vmul.f32 %v3580, 0.7978846
        %v3597 = vmul.f32 %v3581, 0.7978846
        %v3598 = vmul.f32 %v3582, 0.7978846
        %v3599 = vmul.f32 %v3583, 0.7978846
        %v3600 = vmul.f32 %v3584, 0.7978846
        %v3601 = vmul.f32 %v3585, 0.7978846
        %v3602 = vmul.f32 %v3586, 0.7978846
        %v3603 = vmul.f32 %v3587, 0.7978846
        %v3604 = vtanh.pop %v3588
        %v3605 = vtanh.pop %v3589
        %v3606 = vtanh.pop %v3590
        %v3607 = vtanh.pop %v3591
        %v3608 = vtanh.pop %v3592
        %v3609 = vtanh.pop %v3593
        %v3610 = vtanh.pop %v3594
        %v3611 = vtanh.pop %v3595
        %v3612 = vtanh.pop %v3596
        %v3613 = vtanh.pop %v3597
        %v3614 = vtanh.pop %v3598
        %v3615 = vtanh.pop %v3599
        %v3616 = vtanh.pop %v3600
        %v3617 = vtanh.pop %v3601
        %v3618 = vtanh.pop %v3602
        %v3619 = vtanh.pop %v3603
        %v3620 = vadd.f32 %v3604, 1.0
        %v3621 = vadd.f32 %v3605, 1.0
        %v3622 = vadd.f32 %v3606, 1.0
        %v3623 = vadd.f32 %v3607, 1.0
        %v3624 = vadd.f32 %v3608, 1.0
        %v3625 = vadd.f32 %v3609, 1.0
        %v3626 = vadd.f32 %v3610, 1.0
        %v3627 = vadd.f32 %v3611, 1.0
        %v3628 = vadd.f32 %v3612, 1.0
        %v3629 = vadd.f32 %v3613, 1.0
        %v3630 = vadd.f32 %v3614, 1.0
        %v3631 = vadd.f32 %v3615, 1.0
        %v3632 = vadd.f32 %v3616, 1.0
        %v3633 = vadd.f32 %v3617, 1.0
        %v3634 = vadd.f32 %v3618, 1.0
        %v3635 = vadd.f32 %v3619, 1.0
        %v3636 = vmul.f32 %v3508, %v3620
        %v3637 = vmul.f32 %v3509, %v3621
        %v3638 = vmul.f32 %v3510, %v3622
        %v3639 = vmul.f32 %v3511, %v3623
        %v3640 = vmul.f32 %v3512, %v3624
        %v3641 = vmul.f32 %v3513, %v3625
        %v3642 = vmul.f32 %v3514, %v3626
        %v3643 = vmul.f32 %v3515, %v3627
        %v3644 = vmul.f32 %v3516, %v3628
        %v3645 = vmul.f32 %v3517, %v3629
        %v3646 = vmul.f32 %v3518, %v3630
        %v3647 = vmul.f32 %v3519, %v3631
        %v3648 = vmul.f32 %v3520, %v3632
        %v3649 = vmul.f32 %v3521, %v3633
        %v3650 = vmul.f32 %v3522, %v3634
        %v3651 = vmul.f32 %v3523, %v3635
        %3668 = vrot.lane.b32.xlu0 %v3284, 124
        %v3669 = vpop.permute.xlu0 %3668
        %3670 = vrot.lane.b32.xlu0 %v3285, 124
        %v3671 = vpop.permute.xlu0 %3670
        %3672 = vrot.lane.b32.xlu0 %v3286, 124
        %v3673 = vpop.permute.xlu0 %3672
        %3674 = vrot.lane.b32.xlu0 %v3287, 124
        %v3675 = vpop.permute.xlu0 %3674
        %3676 = vrot.lane.b32.xlu0 %v3288, 124
        %v3677 = vpop.permute.xlu0 %3676
        %3678 = vrot.lane.b32.xlu0 %v3289, 124
        %v3679 = vpop.permute.xlu0 %3678
        %3680 = vrot.lane.b32.xlu0 %v3290, 124
        %v3681 = vpop.permute.xlu0 %3680
        %3682 = vrot.lane.b32.xlu0 %v3291, 124
        %v3683 = vpop.permute.xlu0 %3682
        %3684 = vrot.lane.b32.xlu0 %v3292, 124
        %v3685 = vpop.permute.xlu0 %3684
        %3686 = vrot.lane.b32.xlu0 %v3293, 124
        %v3687 = vpop.permute.xlu0 %3686
        %3688 = vrot.lane.b32.xlu0 %v3294, 124
        %v3689 = vpop.permute.xlu0 %3688
        %3690 = vrot.lane.b32.xlu0 %v3295, 124
        %v3691 = vpop.permute.xlu0 %3690
        %3692 = vrot.lane.b32.xlu0 %v3296, 124
        %v3693 = vpop.permute.xlu0 %3692
        %3694 = vrot.lane.b32.xlu0 %v3297, 124
        %v3695 = vpop.permute.xlu0 %3694
        %3696 = vrot.lane.b32.xlu0 %v3298, 124
        %v3697 = vpop.permute.xlu0 %3696
        %3698 = vrot.lane.b32.xlu0 %v3299, 124
        %v3699 = vpop.permute.xlu0 %3698
        %v3716 = vadd.f32 %v3636, %v3669
        %v3717 = vadd.f32 %v3637, %v3671
        %v3718 = vadd.f32 %v3638, %v3673
        %v3719 = vadd.f32 %v3639, %v3675
        %v3720 = vadd.f32 %v3640, %v3677
        %v3721 = vadd.f32 %v3641, %v3679
        %v3722 = vadd.f32 %v3642, %v3681
        %v3723 = vadd.f32 %v3643, %v3683
        %v3724 = vadd.f32 %v3644, %v3685
        %v3725 = vadd.f32 %v3645, %v3687
        %v3726 = vadd.f32 %v3646, %v3689
        %v3727 = vadd.f32 %v3647, %v3691
        %v3728 = vadd.f32 %v3648, %v3693
        %v3729 = vadd.f32 %v3649, %v3695
        %v3730 = vadd.f32 %v3650, %v3697
        %v3731 = vadd.f32 %v3651, %v3699
        %3748 = vrot.lane.b32.xlu0 %v3716, 2
        %v3749 = vpop.permute.xlu0 %3748
        %3750 = vrot.lane.b32.xlu0 %v3717, 2
        %v3751 = vpop.permute.xlu0 %3750
        %3752 = vrot.lane.b32.xlu0 %v3718, 2
        %v3753 = vpop.permute.xlu0 %3752
        %3754 = vrot.lane.b32.xlu0 %v3719, 2
        %v3755 = vpop.permute.xlu0 %3754
        %3756 = vrot.lane.b32.xlu0 %v3720, 2
        %v3757 = vpop.permute.xlu0 %3756
        %3758 = vrot.lane.b32.xlu0 %v3721, 2
        %v3759 = vpop.permute.xlu0 %3758
        %3760 = vrot.lane.b32.xlu0 %v3722, 2
        %v3761 = vpop.permute.xlu0 %3760
        %3762 = vrot.lane.b32.xlu0 %v3723, 2
        %v3763 = vpop.permute.xlu0 %3762
        %3764 = vrot.lane.b32.xlu0 %v3724, 2
        %v3765 = vpop.permute.xlu0 %3764
        %3766 = vrot.lane.b32.xlu0 %v3725, 2
        %v3767 = vpop.permute.xlu0 %3766
        %3768 = vrot.lane.b32.xlu0 %v3726, 2
        %v3769 = vpop.permute.xlu0 %3768
        %3770 = vrot.lane.b32.xlu0 %v3727, 2
        %v3771 = vpop.permute.xlu0 %3770
        %3772 = vrot.lane.b32.xlu0 %v3728, 2
        %v3773 = vpop.permute.xlu0 %3772
        %3774 = vrot.lane.b32.xlu0 %v3729, 2
        %v3775 = vpop.permute.xlu0 %3774
        %3776 = vrot.lane.b32.xlu0 %v3730, 2
        %v3777 = vpop.permute.xlu0 %3776
        %3778 = vrot.lane.b32.xlu0 %v3731, 2
        %v3779 = vpop.permute.xlu0 %3778
        %3812 = vrot.lane.b32.xlu0 %v3492, 2
        %v3813 = vpop.permute.xlu0 %3812
        %3814 = vrot.lane.b32.xlu0 %v3493, 2
        %v3815 = vpop.permute.xlu0 %3814
        %3816 = vrot.lane.b32.xlu0 %v3494, 2
        %v3817 = vpop.permute.xlu0 %3816
        %3818 = vrot.lane.b32.xlu0 %v3495, 2
        %v3819 = vpop.permute.xlu0 %3818
        %3820 = vrot.lane.b32.xlu0 %v3496, 2
        %v3821 = vpop.permute.xlu0 %3820
        %3822 = vrot.lane.b32.xlu0 %v3497, 2
        %v3823 = vpop.permute.xlu0 %3822
        %3824 = vrot.lane.b32.xlu0 %v3498, 2
        %v3825 = vpop.permute.xlu0 %3824
        %3826 = vrot.lane.b32.xlu0 %v3499, 2
        %v3827 = vpop.permute.xlu0 %3826
        %3828 = vrot.lane.b32.xlu0 %v3500, 2
        %v3829 = vpop.permute.xlu0 %3828
        %3830 = vrot.lane.b32.xlu0 %v3501, 2
        %v3831 = vpop.permute.xlu0 %3830
        %3832 = vrot.lane.b32.xlu0 %v3502, 2
        %v3833 = vpop.permute.xlu0 %3832
        %3834 = vrot.lane.b32.xlu0 %v3503, 2
        %v3835 = vpop.permute.xlu0 %3834
        %3836 = vrot.lane.b32.xlu0 %v3504, 2
        %v3837 = vpop.permute.xlu0 %3836
        %3838 = vrot.lane.b32.xlu0 %v3505, 2
        %v3839 = vpop.permute.xlu0 %3838
        %3840 = vrot.lane.b32.xlu0 %v3506, 2
        %v3841 = vpop.permute.xlu0 %3840
        %3842 = vrot.lane.b32.xlu0 %v3507, 2
        %v3843 = vpop.permute.xlu0 %3842
        %3860 = vrot.lane.b32.xlu0 %v3716, 4
        %v3861 = vpop.permute.xlu0 %3860
        %3862 = vrot.lane.b32.xlu0 %v3717, 4
        %v3863 = vpop.permute.xlu0 %3862
        %3864 = vrot.lane.b32.xlu0 %v3718, 4
        %v3865 = vpop.permute.xlu0 %3864
        %3866 = vrot.lane.b32.xlu0 %v3719, 4
        %v3867 = vpop.permute.xlu0 %3866
        %3868 = vrot.lane.b32.xlu0 %v3720, 4
        %v3869 = vpop.permute.xlu0 %3868
        %3870 = vrot.lane.b32.xlu0 %v3721, 4
        %v3871 = vpop.permute.xlu0 %3870
        %3872 = vrot.lane.b32.xlu0 %v3722, 4
        %v3873 = vpop.permute.xlu0 %3872
        %3874 = vrot.lane.b32.xlu0 %v3723, 4
        %v3875 = vpop.permute.xlu0 %3874
        %3876 = vrot.lane.b32.xlu0 %v3724, 4
        %v3877 = vpop.permute.xlu0 %3876
        %3878 = vrot.lane.b32.xlu0 %v3725, 4
        %v3879 = vpop.permute.xlu0 %3878
        %3880 = vrot.lane.b32.xlu0 %v3726, 4
        %v3881 = vpop.permute.xlu0 %3880
        %3882 = vrot.lane.b32.xlu0 %v3727, 4
        %v3883 = vpop.permute.xlu0 %3882
        %3884 = vrot.lane.b32.xlu0 %v3728, 4
        %v3885 = vpop.permute.xlu0 %3884
        %3886 = vrot.lane.b32.xlu0 %v3729, 4
        %v3887 = vpop.permute.xlu0 %3886
        %3888 = vrot.lane.b32.xlu0 %v3730, 4
        %v3889 = vpop.permute.xlu0 %3888
        %3890 = vrot.lane.b32.xlu0 %v3731, 4
        %v3891 = vpop.permute.xlu0 %3890
        %v3908 = vsel %vm1404, %v3492, %v3749
        %v3909 = vsel %vm1404, %v3493, %v3751
        %v3910 = vsel %vm1404, %v3494, %v3753
        %v3911 = vsel %vm1404, %v3495, %v3755
        %v3912 = vsel %vm1404, %v3496, %v3757
        %v3913 = vsel %vm1404, %v3497, %v3759
        %v3914 = vsel %vm1404, %v3498, %v3761
        %v3915 = vsel %vm1404, %v3499, %v3763
        %v3916 = vsel %vm1404, %v3500, %v3765
        %v3917 = vsel %vm1404, %v3501, %v3767
        %v3918 = vsel %vm1404, %v3502, %v3769
        %v3919 = vsel %vm1404, %v3503, %v3771
        %v3920 = vsel %vm1404, %v3504, %v3773
        %v3921 = vsel %vm1404, %v3505, %v3775
        %v3922 = vsel %vm1404, %v3506, %v3777
        %v3923 = vsel %vm1404, %v3507, %v3779
        %v3924 = vsel %vm2100, %v3908, %v3813
        %v3925 = vsel %vm2100, %v3909, %v3815
        %v3926 = vsel %vm2100, %v3910, %v3817
        %v3927 = vsel %vm2100, %v3911, %v3819
        %v3928 = vsel %vm2100, %v3912, %v3821
        %v3929 = vsel %vm2100, %v3913, %v3823
        %v3930 = vsel %vm2100, %v3914, %v3825
        %v3931 = vsel %vm2100, %v3915, %v3827
        %v3932 = vsel %vm2100, %v3916, %v3829
        %v3933 = vsel %vm2100, %v3917, %v3831
        %v3934 = vsel %vm2100, %v3918, %v3833
        %v3935 = vsel %vm2100, %v3919, %v3835
        %v3936 = vsel %vm2100, %v3920, %v3837
        %v3937 = vsel %vm2100, %v3921, %v3839
        %v3938 = vsel %vm2100, %v3922, %v3841
        %v3939 = vsel %vm2100, %v3923, %v3843
        %vm3940 = vcmask 48128
        %v3941 = vsel %vm3940, %v3924, %v3861
        %v3942 = vsel %vm3940, %v3925, %v3863
        %v3943 = vsel %vm3940, %v3926, %v3865
        %v3944 = vsel %vm3940, %v3927, %v3867
        %v3945 = vsel %vm3940, %v3928, %v3869
        %v3946 = vsel %vm3940, %v3929, %v3871
        %v3947 = vsel %vm3940, %v3930, %v3873
        %v3948 = vsel %vm3940, %v3931, %v3875
        %v3949 = vsel %vm3940, %v3932, %v3877
        %v3950 = vsel %vm3940, %v3933, %v3879
        %v3951 = vsel %vm3940, %v3934, %v3881
        %v3952 = vsel %vm3940, %v3935, %v3883
        %v3953 = vsel %vm3940, %v3936, %v3885
        %v3954 = vsel %vm3940, %v3937, %v3887
        %v3955 = vsel %vm3940, %v3938, %v3889
        %v3956 = vsel %vm3940, %v3939, %v3891
        %3957 = vst.msk [vmem:[%s665] sm:$0xff] %vm715, %v3941
        %3958 = vst.msk [vmem:[%s665 + $0x8] sm:$0xff] %vm715, %v3942
        %3959 = vst.msk [vmem:[%s665 + $0x10] sm:$0xff] %vm715, %v3943
        %3960 = vst.msk [vmem:[%s665 + $0x18] sm:$0xff] %vm715, %v3944
        %3961 = vst.msk [vmem:[%s665 + $0x20] sm:$0xff] %vm715, %v3945
        %3962 = vst.msk [vmem:[%s665 + $0x28] sm:$0xff] %vm715, %v3946
        %3963 = vst.msk [vmem:[%s665 + $0x30] sm:$0xff] %vm715, %v3947
        %3964 = vst.msk [vmem:[%s665 + $0x38] sm:$0xff] %vm715, %v3948
        %3965 = vst.msk [vmem:[%s665 + $0x40] sm:$0xff] %vm715, %v3949
        %3966 = vst.msk [vmem:[%s665 + $0x48] sm:$0xff] %vm715, %v3950
        %3967 = vst.msk [vmem:[%s665 + $0x50] sm:$0xff] %vm715, %v3951
        %3968 = vst.msk [vmem:[%s665 + $0x58] sm:$0xff] %vm715, %v3952
        %3969 = vst.msk [vmem:[%s665 + $0x60] sm:$0xff] %vm715, %v3953
        %3970 = vst.msk [vmem:[%s665 + $0x68] sm:$0xff] %vm715, %v3954
        %3971 = vst.msk [vmem:[%s665 + $0x70] sm:$0xff] %vm715, %v3955
        %3972 = vst.msk [vmem:[%s665 + $0x78] sm:$0xff] %vm715, %v3956
        %s3973 = sand.u32 %s321, 1
        %s3974 = scalar_lea.sflag [#allocation4], %s3973
        %s3975 = sand.u32 %s321, 1
        %s3976 = smul.addr %s3975, 128
        %s3977 = scalar_lea.vmem [#allocation17], %s3976
        // Predicated region
        $region93: #{finet_ghost_up_block.1} parent=55 // pred_check
          %p3978 = pneg %p331
        $region94: #{finet_ghost_up_block.1} parent=55 // pred_check_branch
          %3980 = sbr.rel (%p3978) target = $region96
        $region95: #{finet_ghost_up_block.1} parent=55 // pred_region
          %s3981 = smul.u32 16, %s41
          %s3983 = ssub.s32 2048, 2048
          %3984 = vsyncadd %s3974, %s3983
          %s3985 = smul.addr %s40, 16
          %s3986 = sadd.s32 %s3981, %s3985
          %s3987 = smul.addr %s3986, 128
          %s3988 = scalar_lea.hbm %s9, %s3987
          %s3989 = sshll.u32 %s3977, 4
          %s3990 = int_to_ptr.vmem [resolvable:$true] %s3989
          %3995 = dma.vmem_to_hbm [thread:$0]  %s3990, 2048, %s3988, %s3974, 128, 128, 8
        $region96: #{finet_ghost_up_block.1} parent=55 // pred_fallthru
          _
      $region56: #{finet_ghost_up_block.1} parent=5 // pred_fallthru
        _
      %p3996 = scmp.le.s32.totalorder 2, %s31
      // Predicated region
      $region97: #{finet_ghost_up_block.1} parent=5 // pred_check
        %p3997 = pneg %p3996
      $region98: #{finet_ghost_up_block.1} parent=5 // pred_check_branch
        %3999 = sbr.rel (%p3997) target = $region100
      $region99: #{finet_ghost_up_block.1} parent=5 // pred_region
        %s4000 = ssub.s32 %s31, 2
        // Predicated region
        $region101: #{finet_ghost_up_block.1} parent=99 // pred_check
          %p4001 = pneg %p337
        $region102: #{finet_ghost_up_block.1} parent=99 // pred_check_branch
          %4003 = sbr.rel (%p4001) target = $region104
        $region103: #{finet_ghost_up_block.1} parent=99 // pred_region
          %s4004 = sand.u32 %s322, 1
          %s4005 = scalar_lea.sflag [#allocation4], %s4004
          %s4006 = sand.u32 %s322, 1
          %s4007 = smul.addr %s4006, 128
          %s4008 = scalar_lea.vmem [#allocation17], %s4007
          %4009 = dma.done %s4005, 2048
        $region104: #{finet_ghost_up_block.1} parent=99 // pred_fallthru
          _
      $region100: #{finet_ghost_up_block.1} parent=5 // pred_fallthru
        _
    $region6: #{finet_ghost_up_block.1} parent=1 // loop_footer
      %s35 = sadd.s32 1, %s31
    $region7: #{finet_ghost_up_block.1} parent=1 // loop_footer_branch
      %30 = sbr.rel target = $region3
    $region8: #{finet_ghost_up_block.1} parent=1 // loop_exit
      _
    %4010 = vsyncpa [#allocation3], 1
    %s4011 = scalar_lea.sflag [#allocation3], 1
    %4012 = vsyncpa %s4011, 1
    %4013 = vsyncpa [#allocation6], 1
    %s4014 = scalar_lea.sflag [#allocation6], 1
    %4015 = vsyncpa %s4014, 1
    %4016 = vsyncpa [#allocation9], 1
    %s4017 = scalar_lea.sflag [#allocation9], 1
    %4018 = vsyncpa %s4017, 1
    %4019 = vsyncpa [#allocation12], 1
    %s4020 = scalar_lea.sflag [#allocation12], 1
    %4021 = vsyncpa %s4020, 1
    %4022 = vsyncpa [#allocation15], 1
    %4023 = vsyncpa [#allocation4], 1
    %s4024 = scalar_lea.sflag [#allocation4], 1
    %4025 = vsyncpa %s4024, 1

</llo_original>
